<compile_context>
chip_gen: v5e
topology: v5e:2x2
jax: 0.10.0
libtpu: 0.0.40
codegen_flags: <defaults>
</compile_context>

<pallas_src>
import numpy as np
import jax
import jax.numpy as jnp
from jax.experimental import pallas as pl
from jax.experimental.pallas import tpu as pltpu

N_HEAD = 8  # fixed by the reference module (n_head=8 for every Attention)


# --------------------------------- kernel ------------------------------------

def _fused_forward_kernel(
        ctx_ref, tgt_ref, knw_ref, lens_ref,
        headmask_ref, tilemat_ref, diagmask_ref, summat_ref, expmat_ref,
        wk_ref, bk_ref, selk_ref, wqs_ref, bqs_ref, wproj_ref, bproj_ref,
        w1_ref, b1_ref, w2_ref, b2_ref,
        dw_ref, db_ref,
        out_ref):
    """Entire GKEAEN_BERT forward for one batch element (grid=(B,))."""
    f32 = jnp.float32

    ctx = ctx_ref[0]                     # (Lc, E)
    tgt = tgt_ref[0]                     # (Lt, E)
    knw = knw_ref[0]                     # (Lkn, E)
    lens = lens_ref[0]                   # (1, 2) = [context_len, target_len]
    ctx_len = lens[:, 0:1]               # (1, 1)
    tgt_len = lens[:, 1:2]               # (1, 1)

    headmask = headmask_ref[...]         # (HL, H)   HL = n_head * Lc
    tilemat = tilemat_ref[...]           # (HL, Lc)
    diagmask = diagmask_ref[...]         # (Lc, HL)
    summat = summat_ref[...]             # (HL, n_head)
    expmat = expmat_ref[...]             # (n_head, HL)

    def attention(a, k_in, q_in):
        """ABSA Attention(score_function='mlp'), heads vectorised on lanes."""
        # kx: (Lc, H) -- needed for both the k-score and the context.
        kx = jnp.dot(k_in, wk_ref[a], preferred_element_type=f32) + bk_ref[a]
        # Per-head key scores, produced directly in head-major lane layout
        # (no transpose): ks_row[0, h*Lc+j] = kx[j, h*hd:(h+1)*hd] . w_score[:hd]
        ks_full = jnp.dot(kx, selk_ref[a], preferred_element_type=f32)      # (Lc, HL)
        ks_row = jnp.sum(ks_full * diagmask, axis=0, keepdims=True)         # (1, HL)
        # Per-head query scores already broadcast to (Lq, HL):
        # w_q and w_score[hd:] are folded into wqs/bqs on the host.
        qs = jnp.dot(q_in, wqs_ref[a], preferred_element_type=f32) + bqs_ref[a]
        # tanh bounds scores to [-1, 1], so exp cannot overflow -> no max-sub.
        e = jnp.exp(jnp.tanh(qs + ks_row))                                  # (Lq, HL)
        # Per-head softmax denominators via one block-diagonal ones matmul.
        denom = jnp.dot(e, summat, preferred_element_type=f32)              # (Lq, n_head)
        inv = pl.reciprocal(denom, approx=True)
        p = e * jnp.dot(inv, expmat, preferred_element_type=f32)            # (Lq, HL)
        # Block-stacked head-masked keys: one matmul + one mask multiply.
        kx_stack = jnp.dot(tilemat, kx, preferred_element_type=f32) * headmask  # (HL, H)
        ctx_vec = jnp.dot(p, kx_stack, preferred_element_type=f32)          # (Lq, H)
        return jnp.dot(ctx_vec, wproj_ref[a], preferred_element_type=f32) + bproj_ref[a]

    def ffn(f, x):
        h = jnp.maximum(
            jnp.dot(x, w1_ref[f], preferred_element_type=f32) + b1_ref[f], 0.0)
        return jnp.dot(h, w2_ref[f], preferred_element_type=f32) + b2_ref[f]

    hc = ffn(0, attention(0, ctx, ctx))      # (Lc, D)
    ht = ffn(1, attention(1, ctx, tgt))      # (Lt, D)
    hk = ffn(2, attention(2, ctx, knw))      # (Lkn, D)  (its pooled mean is unused)
    s1 = attention(3, hc, ht)                # (Lt, D)
    s2 = attention(4, hc, hk)                # (Lkn, D)

    # Length-normalised pooling (exact division, as in torch.div).
    hc_mean = jnp.sum(hc, axis=0, keepdims=True) / ctx_len
    ht_mean = jnp.sum(ht, axis=0, keepdims=True) / tgt_len
    s1_mean = jnp.sum(s1, axis=0, keepdims=True) / ctx_len
    s2_mean = jnp.sum(s2, axis=0, keepdims=True) / ctx_len

    # Dense head, fused: cat([hc,s1,ht,s2]) @ W + b == sum of 4 split matmuls.
    logits = (jnp.dot(hc_mean, dw_ref[0], preferred_element_type=f32)
              + jnp.dot(s1_mean, dw_ref[1], preferred_element_type=f32)
              + jnp.dot(ht_mean, dw_ref[2], preferred_element_type=f32)
              + jnp.dot(s2_mean, dw_ref[3], preferred_element_type=f32)
              + db_ref[...])
    out_ref[0] = logits


# ------------------------------- full forward --------------------------------

@jax.jit
def gkeaen_forward(params, context_ids, target_ids, knowledge_ids,
                   context_len, target_len, knowledge_len):
    del knowledge_len  # computed in the reference but never used downstream
    # TODO(synk): full BERT encoder not reproduced; deterministic embedding
    # lookup is used as the `bert` stand-in.  Dropout is identity (eval mode).
    emb = params["bert_emb"]
    context = emb[context_ids]       # (B, Lc, E)
    target = emb[target_ids]         # (B, Lt, E)
    knowledge = emb[knowledge_ids]   # (B, Lkn, E)

    B, Lc, E = context.shape
    Lt = target.shape[1]
    Lkn = knowledge.shape[1]
    n_head = N_HEAD

    attn_list = [params["attn_k"], params["attn_q"], params["attn_q2"],
                 params["attn_s1"], params["attn_s2"]]
    ffn_list = [params["ffn_c"], params["ffn_t"], params["ffn_k"]]

    H = attn_list[0]["w_k"].shape[1]
    O = attn_list[0]["w_proj"].shape[1]
    D = ffn_list[0]["w1"].shape[0]
    P = params["dense_w"].shape[1]
    hd = H // n_head
    HL = n_head * Lc   # every attention uses the context (or hc) as keys

    f32 = jnp.float32
    eye_h = jnp.eye(n_head, dtype=f32)
    ones_lc = jnp.ones((1, Lc), f32)

    # ---- host-side (tiny, one-shot) weight folding -------------------------
    def fold(ap):
        ws = ap["w_score"].astype(f32)
        selk = jnp.kron(eye_h, ws[:hd].reshape(hd, 1) * ones_lc)   # (H, HL)
        selq = jnp.kron(eye_h, ws[hd:].reshape(hd, 1) * ones_lc)   # (H, HL)
        return selk, ap["w_q"] @ selq, ap["b_q"] @ selq

    folded = [fold(ap) for ap in attn_list]
    # TODO(synk): stacking assumes bert_dim == hidden_dim (true at toy dims);
    # split the stacks per attention group for real BERT dims.
    wk_all = jnp.stack([ap["w_k"] for ap in attn_list])        # (5, E, H)
    bk_all = jnp.stack([ap["b_k"] for ap in attn_list])        # (5, 1, H)
    selk_all = jnp.stack([f[0] for f in folded])               # (5, H, HL)
    wqs_all = jnp.stack([f[1] for f in folded])                # (5, E, HL)
    bqs_all = jnp.stack([f[2] for f in folded])                # (5, 1, HL)
    wproj_all = jnp.stack([ap["w_proj"] for ap in attn_list])  # (5, H, O)
    bproj_all = jnp.stack([ap["b_proj"] for ap in attn_list])  # (5, 1, O)

    w1_all = jnp.stack([fp["w1"] for fp in ffn_list])          # (3, O, D)
    b1_all = jnp.stack([fp["b1"] for fp in ffn_list])          # (3, 1, D)
    w2_all = jnp.stack([fp["w2"] for fp in ffn_list])          # (3, D, D)
    b2_all = jnp.stack([fp["b2"] for fp in ffn_list])          # (3, 1, D)

    dw_all = params["dense_w"].reshape(4, D, P)                # split (4D,P)
    db = params["dense_b"]                                     # (1, P)

    # Constant block matrices shared by every attention (depend on Lc only).
    headmask = jnp.kron(eye_h, jnp.ones((Lc, hd), f32))                     # (HL, H)
    tilemat = jnp.kron(jnp.ones((n_head, 1), f32), jnp.eye(Lc, dtype=f32))  # (HL, Lc)
    diagmask = jnp.kron(jnp.ones((1, n_head), f32), jnp.eye(Lc, dtype=f32)) # (Lc, HL)
    summat = jnp.kron(eye_h, jnp.ones((Lc, 1), f32))                        # (HL, n_head)
    expmat = jnp.kron(eye_h, jnp.ones((1, Lc), f32))                        # (n_head, HL)

    lens = jnp.stack([context_len.astype(f32), target_len.astype(f32)],
                     axis=-1).reshape(B, 1, 2)

    def rep(shape):
        nd = len(shape)
        return pl.BlockSpec(shape, lambda b: (0,) * nd)

    out = pl.pallas_call(
        _fused_forward_kernel,
        out_shape=jax.ShapeDtypeStruct((B, 1, P), f32),
        grid=(B,),
        in_specs=[
            pl.BlockSpec((1, Lc, E), lambda b: (b, 0, 0)),
            pl.BlockSpec((1, Lt, E), lambda b: (b, 0, 0)),
            pl.BlockSpec((1, Lkn, E), lambda b: (b, 0, 0)),
            pl.BlockSpec((1, 1, 2), lambda b: (b, 0, 0)),
            rep((HL, H)), rep((HL, Lc)), rep((Lc, HL)),
            rep((HL, n_head)), rep((n_head, HL)),
            rep((5, E, H)), rep((5, 1, H)), rep((5, H, HL)),
            rep((5, E, HL)), rep((5, 1, HL)), rep((5, H, O)), rep((5, 1, O)),
            rep((3, O, D)), rep((3, 1, D)), rep((3, D, D)), rep((3, 1, D)),
            rep((4, D, P)), rep((1, P)),
        ],
        out_specs=pl.BlockSpec((1, 1, P), lambda b: (b, 0, 0)),
        compiler_params=pltpu.CompilerParams(
            dimension_semantics=("parallel",)),
    )(context, target, knowledge, lens,
      headmask, tilemat, diagmask, summat, expmat,
      wk_all, bk_all, selk_all, wqs_all, bqs_all, wproj_all, bproj_all,
      w1_all, b1_all, w2_all, b2_all,
      dw_all, db)
    return out.reshape(B, P)


# --------------------------- pure-JAX reference -------------------------------

def _ref_attention(ap, k_in, q_in, n_head):
    E, H = ap["w_k"].shape
    hd = H // n_head
    B, Lk, _ = k_in.shape
    Lq = q_in.shape[1]
    kx = jnp.einsum("ble,eh->blh", k_in, ap["w_k"]) + ap["b_k"]
    qx = jnp.einsum("ble,eh->blh", q_in, ap["w_q"]) + ap["b_q"]
    kxh = kx.reshape(B, Lk, n_head, hd)
    qxh = qx.reshape(B, Lq, n_head, hd)
    ks = jnp.einsum("bkhd,d->bhk", kxh, ap["w_score"][:hd])
    qs = jnp.einsum("bqhd,d->bhq", qxh, ap["w_score"][hd:])
    score = jnp.tanh(qs[:, :, :, None] + ks[:, :, None, :])     # (B, h, Lq, Lk)
    p = jax.nn.softmax(score, axis=-1)
    ctxh = jnp.einsum("bhqk,bkhd->bqhd", p, kxh).reshape(B, Lq, H)
    return jnp.einsum("bqh,ho->bqo", ctxh, ap["w_proj"]) + ap["b_proj"]


def _ref_ffn(fp, x):
    h = jnp.maximum(jnp.einsum("bld,de->ble", x, fp["w1"]) + fp["b1"], 0.0)
    return jnp.einsum("ble,ed->bld", h, fp["w2"]) + fp["b2"]


def gkeaen_reference(params, ctx_ids, tgt_ids, knw_ids, ctx_len, tgt_len):
    emb = params["bert_emb"]
    context, target, knowledge = emb[ctx_ids], emb[tgt_ids], emb[knw_ids]
    hc = _ref_ffn(params["ffn_c"], _ref_attention(params["attn_k"], context, context, N_HEAD))
    ht = _ref_ffn(params["ffn_t"], _ref_attention(params["attn_q"], context, target, N_HEAD))
    hk = _ref_ffn(params["ffn_k"], _ref_attention(params["attn_q2"], context, knowledge, N_HEAD))
    s1 = _ref_attention(params["attn_s1"], hc, ht, N_HEAD)
    s2 = _ref_attention(params["attn_s2"], hc, hk, N_HEAD)
    cl = ctx_len[:, None]
    tl = tgt_len[:, None]
    x = jnp.concatenate([hc.sum(1) / cl, s1.sum(1) / cl,
                         ht.sum(1) / tl, s2.sum(1) / cl], axis=-1)
    return jnp.dot(x, params["dense_w"]) + params["dense_b"]


# ------------------------------ parameter init --------------------------------

def init_attention_params(key, embed_dim, n_head, out_dim):
    hd = embed_dim // n_head
    ks = jax.random.split(key, 7)
    s = 0.2
    return dict(
        w_k=s * jax.random.normal(ks[0], (embed_dim, n_head * hd), jnp.float32),
        b_k=0.1 * jax.random.normal(ks[1], (1, n_head * hd), jnp.float32),
        w_q=s * jax.random.normal(ks[2], (embed_dim, n_head * hd), jnp.float32),
        b_q=0.1 * jax.random.normal(ks[3], (1, n_head * hd), jnp.float32),
        w_proj=s * jax.random.normal(ks[4], (n_head * hd, out_dim), jnp.float32),
        b_proj=0.1 * jax.random.normal(ks[5], (1, out_dim), jnp.float32),
        w_score=s * jax.random.normal(ks[6], (2 * hd,), jnp.float32),
    )


def init_ffn_params(key, d_hid):
    ks = jax.random.split(key, 4)
    s = 0.2
    return dict(
        w1=s * jax.random.normal(ks[0], (d_hid, d_hid), jnp.float32),
        b1=0.1 * jax.random.normal(ks[1], (1, d_hid), jnp.float32),
        w2=s * jax.random.normal(ks[2], (d_hid, d_hid), jnp.float32),
        b2=0.1 * jax.random.normal(ks[3], (1, d_hid), jnp.float32),
    )


if __name__ == "__main__":
    B = 2
    bert_dim = 32
    hidden_dim = 32
    polarities_dim = 3
    n_head = N_HEAD
    vocab = 50

    root = jax.random.PRNGKey(0)
    keys = jax.random.split(root, 12)

    params = dict(
        bert_emb=0.5 * jax.random.normal(keys[0], (vocab, bert_dim), jnp.float32),
        attn_k=init_attention_params(keys[1], bert_dim, n_head, hidden_dim),
        attn_q=init_attention_params(keys[2], bert_dim, n_head, hidden_dim),
        attn_q2=init_attention_params(keys[3], bert_dim, n_head, hidden_dim),
        ffn_c=init_ffn_params(keys[4], hidden_dim),
        ffn_t=init_ffn_params(keys[5], hidden_dim),
        ffn_k=init_ffn_params(keys[6], hidden_dim),
        attn_s1=init_attention_params(keys[7], hidden_dim, n_head, hidden_dim),
        attn_s2=init_attention_params(keys[8], hidden_dim, n_head, hidden_dim),
        dense_w=0.2 * jax.random.normal(keys[9], (hidden_dim * 4, polarities_dim), jnp.float32),
        dense_b=0.1 * jax.random.normal(keys[10], (1, polarities_dim), jnp.float32),
    )

    # Padded token-id inputs (0 = padding).
    ctx_np = np.zeros((B, 10), dtype=np.int32)
    ctx_np[0, :8] = np.arange(1, 9)
    ctx_np[1, :6] = np.arange(5, 11)
    tgt_np = np.zeros((B, 6), dtype=np.int32)
    tgt_np[0, :4] = np.arange(11, 15)
    tgt_np[1, :3] = np.arange(3, 6)
    knw_np = np.zeros((B, 8), dtype=np.int32)
    knw_np[0, :6] = np.arange(20, 26)
    knw_np[1, :5] = np.arange(30, 35)

    ctx_len = (ctx_np != 0).sum(-1)
    tgt_len = (tgt_np != 0).sum(-1)
    knw_len = (knw_np != 0).sum(-1)

    # SqueezeEmbedding: truncate each batch to its max length (host-side, static).
    ctx = jnp.asarray(ctx_np[:, : int(ctx_len.max())])
    tgt = jnp.asarray(tgt_np[:, : int(tgt_len.max())])
    knw = jnp.asarray(knw_np[:, : int(knw_len.max())])

    ctx_len_f = jnp.asarray(ctx_len, jnp.float32)
    tgt_len_f = jnp.asarray(tgt_len, jnp.float32)
    knw_len_f = jnp.asarray(knw_len, jnp.float32)

    out = gkeaen_forward(params, ctx, tgt, knw, ctx_len_f, tgt_len_f, knw_len_f)
    out = jax.block_until_ready(out)
    assert out.shape == (B, polarities_dim)
    assert bool(jnp.all(jnp.isfinite(out)))

    # Correctness check vs. a pure-JAX reference (f32 matmul precision).
    with jax.default_matmul_precision("float32"):
        ref = gkeaen_reference(params, ctx, tgt, knw, ctx_len_f, tgt_len_f)
    np.testing.assert_allclose(np.asarray(out), np.asarray(ref), rtol=5e-2, atol=5e-2)

    print("KERNEL_OK")
</pallas_src>

<mosaic_0001>
module attributes {stable_mosaic.version = 11 : i64} {
  func.func @_fused_forward_kernel(%arg0: i32, %arg1: memref<1x8x32xf32, #tpu.memory_space<vmem>>, %arg2: memref<1x4x32xf32, #tpu.memory_space<vmem>>, %arg3: memref<1x6x32xf32, #tpu.memory_space<vmem>>, %arg4: memref<1x1x2xf32, #tpu.memory_space<vmem>>, %arg5: memref<64x32xf32, #tpu.memory_space<vmem>>, %arg6: memref<64x8xf32, #tpu.memory_space<vmem>>, %arg7: memref<8x64xf32, #tpu.memory_space<vmem>>, %arg8: memref<64x8xf32, #tpu.memory_space<vmem>>, %arg9: memref<8x64xf32, #tpu.memory_space<vmem>>, %arg10: memref<5x32x32xf32, #tpu.memory_space<vmem>>, %arg11: memref<5x1x32xf32, #tpu.memory_space<vmem>>, %arg12: memref<5x32x64xf32, #tpu.memory_space<vmem>>, %arg13: memref<5x32x64xf32, #tpu.memory_space<vmem>>, %arg14: memref<5x1x64xf32, #tpu.memory_space<vmem>>, %arg15: memref<5x32x32xf32, #tpu.memory_space<vmem>>, %arg16: memref<5x1x32xf32, #tpu.memory_space<vmem>>, %arg17: memref<3x32x32xf32, #tpu.memory_space<vmem>>, %arg18: memref<3x1x32xf32, #tpu.memory_space<vmem>>, %arg19: memref<3x32x32xf32, #tpu.memory_space<vmem>>, %arg20: memref<3x1x32xf32, #tpu.memory_space<vmem>>, %arg21: memref<4x32x3xf32, #tpu.memory_space<vmem>>, %arg22: memref<1x3xf32, #tpu.memory_space<vmem>>, %arg23: memref<1x1x3xf32, #tpu.memory_space<vmem>>) attributes {dimension_semantics = [#tpu.dimension_semantics<parallel>], iteration_bounds = array<i64: 2>, scalar_prefetch = 0 : i64, scratch_operands = 0 : i64, tpu.core_type = #tpu.core_type<tc>, window_params = [{transform_indices = @transform_0, window_bounds = array<i64: 1, 8, 32>}, {transform_indices = @transform_1, window_bounds = array<i64: 1, 4, 32>}, {transform_indices = @transform_2, window_bounds = array<i64: 1, 6, 32>}, {transform_indices = @transform_3, window_bounds = array<i64: 1, 1, 2>}, {pipeline_mode = #tpu.pipeline_mode<synchronous>, transform_indices = @transform_4, window_bounds = array<i64: 64, 32>}, {pipeline_mode = #tpu.pipeline_mode<synchronous>, transform_indices = @transform_5, window_bounds = array<i64: 64, 8>}, {pipeline_mode = #tpu.pipeline_mode<synchronous>, transform_indices = @transform_6, window_bounds = array<i64: 8, 64>}, {pipeline_mode = #tpu.pipeline_mode<synchronous>, transform_indices = @transform_7, window_bounds = array<i64: 64, 8>}, {pipeline_mode = #tpu.pipeline_mode<synchronous>, transform_indices = @transform_8, window_bounds = array<i64: 8, 64>}, {pipeline_mode = #tpu.pipeline_mode<synchronous>, transform_indices = @transform_9, window_bounds = array<i64: 5, 32, 32>}, {pipeline_mode = #tpu.pipeline_mode<synchronous>, transform_indices = @transform_10, window_bounds = array<i64: 5, 1, 32>}, {pipeline_mode = #tpu.pipeline_mode<synchronous>, transform_indices = @transform_11, window_bounds = array<i64: 5, 32, 64>}, {pipeline_mode = #tpu.pipeline_mode<synchronous>, transform_indices = @transform_12, window_bounds = array<i64: 5, 32, 64>}, {pipeline_mode = #tpu.pipeline_mode<synchronous>, transform_indices = @transform_13, window_bounds = array<i64: 5, 1, 64>}, {pipeline_mode = #tpu.pipeline_mode<synchronous>, transform_indices = @transform_14, window_bounds = array<i64: 5, 32, 32>}, {pipeline_mode = #tpu.pipeline_mode<synchronous>, transform_indices = @transform_15, window_bounds = array<i64: 5, 1, 32>}, {pipeline_mode = #tpu.pipeline_mode<synchronous>, transform_indices = @transform_16, window_bounds = array<i64: 3, 32, 32>}, {pipeline_mode = #tpu.pipeline_mode<synchronous>, transform_indices = @transform_17, window_bounds = array<i64: 3, 1, 32>}, {pipeline_mode = #tpu.pipeline_mode<synchronous>, transform_indices = @transform_18, window_bounds = array<i64: 3, 32, 32>}, {pipeline_mode = #tpu.pipeline_mode<synchronous>, transform_indices = @transform_19, window_bounds = array<i64: 3, 1, 32>}, {pipeline_mode = #tpu.pipeline_mode<synchronous>, transform_indices = @transform_20, window_bounds = array<i64: 4, 32, 3>}, {pipeline_mode = #tpu.pipeline_mode<synchronous>, transform_indices = @transform_21, window_bounds = array<i64: 1, 3>}, {transform_indices = @transform_22, window_bounds = array<i64: 1, 1, 3>}]} {
    %c0 = arith.constant 0 : index
    %c0_0 = arith.constant 0 : index
    %c0_1 = arith.constant 0 : index
    %0 = vector.load %arg1[%c0, %c0_0, %c0_1] : memref<1x8x32xf32, #tpu.memory_space<vmem>>, vector<1x8x32xf32>
    %1 = vector.shape_cast %0 : vector<1x8x32xf32> to vector<8x32xf32>
    %c0_2 = arith.constant 0 : index
    %c0_3 = arith.constant 0 : index
    %c0_4 = arith.constant 0 : index
    %2 = vector.load %arg2[%c0_2, %c0_3, %c0_4] : memref<1x4x32xf32, #tpu.memory_space<vmem>>, vector<1x4x32xf32>
    %3 = vector.shape_cast %2 : vector<1x4x32xf32> to vector<4x32xf32>
    %c0_5 = arith.constant 0 : index
    %c0_6 = arith.constant 0 : index
    %c0_7 = arith.constant 0 : index
    %4 = vector.load %arg3[%c0_5, %c0_6, %c0_7] : memref<1x6x32xf32, #tpu.memory_space<vmem>>, vector<1x6x32xf32>
    %5 = vector.shape_cast %4 : vector<1x6x32xf32> to vector<6x32xf32>
    %c0_8 = arith.constant 0 : index
    %c0_9 = arith.constant 0 : index
    %c0_10 = arith.constant 0 : index
    %6 = vector.load %arg4[%c0_8, %c0_9, %c0_10] : memref<1x1x2xf32, #tpu.memory_space<vmem>>, vector<1x1x2xf32>
    %7 = vector.shape_cast %6 : vector<1x1x2xf32> to vector<1x2xf32>
    %8 = vector.extract_strided_slice %7 {offsets = [0, 0], sizes = [1, 1], strides = [1, 1]} : vector<1x2xf32> to vector<1x1xf32>
    %9 = vector.extract_strided_slice %7 {offsets = [0, 1], sizes = [1, 1], strides = [1, 1]} : vector<1x2xf32> to vector<1x1xf32>
    %c0_11 = arith.constant 0 : index
    %c0_12 = arith.constant 0 : index
    %10 = vector.load %arg5[%c0_11, %c0_12] : memref<64x32xf32, #tpu.memory_space<vmem>>, vector<64x32xf32>
    %c0_13 = arith.constant 0 : index
    %c0_14 = arith.constant 0 : index
    %11 = vector.load %arg6[%c0_13, %c0_14] : memref<64x8xf32, #tpu.memory_space<vmem>>, vector<64x8xf32>
    %c0_15 = arith.constant 0 : index
    %c0_16 = arith.constant 0 : index
    %12 = vector.load %arg7[%c0_15, %c0_16] : memref<8x64xf32, #tpu.memory_space<vmem>>, vector<8x64xf32>
    %c0_17 = arith.constant 0 : index
    %c0_18 = arith.constant 0 : index
    %13 = vector.load %arg8[%c0_17, %c0_18] : memref<64x8xf32, #tpu.memory_space<vmem>>, vector<64x8xf32>
    %c0_19 = arith.constant 0 : index
    %c0_20 = arith.constant 0 : index
    %14 = vector.load %arg9[%c0_19, %c0_20] : memref<8x64xf32, #tpu.memory_space<vmem>>, vector<8x64xf32>
    %c0_21 = arith.constant 0 : index
    %c0_22 = arith.constant 0 : index
    %c0_23 = arith.constant 0 : index
    %15 = vector.load %arg10[%c0_21, %c0_22, %c0_23] : memref<5x32x32xf32, #tpu.memory_space<vmem>>, vector<1x32x32xf32>
    %16 = vector.shape_cast %15 : vector<1x32x32xf32> to vector<32x32xf32>
    %cst = arith.constant dense<0.000000e+00> : vector<8x32xf32>
    %17 = tpu.matmul %1, %16, %cst {dimension_numbers = #tpu.dot_dimension_numbers<[1], [0], [0], [1], [0, 0, 1, 1], [], []>} : vector<8x32xf32>, vector<32x32xf32>, vector<8x32xf32> -> vector<8x32xf32>
    %c0_24 = arith.constant 0 : index
    %c0_25 = arith.constant 0 : index
    %c0_26 = arith.constant 0 : index
    %18 = vector.load %arg11[%c0_24, %c0_25, %c0_26] : memref<5x1x32xf32, #tpu.memory_space<vmem>>, vector<1x1x32xf32>
    %19 = vector.shape_cast %18 : vector<1x1x32xf32> to vector<1x32xf32>
    %20 = vector.broadcast %19 : vector<1x32xf32> to vector<8x32xf32>
    %21 = arith.addf %17, %20 : vector<8x32xf32>
    %c0_27 = arith.constant 0 : index
    %c0_28 = arith.constant 0 : index
    %c0_29 = arith.constant 0 : index
    %22 = vector.load %arg12[%c0_27, %c0_28, %c0_29] : memref<5x32x64xf32, #tpu.memory_space<vmem>>, vector<1x32x64xf32>
    %23 = vector.shape_cast %22 : vector<1x32x64xf32> to vector<32x64xf32>
    %cst_30 = arith.constant dense<0.000000e+00> : vector<8x64xf32>
    %24 = tpu.matmul %21, %23, %cst_30 {dimension_numbers = #tpu.dot_dimension_numbers<[1], [0], [0], [1], [0, 0, 1, 1], [], []>} : vector<8x32xf32>, vector<32x64xf32>, vector<8x64xf32> -> vector<8x64xf32>
    %25 = arith.mulf %24, %12 : vector<8x64xf32>
    %cst_31 = arith.constant dense<0.000000e+00> : vector<64xf32>
    %26 = vector.multi_reduction <add>, %25, %cst_31 [0] : vector<8x64xf32> to vector<64xf32>
    %27 = vector.shape_cast %26 : vector<64xf32> to vector<1x64xf32>
    %c0_32 = arith.constant 0 : index
    %c0_33 = arith.constant 0 : index
    %c0_34 = arith.constant 0 : index
    %28 = vector.load %arg13[%c0_32, %c0_33, %c0_34] : memref<5x32x64xf32, #tpu.memory_space<vmem>>, vector<1x32x64xf32>
    %29 = vector.shape_cast %28 : vector<1x32x64xf32> to vector<32x64xf32>
    %cst_35 = arith.constant dense<0.000000e+00> : vector<8x64xf32>
    %30 = tpu.matmul %1, %29, %cst_35 {dimension_numbers = #tpu.dot_dimension_numbers<[1], [0], [0], [1], [0, 0, 1, 1], [], []>} : vector<8x32xf32>, vector<32x64xf32>, vector<8x64xf32> -> vector<8x64xf32>
    %c0_36 = arith.constant 0 : index
    %c0_37 = arith.constant 0 : index
    %c0_38 = arith.constant 0 : index
    %31 = vector.load %arg14[%c0_36, %c0_37, %c0_38] : memref<5x1x64xf32, #tpu.memory_space<vmem>>, vector<1x1x64xf32>
    %32 = vector.shape_cast %31 : vector<1x1x64xf32> to vector<1x64xf32>
    %33 = vector.broadcast %32 : vector<1x64xf32> to vector<8x64xf32>
    %34 = arith.addf %30, %33 : vector<8x64xf32>
    %35 = vector.broadcast %27 : vector<1x64xf32> to vector<8x64xf32>
    %36 = arith.addf %34, %35 : vector<8x64xf32>
    %37 = math.tanh %36 : vector<8x64xf32>
    %38 = math.exp %37 : vector<8x64xf32>
    %cst_39 = arith.constant dense<0.000000e+00> : vector<8x8xf32>
    %39 = tpu.matmul %38, %13, %cst_39 {dimension_numbers = #tpu.dot_dimension_numbers<[1], [0], [0], [1], [0, 0, 1, 1], [], []>} : vector<8x64xf32>, vector<64x8xf32>, vector<8x8xf32> -> vector<8x8xf32>
    %40 = tpu.reciprocal %39 {approx = true} : vector<8x8xf32> -> vector<8x8xf32>
    %cst_40 = arith.constant dense<0.000000e+00> : vector<8x64xf32>
    %41 = tpu.matmul %40, %14, %cst_40 {dimension_numbers = #tpu.dot_dimension_numbers<[1], [0], [0], [1], [0, 0, 1, 1], [], []>} : vector<8x8xf32>, vector<8x64xf32>, vector<8x64xf32> -> vector<8x64xf32>
    %42 = arith.mulf %38, %41 : vector<8x64xf32>
    %cst_41 = arith.constant dense<0.000000e+00> : vector<64x32xf32>
    %43 = tpu.matmul %11, %21, %cst_41 {dimension_numbers = #tpu.dot_dimension_numbers<[1], [0], [0], [1], [0, 0, 1, 1], [], []>} : vector<64x8xf32>, vector<8x32xf32>, vector<64x32xf32> -> vector<64x32xf32>
    %44 = arith.mulf %43, %10 : vector<64x32xf32>
    %cst_42 = arith.constant dense<0.000000e+00> : vector<8x32xf32>
    %45 = tpu.matmul %42, %44, %cst_42 {dimension_numbers = #tpu.dot_dimension_numbers<[1], [0], [0], [1], [0, 0, 1, 1], [], []>} : vector<8x64xf32>, vector<64x32xf32>, vector<8x32xf32> -> vector<8x32xf32>
    %c0_43 = arith.constant 0 : index
    %c0_44 = arith.constant 0 : index
    %c0_45 = arith.constant 0 : index
    %46 = vector.load %arg15[%c0_43, %c0_44, %c0_45] : memref<5x32x32xf32, #tpu.memory_space<vmem>>, vector<1x32x32xf32>
    %47 = vector.shape_cast %46 : vector<1x32x32xf32> to vector<32x32xf32>
    %cst_46 = arith.constant dense<0.000000e+00> : vector<8x32xf32>
    %48 = tpu.matmul %45, %47, %cst_46 {dimension_numbers = #tpu.dot_dimension_numbers<[1], [0], [0], [1], [0, 0, 1, 1], [], []>} : vector<8x32xf32>, vector<32x32xf32>, vector<8x32xf32> -> vector<8x32xf32>
    %c0_47 = arith.constant 0 : index
    %c0_48 = arith.constant 0 : index
    %c0_49 = arith.constant 0 : index
    %49 = vector.load %arg16[%c0_47, %c0_48, %c0_49] : memref<5x1x32xf32, #tpu.memory_space<vmem>>, vector<1x1x32xf32>
    %50 = vector.shape_cast %49 : vector<1x1x32xf32> to vector<1x32xf32>
    %51 = vector.broadcast %50 : vector<1x32xf32> to vector<8x32xf32>
    %52 = arith.addf %48, %51 : vector<8x32xf32>
    %c0_50 = arith.constant 0 : index
    %c0_51 = arith.constant 0 : index
    %c0_52 = arith.constant 0 : index
    %53 = vector.load %arg17[%c0_50, %c0_51, %c0_52] : memref<3x32x32xf32, #tpu.memory_space<vmem>>, vector<1x32x32xf32>
    %54 = vector.shape_cast %53 : vector<1x32x32xf32> to vector<32x32xf32>
    %cst_53 = arith.constant dense<0.000000e+00> : vector<8x32xf32>
    %55 = tpu.matmul %52, %54, %cst_53 {dimension_numbers = #tpu.dot_dimension_numbers<[1], [0], [0], [1], [0, 0, 1, 1], [], []>} : vector<8x32xf32>, vector<32x32xf32>, vector<8x32xf32> -> vector<8x32xf32>
    %c0_54 = arith.constant 0 : index
    %c0_55 = arith.constant 0 : index
    %c0_56 = arith.constant 0 : index
    %56 = vector.load %arg18[%c0_54, %c0_55, %c0_56] : memref<3x1x32xf32, #tpu.memory_space<vmem>>, vector<1x1x32xf32>
    %57 = vector.shape_cast %56 : vector<1x1x32xf32> to vector<1x32xf32>
    %58 = vector.broadcast %57 : vector<1x32xf32> to vector<8x32xf32>
    %59 = arith.addf %55, %58 : vector<8x32xf32>
    %cst_57 = arith.constant 0.000000e+00 : f32
    %60 = vector.broadcast %cst_57 : f32 to vector<8x32xf32>
    %61 = arith.maximumf %59, %60 : vector<8x32xf32>
    %c0_58 = arith.constant 0 : index
    %c0_59 = arith.constant 0 : index
    %c0_60 = arith.constant 0 : index
    %62 = vector.load %arg19[%c0_58, %c0_59, %c0_60] : memref<3x32x32xf32, #tpu.memory_space<vmem>>, vector<1x32x32xf32>
    %63 = vector.shape_cast %62 : vector<1x32x32xf32> to vector<32x32xf32>
    %cst_61 = arith.constant dense<0.000000e+00> : vector<8x32xf32>
    %64 = tpu.matmul %61, %63, %cst_61 {dimension_numbers = #tpu.dot_dimension_numbers<[1], [0], [0], [1], [0, 0, 1, 1], [], []>} : vector<8x32xf32>, vector<32x32xf32>, vector<8x32xf32> -> vector<8x32xf32>
    %c0_62 = arith.constant 0 : index
    %c0_63 = arith.constant 0 : index
    %c0_64 = arith.constant 0 : index
    %65 = vector.load %arg20[%c0_62, %c0_63, %c0_64] : memref<3x1x32xf32, #tpu.memory_space<vmem>>, vector<1x1x32xf32>
    %66 = vector.shape_cast %65 : vector<1x1x32xf32> to vector<1x32xf32>
    %67 = vector.broadcast %66 : vector<1x32xf32> to vector<8x32xf32>
    %68 = arith.addf %64, %67 : vector<8x32xf32>
    %c1 = arith.constant 1 : index
    %c0_65 = arith.constant 0 : index
    %c0_66 = arith.constant 0 : index
    %69 = vector.load %arg10[%c1, %c0_65, %c0_66] : memref<5x32x32xf32, #tpu.memory_space<vmem>>, vector<1x32x32xf32>
    %70 = vector.shape_cast %69 : vector<1x32x32xf32> to vector<32x32xf32>
    %cst_67 = arith.constant dense<0.000000e+00> : vector<8x32xf32>
    %71 = tpu.matmul %1, %70, %cst_67 {dimension_numbers = #tpu.dot_dimension_numbers<[1], [0], [0], [1], [0, 0, 1, 1], [], []>} : vector<8x32xf32>, vector<32x32xf32>, vector<8x32xf32> -> vector<8x32xf32>
    %c1_68 = arith.constant 1 : index
    %c0_69 = arith.constant 0 : index
    %c0_70 = arith.constant 0 : index
    %72 = vector.load %arg11[%c1_68, %c0_69, %c0_70] : memref<5x1x32xf32, #tpu.memory_space<vmem>>, vector<1x1x32xf32>
    %73 = vector.shape_cast %72 : vector<1x1x32xf32> to vector<1x32xf32>
    %74 = vector.broadcast %73 : vector<1x32xf32> to vector<8x32xf32>
    %75 = arith.addf %71, %74 : vector<8x32xf32>
    %c1_71 = arith.constant 1 : index
    %c0_72 = arith.constant 0 : index
    %c0_73 = arith.constant 0 : index
    %76 = vector.load %arg12[%c1_71, %c0_72, %c0_73] : memref<5x32x64xf32, #tpu.memory_space<vmem>>, vector<1x32x64xf32>
    %77 = vector.shape_cast %76 : vector<1x32x64xf32> to vector<32x64xf32>
    %cst_74 = arith.constant dense<0.000000e+00> : vector<8x64xf32>
    %78 = tpu.matmul %75, %77, %cst_74 {dimension_numbers = #tpu.dot_dimension_numbers<[1], [0], [0], [1], [0, 0, 1, 1], [], []>} : vector<8x32xf32>, vector<32x64xf32>, vector<8x64xf32> -> vector<8x64xf32>
    %79 = arith.mulf %78, %12 : vector<8x64xf32>
    %cst_75 = arith.constant dense<0.000000e+00> : vector<64xf32>
    %80 = vector.multi_reduction <add>, %79, %cst_75 [0] : vector<8x64xf32> to vector<64xf32>
    %81 = vector.shape_cast %80 : vector<64xf32> to vector<1x64xf32>
    %c1_76 = arith.constant 1 : index
    %c0_77 = arith.constant 0 : index
    %c0_78 = arith.constant 0 : index
    %82 = vector.load %arg13[%c1_76, %c0_77, %c0_78] : memref<5x32x64xf32, #tpu.memory_space<vmem>>, vector<1x32x64xf32>
    %83 = vector.shape_cast %82 : vector<1x32x64xf32> to vector<32x64xf32>
    %cst_79 = arith.constant dense<0.000000e+00> : vector<4x64xf32>
    %84 = tpu.matmul %3, %83, %cst_79 {dimension_numbers = #tpu.dot_dimension_numbers<[1], [0], [0], [1], [0, 0, 1, 1], [], []>} : vector<4x32xf32>, vector<32x64xf32>, vector<4x64xf32> -> vector<4x64xf32>
    %c1_80 = arith.constant 1 : index
    %c0_81 = arith.constant 0 : index
    %c0_82 = arith.constant 0 : index
    %85 = vector.load %arg14[%c1_80, %c0_81, %c0_82] : memref<5x1x64xf32, #tpu.memory_space<vmem>>, vector<1x1x64xf32>
    %86 = vector.shape_cast %85 : vector<1x1x64xf32> to vector<1x64xf32>
    %87 = vector.broadcast %86 : vector<1x64xf32> to vector<4x64xf32>
    %88 = arith.addf %84, %87 : vector<4x64xf32>
    %89 = vector.broadcast %81 : vector<1x64xf32> to vector<4x64xf32>
    %90 = arith.addf %88, %89 : vector<4x64xf32>
    %91 = math.tanh %90 : vector<4x64xf32>
    %92 = math.exp %91 : vector<4x64xf32>
    %cst_83 = arith.constant dense<0.000000e+00> : vector<4x8xf32>
    %93 = tpu.matmul %92, %13, %cst_83 {dimension_numbers = #tpu.dot_dimension_numbers<[1], [0], [0], [1], [0, 0, 1, 1], [], []>} : vector<4x64xf32>, vector<64x8xf32>, vector<4x8xf32> -> vector<4x8xf32>
    %94 = tpu.reciprocal %93 {approx = true} : vector<4x8xf32> -> vector<4x8xf32>
    %cst_84 = arith.constant dense<0.000000e+00> : vector<4x64xf32>
    %95 = tpu.matmul %94, %14, %cst_84 {dimension_numbers = #tpu.dot_dimension_numbers<[1], [0], [0], [1], [0, 0, 1, 1], [], []>} : vector<4x8xf32>, vector<8x64xf32>, vector<4x64xf32> -> vector<4x64xf32>
    %96 = arith.mulf %92, %95 : vector<4x64xf32>
    %cst_85 = arith.constant dense<0.000000e+00> : vector<64x32xf32>
    %97 = tpu.matmul %11, %75, %cst_85 {dimension_numbers = #tpu.dot_dimension_numbers<[1], [0], [0], [1], [0, 0, 1, 1], [], []>} : vector<64x8xf32>, vector<8x32xf32>, vector<64x32xf32> -> vector<64x32xf32>
    %98 = arith.mulf %97, %10 : vector<64x32xf32>
    %cst_86 = arith.constant dense<0.000000e+00> : vector<4x32xf32>
    %99 = tpu.matmul %96, %98, %cst_86 {dimension_numbers = #tpu.dot_dimension_numbers<[1], [0], [0], [1], [0, 0, 1, 1], [], []>} : vector<4x64xf32>, vector<64x32xf32>, vector<4x32xf32> -> vector<4x32xf32>
    %c1_87 = arith.constant 1 : index
    %c0_88 = arith.constant 0 : index
    %c0_89 = arith.constant 0 : index
    %100 = vector.load %arg15[%c1_87, %c0_88, %c0_89] : memref<5x32x32xf32, #tpu.memory_space<vmem>>, vector<1x32x32xf32>
    %101 = vector.shape_cast %100 : vector<1x32x32xf32> to vector<32x32xf32>
    %cst_90 = arith.constant dense<0.000000e+00> : vector<4x32xf32>
    %102 = tpu.matmul %99, %101, %cst_90 {dimension_numbers = #tpu.dot_dimension_numbers<[1], [0], [0], [1], [0, 0, 1, 1], [], []>} : vector<4x32xf32>, vector<32x32xf32>, vector<4x32xf32> -> vector<4x32xf32>
    %c1_91 = arith.constant 1 : index
    %c0_92 = arith.constant 0 : index
    %c0_93 = arith.constant 0 : index
    %103 = vector.load %arg16[%c1_91, %c0_92, %c0_93] : memref<5x1x32xf32, #tpu.memory_space<vmem>>, vector<1x1x32xf32>
    %104 = vector.shape_cast %103 : vector<1x1x32xf32> to vector<1x32xf32>
    %105 = vector.broadcast %104 : vector<1x32xf32> to vector<4x32xf32>
    %106 = arith.addf %102, %105 : vector<4x32xf32>
    %c1_94 = arith.constant 1 : index
    %c0_95 = arith.constant 0 : index
    %c0_96 = arith.constant 0 : index
    %107 = vector.load %arg17[%c1_94, %c0_95, %c0_96] : memref<3x32x32xf32, #tpu.memory_space<vmem>>, vector<1x32x32xf32>
    %108 = vector.shape_cast %107 : vector<1x32x32xf32> to vector<32x32xf32>
    %cst_97 = arith.constant dense<0.000000e+00> : vector<4x32xf32>
    %109 = tpu.matmul %106, %108, %cst_97 {dimension_numbers = #tpu.dot_dimension_numbers<[1], [0], [0], [1], [0, 0, 1, 1], [], []>} : vector<4x32xf32>, vector<32x32xf32>, vector<4x32xf32> -> vector<4x32xf32>
    %c1_98 = arith.constant 1 : index
    %c0_99 = arith.constant 0 : index
    %c0_100 = arith.constant 0 : index
    %110 = vector.load %arg18[%c1_98, %c0_99, %c0_100] : memref<3x1x32xf32, #tpu.memory_space<vmem>>, vector<1x1x32xf32>
    %111 = vector.shape_cast %110 : vector<1x1x32xf32> to vector<1x32xf32>
    %112 = vector.broadcast %111 : vector<1x32xf32> to vector<4x32xf32>
    %113 = arith.addf %109, %112 : vector<4x32xf32>
    %cst_101 = arith.constant 0.000000e+00 : f32
    %114 = vector.broadcast %cst_101 : f32 to vector<4x32xf32>
    %115 = arith.maximumf %113, %114 : vector<4x32xf32>
    %c1_102 = arith.constant 1 : index
    %c0_103 = arith.constant 0 : index
    %c0_104 = arith.constant 0 : index
    %116 = vector.load %arg19[%c1_102, %c0_103, %c0_104] : memref<3x32x32xf32, #tpu.memory_space<vmem>>, vector<1x32x32xf32>
    %117 = vector.shape_cast %116 : vector<1x32x32xf32> to vector<32x32xf32>
    %cst_105 = arith.constant dense<0.000000e+00> : vector<4x32xf32>
    %118 = tpu.matmul %115, %117, %cst_105 {dimension_numbers = #tpu.dot_dimension_numbers<[1], [0], [0], [1], [0, 0, 1, 1], [], []>} : vector<4x32xf32>, vector<32x32xf32>, vector<4x32xf32> -> vector<4x32xf32>
    %c1_106 = arith.constant 1 : index
    %c0_107 = arith.constant 0 : index
    %c0_108 = arith.constant 0 : index
    %119 = vector.load %arg20[%c1_106, %c0_107, %c0_108] : memref<3x1x32xf32, #tpu.memory_space<vmem>>, vector<1x1x32xf32>
    %120 = vector.shape_cast %119 : vector<1x1x32xf32> to vector<1x32xf32>
    %121 = vector.broadcast %120 : vector<1x32xf32> to vector<4x32xf32>
    %122 = arith.addf %118, %121 : vector<4x32xf32>
    %c2 = arith.constant 2 : index
    %c0_109 = arith.constant 0 : index
    %c0_110 = arith.constant 0 : index
    %123 = vector.load %arg10[%c2, %c0_109, %c0_110] : memref<5x32x32xf32, #tpu.memory_space<vmem>>, vector<1x32x32xf32>
    %124 = vector.shape_cast %123 : vector<1x32x32xf32> to vector<32x32xf32>
    %cst_111 = arith.constant dense<0.000000e+00> : vector<8x32xf32>
    %125 = tpu.matmul %1, %124, %cst_111 {dimension_numbers = #tpu.dot_dimension_numbers<[1], [0], [0], [1], [0, 0, 1, 1], [], []>} : vector<8x32xf32>, vector<32x32xf32>, vector<8x32xf32> -> vector<8x32xf32>
    %c2_112 = arith.constant 2 : index
    %c0_113 = arith.constant 0 : index
    %c0_114 = arith.constant 0 : index
    %126 = vector.load %arg11[%c2_112, %c0_113, %c0_114] : memref<5x1x32xf32, #tpu.memory_space<vmem>>, vector<1x1x32xf32>
    %127 = vector.shape_cast %126 : vector<1x1x32xf32> to vector<1x32xf32>
    %128 = vector.broadcast %127 : vector<1x32xf32> to vector<8x32xf32>
    %129 = arith.addf %125, %128 : vector<8x32xf32>
    %c2_115 = arith.constant 2 : index
    %c0_116 = arith.constant 0 : index
    %c0_117 = arith.constant 0 : index
    %130 = vector.load %arg12[%c2_115, %c0_116, %c0_117] : memref<5x32x64xf32, #tpu.memory_space<vmem>>, vector<1x32x64xf32>
    %131 = vector.shape_cast %130 : vector<1x32x64xf32> to vector<32x64xf32>
    %cst_118 = arith.constant dense<0.000000e+00> : vector<8x64xf32>
    %132 = tpu.matmul %129, %131, %cst_118 {dimension_numbers = #tpu.dot_dimension_numbers<[1], [0], [0], [1], [0, 0, 1, 1], [], []>} : vector<8x32xf32>, vector<32x64xf32>, vector<8x64xf32> -> vector<8x64xf32>
    %133 = arith.mulf %132, %12 : vector<8x64xf32>
    %cst_119 = arith.constant dense<0.000000e+00> : vector<64xf32>
    %134 = vector.multi_reduction <add>, %133, %cst_119 [0] : vector<8x64xf32> to vector<64xf32>
    %135 = vector.shape_cast %134 : vector<64xf32> to vector<1x64xf32>
    %c2_120 = arith.constant 2 : index
    %c0_121 = arith.constant 0 : index
    %c0_122 = arith.constant 0 : index
    %136 = vector.load %arg13[%c2_120, %c0_121, %c0_122] : memref<5x32x64xf32, #tpu.memory_space<vmem>>, vector<1x32x64xf32>
    %137 = vector.shape_cast %136 : vector<1x32x64xf32> to vector<32x64xf32>
    %cst_123 = arith.constant dense<0.000000e+00> : vector<6x64xf32>
    %138 = tpu.matmul %5, %137, %cst_123 {dimension_numbers = #tpu.dot_dimension_numbers<[1], [0], [0], [1], [0, 0, 1, 1], [], []>} : vector<6x32xf32>, vector<32x64xf32>, vector<6x64xf32> -> vector<6x64xf32>
    %c2_124 = arith.constant 2 : index
    %c0_125 = arith.constant 0 : index
    %c0_126 = arith.constant 0 : index
    %139 = vector.load %arg14[%c2_124, %c0_125, %c0_126] : memref<5x1x64xf32, #tpu.memory_space<vmem>>, vector<1x1x64xf32>
    %140 = vector.shape_cast %139 : vector<1x1x64xf32> to vector<1x64xf32>
    %141 = vector.broadcast %140 : vector<1x64xf32> to vector<6x64xf32>
    %142 = arith.addf %138, %141 : vector<6x64xf32>
    %143 = vector.broadcast %135 : vector<1x64xf32> to vector<6x64xf32>
    %144 = arith.addf %142, %143 : vector<6x64xf32>
    %145 = math.tanh %144 : vector<6x64xf32>
    %146 = math.exp %145 : vector<6x64xf32>
    %cst_127 = arith.constant dense<0.000000e+00> : vector<6x8xf32>
    %147 = tpu.matmul %146, %13, %cst_127 {dimension_numbers = #tpu.dot_dimension_numbers<[1], [0], [0], [1], [0, 0, 1, 1], [], []>} : vector<6x64xf32>, vector<64x8xf32>, vector<6x8xf32> -> vector<6x8xf32>
    %148 = tpu.reciprocal %147 {approx = true} : vector<6x8xf32> -> vector<6x8xf32>
    %cst_128 = arith.constant dense<0.000000e+00> : vector<6x64xf32>
    %149 = tpu.matmul %148, %14, %cst_128 {dimension_numbers = #tpu.dot_dimension_numbers<[1], [0], [0], [1], [0, 0, 1, 1], [], []>} : vector<6x8xf32>, vector<8x64xf32>, vector<6x64xf32> -> vector<6x64xf32>
    %150 = arith.mulf %146, %149 : vector<6x64xf32>
    %cst_129 = arith.constant dense<0.000000e+00> : vector<64x32xf32>
    %151 = tpu.matmul %11, %129, %cst_129 {dimension_numbers = #tpu.dot_dimension_numbers<[1], [0], [0], [1], [0, 0, 1, 1], [], []>} : vector<64x8xf32>, vector<8x32xf32>, vector<64x32xf32> -> vector<64x32xf32>
    %152 = arith.mulf %151, %10 : vector<64x32xf32>
    %cst_130 = arith.constant dense<0.000000e+00> : vector<6x32xf32>
    %153 = tpu.matmul %150, %152, %cst_130 {dimension_numbers = #tpu.dot_dimension_numbers<[1], [0], [0], [1], [0, 0, 1, 1], [], []>} : vector<6x64xf32>, vector<64x32xf32>, vector<6x32xf32> -> vector<6x32xf32>
    %c2_131 = arith.constant 2 : index
    %c0_132 = arith.constant 0 : index
    %c0_133 = arith.constant 0 : index
    %154 = vector.load %arg15[%c2_131, %c0_132, %c0_133] : memref<5x32x32xf32, #tpu.memory_space<vmem>>, vector<1x32x32xf32>
    %155 = vector.shape_cast %154 : vector<1x32x32xf32> to vector<32x32xf32>
    %cst_134 = arith.constant dense<0.000000e+00> : vector<6x32xf32>
    %156 = tpu.matmul %153, %155, %cst_134 {dimension_numbers = #tpu.dot_dimension_numbers<[1], [0], [0], [1], [0, 0, 1, 1], [], []>} : vector<6x32xf32>, vector<32x32xf32>, vector<6x32xf32> -> vector<6x32xf32>
    %c2_135 = arith.constant 2 : index
    %c0_136 = arith.constant 0 : index
    %c0_137 = arith.constant 0 : index
    %157 = vector.load %arg16[%c2_135, %c0_136, %c0_137] : memref<5x1x32xf32, #tpu.memory_space<vmem>>, vector<1x1x32xf32>
    %158 = vector.shape_cast %157 : vector<1x1x32xf32> to vector<1x32xf32>
    %159 = vector.broadcast %158 : vector<1x32xf32> to vector<6x32xf32>
    %160 = arith.addf %156, %159 : vector<6x32xf32>
    %c2_138 = arith.constant 2 : index
    %c0_139 = arith.constant 0 : index
    %c0_140 = arith.constant 0 : index
    %161 = vector.load %arg17[%c2_138, %c0_139, %c0_140] : memref<3x32x32xf32, #tpu.memory_space<vmem>>, vector<1x32x32xf32>
    %162 = vector.shape_cast %161 : vector<1x32x32xf32> to vector<32x32xf32>
    %cst_141 = arith.constant dense<0.000000e+00> : vector<6x32xf32>
    %163 = tpu.matmul %160, %162, %cst_141 {dimension_numbers = #tpu.dot_dimension_numbers<[1], [0], [0], [1], [0, 0, 1, 1], [], []>} : vector<6x32xf32>, vector<32x32xf32>, vector<6x32xf32> -> vector<6x32xf32>
    %c2_142 = arith.constant 2 : index
    %c0_143 = arith.constant 0 : index
    %c0_144 = arith.constant 0 : index
    %164 = vector.load %arg18[%c2_142, %c0_143, %c0_144] : memref<3x1x32xf32, #tpu.memory_space<vmem>>, vector<1x1x32xf32>
    %165 = vector.shape_cast %164 : vector<1x1x32xf32> to vector<1x32xf32>
    %166 = vector.broadcast %165 : vector<1x32xf32> to vector<6x32xf32>
    %167 = arith.addf %163, %166 : vector<6x32xf32>
    %cst_145 = arith.constant 0.000000e+00 : f32
    %168 = vector.broadcast %cst_145 : f32 to vector<6x32xf32>
    %169 = arith.maximumf %167, %168 : vector<6x32xf32>
    %c2_146 = arith.constant 2 : index
    %c0_147 = arith.constant 0 : index
    %c0_148 = arith.constant 0 : index
    %170 = vector.load %arg19[%c2_146, %c0_147, %c0_148] : memref<3x32x32xf32, #tpu.memory_space<vmem>>, vector<1x32x32xf32>
    %171 = vector.shape_cast %170 : vector<1x32x32xf32> to vector<32x32xf32>
    %cst_149 = arith.constant dense<0.000000e+00> : vector<6x32xf32>
    %172 = tpu.matmul %169, %171, %cst_149 {dimension_numbers = #tpu.dot_dimension_numbers<[1], [0], [0], [1], [0, 0, 1, 1], [], []>} : vector<6x32xf32>, vector<32x32xf32>, vector<6x32xf32> -> vector<6x32xf32>
    %c2_150 = arith.constant 2 : index
    %c0_151 = arith.constant 0 : index
    %c0_152 = arith.constant 0 : index
    %173 = vector.load %arg20[%c2_150, %c0_151, %c0_152] : memref<3x1x32xf32, #tpu.memory_space<vmem>>, vector<1x1x32xf32>
    %174 = vector.shape_cast %173 : vector<1x1x32xf32> to vector<1x32xf32>
    %175 = vector.broadcast %174 : vector<1x32xf32> to vector<6x32xf32>
    %176 = arith.addf %172, %175 : vector<6x32xf32>
    %c3 = arith.constant 3 : index
    %c0_153 = arith.constant 0 : index
    %c0_154 = arith.constant 0 : index
    %177 = vector.load %arg10[%c3, %c0_153, %c0_154] : memref<5x32x32xf32, #tpu.memory_space<vmem>>, vector<1x32x32xf32>
    %178 = vector.shape_cast %177 : vector<1x32x32xf32> to vector<32x32xf32>
    %cst_155 = arith.constant dense<0.000000e+00> : vector<8x32xf32>
    %179 = tpu.matmul %68, %178, %cst_155 {dimension_numbers = #tpu.dot_dimension_numbers<[1], [0], [0], [1], [0, 0, 1, 1], [], []>} : vector<8x32xf32>, vector<32x32xf32>, vector<8x32xf32> -> vector<8x32xf32>
    %c3_156 = arith.constant 3 : index
    %c0_157 = arith.constant 0 : index
    %c0_158 = arith.constant 0 : index
    %180 = vector.load %arg11[%c3_156, %c0_157, %c0_158] : memref<5x1x32xf32, #tpu.memory_space<vmem>>, vector<1x1x32xf32>
    %181 = vector.shape_cast %180 : vector<1x1x32xf32> to vector<1x32xf32>
    %182 = vector.broadcast %181 : vector<1x32xf32> to vector<8x32xf32>
    %183 = arith.addf %179, %182 : vector<8x32xf32>
    %c3_159 = arith.constant 3 : index
    %c0_160 = arith.constant 0 : index
    %c0_161 = arith.constant 0 : index
    %184 = vector.load %arg12[%c3_159, %c0_160, %c0_161] : memref<5x32x64xf32, #tpu.memory_space<vmem>>, vector<1x32x64xf32>
    %185 = vector.shape_cast %184 : vector<1x32x64xf32> to vector<32x64xf32>
    %cst_162 = arith.constant dense<0.000000e+00> : vector<8x64xf32>
    %186 = tpu.matmul %183, %185, %cst_162 {dimension_numbers = #tpu.dot_dimension_numbers<[1], [0], [0], [1], [0, 0, 1, 1], [], []>} : vector<8x32xf32>, vector<32x64xf32>, vector<8x64xf32> -> vector<8x64xf32>
    %187 = arith.mulf %186, %12 : vector<8x64xf32>
    %cst_163 = arith.constant dense<0.000000e+00> : vector<64xf32>
    %188 = vector.multi_reduction <add>, %187, %cst_163 [0] : vector<8x64xf32> to vector<64xf32>
    %189 = vector.shape_cast %188 : vector<64xf32> to vector<1x64xf32>
    %c3_164 = arith.constant 3 : index
    %c0_165 = arith.constant 0 : index
    %c0_166 = arith.constant 0 : index
    %190 = vector.load %arg13[%c3_164, %c0_165, %c0_166] : memref<5x32x64xf32, #tpu.memory_space<vmem>>, vector<1x32x64xf32>
    %191 = vector.shape_cast %190 : vector<1x32x64xf32> to vector<32x64xf32>
    %cst_167 = arith.constant dense<0.000000e+00> : vector<4x64xf32>
    %192 = tpu.matmul %122, %191, %cst_167 {dimension_numbers = #tpu.dot_dimension_numbers<[1], [0], [0], [1], [0, 0, 1, 1], [], []>} : vector<4x32xf32>, vector<32x64xf32>, vector<4x64xf32> -> vector<4x64xf32>
    %c3_168 = arith.constant 3 : index
    %c0_169 = arith.constant 0 : index
    %c0_170 = arith.constant 0 : index
    %193 = vector.load %arg14[%c3_168, %c0_169, %c0_170] : memref<5x1x64xf32, #tpu.memory_space<vmem>>, vector<1x1x64xf32>
    %194 = vector.shape_cast %193 : vector<1x1x64xf32> to vector<1x64xf32>
    %195 = vector.broadcast %194 : vector<1x64xf32> to vector<4x64xf32>
    %196 = arith.addf %192, %195 : vector<4x64xf32>
    %197 = vector.broadcast %189 : vector<1x64xf32> to vector<4x64xf32>
    %198 = arith.addf %196, %197 : vector<4x64xf32>
    %199 = math.tanh %198 : vector<4x64xf32>
    %200 = math.exp %199 : vector<4x64xf32>
    %cst_171 = arith.constant dense<0.000000e+00> : vector<4x8xf32>
    %201 = tpu.matmul %200, %13, %cst_171 {dimension_numbers = #tpu.dot_dimension_numbers<[1], [0], [0], [1], [0, 0, 1, 1], [], []>} : vector<4x64xf32>, vector<64x8xf32>, vector<4x8xf32> -> vector<4x8xf32>
    %202 = tpu.reciprocal %201 {approx = true} : vector<4x8xf32> -> vector<4x8xf32>
    %cst_172 = arith.constant dense<0.000000e+00> : vector<4x64xf32>
    %203 = tpu.matmul %202, %14, %cst_172 {dimension_numbers = #tpu.dot_dimension_numbers<[1], [0], [0], [1], [0, 0, 1, 1], [], []>} : vector<4x8xf32>, vector<8x64xf32>, vector<4x64xf32> -> vector<4x64xf32>
    %204 = arith.mulf %200, %203 : vector<4x64xf32>
    %cst_173 = arith.constant dense<0.000000e+00> : vector<64x32xf32>
    %205 = tpu.matmul %11, %183, %cst_173 {dimension_numbers = #tpu.dot_dimension_numbers<[1], [0], [0], [1], [0, 0, 1, 1], [], []>} : vector<64x8xf32>, vector<8x32xf32>, vector<64x32xf32> -> vector<64x32xf32>
    %206 = arith.mulf %205, %10 : vector<64x32xf32>
    %cst_174 = arith.constant dense<0.000000e+00> : vector<4x32xf32>
    %207 = tpu.matmul %204, %206, %cst_174 {dimension_numbers = #tpu.dot_dimension_numbers<[1], [0], [0], [1], [0, 0, 1, 1], [], []>} : vector<4x64xf32>, vector<64x32xf32>, vector<4x32xf32> -> vector<4x32xf32>
    %c3_175 = arith.constant 3 : index
    %c0_176 = arith.constant 0 : index
    %c0_177 = arith.constant 0 : index
    %208 = vector.load %arg15[%c3_175, %c0_176, %c0_177] : memref<5x32x32xf32, #tpu.memory_space<vmem>>, vector<1x32x32xf32>
    %209 = vector.shape_cast %208 : vector<1x32x32xf32> to vector<32x32xf32>
    %cst_178 = arith.constant dense<0.000000e+00> : vector<4x32xf32>
    %210 = tpu.matmul %207, %209, %cst_178 {dimension_numbers = #tpu.dot_dimension_numbers<[1], [0], [0], [1], [0, 0, 1, 1], [], []>} : vector<4x32xf32>, vector<32x32xf32>, vector<4x32xf32> -> vector<4x32xf32>
    %c3_179 = arith.constant 3 : index
    %c0_180 = arith.constant 0 : index
    %c0_181 = arith.constant 0 : index
    %211 = vector.load %arg16[%c3_179, %c0_180, %c0_181] : memref<5x1x32xf32, #tpu.memory_space<vmem>>, vector<1x1x32xf32>
    %212 = vector.shape_cast %211 : vector<1x1x32xf32> to vector<1x32xf32>
    %213 = vector.broadcast %212 : vector<1x32xf32> to vector<4x32xf32>
    %214 = arith.addf %210, %213 : vector<4x32xf32>
    %c4 = arith.constant 4 : index
    %c0_182 = arith.constant 0 : index
    %c0_183 = arith.constant 0 : index
    %215 = vector.load %arg10[%c4, %c0_182, %c0_183] : memref<5x32x32xf32, #tpu.memory_space<vmem>>, vector<1x32x32xf32>
    %216 = vector.shape_cast %215 : vector<1x32x32xf32> to vector<32x32xf32>
    %cst_184 = arith.constant dense<0.000000e+00> : vector<8x32xf32>
    %217 = tpu.matmul %68, %216, %cst_184 {dimension_numbers = #tpu.dot_dimension_numbers<[1], [0], [0], [1], [0, 0, 1, 1], [], []>} : vector<8x32xf32>, vector<32x32xf32>, vector<8x32xf32> -> vector<8x32xf32>
    %c4_185 = arith.constant 4 : index
    %c0_186 = arith.constant 0 : index
    %c0_187 = arith.constant 0 : index
    %218 = vector.load %arg11[%c4_185, %c0_186, %c0_187] : memref<5x1x32xf32, #tpu.memory_space<vmem>>, vector<1x1x32xf32>
    %219 = vector.shape_cast %218 : vector<1x1x32xf32> to vector<1x32xf32>
    %220 = vector.broadcast %219 : vector<1x32xf32> to vector<8x32xf32>
    %221 = arith.addf %217, %220 : vector<8x32xf32>
    %c4_188 = arith.constant 4 : index
    %c0_189 = arith.constant 0 : index
    %c0_190 = arith.constant 0 : index
    %222 = vector.load %arg12[%c4_188, %c0_189, %c0_190] : memref<5x32x64xf32, #tpu.memory_space<vmem>>, vector<1x32x64xf32>
    %223 = vector.shape_cast %222 : vector<1x32x64xf32> to vector<32x64xf32>
    %cst_191 = arith.constant dense<0.000000e+00> : vector<8x64xf32>
    %224 = tpu.matmul %221, %223, %cst_191 {dimension_numbers = #tpu.dot_dimension_numbers<[1], [0], [0], [1], [0, 0, 1, 1], [], []>} : vector<8x32xf32>, vector<32x64xf32>, vector<8x64xf32> -> vector<8x64xf32>
    %225 = arith.mulf %224, %12 : vector<8x64xf32>
    %cst_192 = arith.constant dense<0.000000e+00> : vector<64xf32>
    %226 = vector.multi_reduction <add>, %225, %cst_192 [0] : vector<8x64xf32> to vector<64xf32>
    %227 = vector.shape_cast %226 : vector<64xf32> to vector<1x64xf32>
    %c4_193 = arith.constant 4 : index
    %c0_194 = arith.constant 0 : index
    %c0_195 = arith.constant 0 : index
    %228 = vector.load %arg13[%c4_193, %c0_194, %c0_195] : memref<5x32x64xf32, #tpu.memory_space<vmem>>, vector<1x32x64xf32>
    %229 = vector.shape_cast %228 : vector<1x32x64xf32> to vector<32x64xf32>
    %cst_196 = arith.constant dense<0.000000e+00> : vector<6x64xf32>
    %230 = tpu.matmul %176, %229, %cst_196 {dimension_numbers = #tpu.dot_dimension_numbers<[1], [0], [0], [1], [0, 0, 1, 1], [], []>} : vector<6x32xf32>, vector<32x64xf32>, vector<6x64xf32> -> vector<6x64xf32>
    %c4_197 = arith.constant 4 : index
    %c0_198 = arith.constant 0 : index
    %c0_199 = arith.constant 0 : index
    %231 = vector.load %arg14[%c4_197, %c0_198, %c0_199] : memref<5x1x64xf32, #tpu.memory_space<vmem>>, vector<1x1x64xf32>
    %232 = vector.shape_cast %231 : vector<1x1x64xf32> to vector<1x64xf32>
    %233 = vector.broadcast %232 : vector<1x64xf32> to vector<6x64xf32>
    %234 = arith.addf %230, %233 : vector<6x64xf32>
    %235 = vector.broadcast %227 : vector<1x64xf32> to vector<6x64xf32>
    %236 = arith.addf %234, %235 : vector<6x64xf32>
    %237 = math.tanh %236 : vector<6x64xf32>
    %238 = math.exp %237 : vector<6x64xf32>
    %cst_200 = arith.constant dense<0.000000e+00> : vector<6x8xf32>
    %239 = tpu.matmul %238, %13, %cst_200 {dimension_numbers = #tpu.dot_dimension_numbers<[1], [0], [0], [1], [0, 0, 1, 1], [], []>} : vector<6x64xf32>, vector<64x8xf32>, vector<6x8xf32> -> vector<6x8xf32>
    %240 = tpu.reciprocal %239 {approx = true} : vector<6x8xf32> -> vector<6x8xf32>
    %cst_201 = arith.constant dense<0.000000e+00> : vector<6x64xf32>
    %241 = tpu.matmul %240, %14, %cst_201 {dimension_numbers = #tpu.dot_dimension_numbers<[1], [0], [0], [1], [0, 0, 1, 1], [], []>} : vector<6x8xf32>, vector<8x64xf32>, vector<6x64xf32> -> vector<6x64xf32>
    %242 = arith.mulf %238, %241 : vector<6x64xf32>
    %cst_202 = arith.constant dense<0.000000e+00> : vector<64x32xf32>
    %243 = tpu.matmul %11, %221, %cst_202 {dimension_numbers = #tpu.dot_dimension_numbers<[1], [0], [0], [1], [0, 0, 1, 1], [], []>} : vector<64x8xf32>, vector<8x32xf32>, vector<64x32xf32> -> vector<64x32xf32>
    %244 = arith.mulf %243, %10 : vector<64x32xf32>
    %cst_203 = arith.constant dense<0.000000e+00> : vector<6x32xf32>
    %245 = tpu.matmul %242, %244, %cst_203 {dimension_numbers = #tpu.dot_dimension_numbers<[1], [0], [0], [1], [0, 0, 1, 1], [], []>} : vector<6x64xf32>, vector<64x32xf32>, vector<6x32xf32> -> vector<6x32xf32>
    %c4_204 = arith.constant 4 : index
    %c0_205 = arith.constant 0 : index
    %c0_206 = arith.constant 0 : index
    %246 = vector.load %arg15[%c4_204, %c0_205, %c0_206] : memref<5x32x32xf32, #tpu.memory_space<vmem>>, vector<1x32x32xf32>
    %247 = vector.shape_cast %246 : vector<1x32x32xf32> to vector<32x32xf32>
    %cst_207 = arith.constant dense<0.000000e+00> : vector<6x32xf32>
    %248 = tpu.matmul %245, %247, %cst_207 {dimension_numbers = #tpu.dot_dimension_numbers<[1], [0], [0], [1], [0, 0, 1, 1], [], []>} : vector<6x32xf32>, vector<32x32xf32>, vector<6x32xf32> -> vector<6x32xf32>
    %c4_208 = arith.constant 4 : index
    %c0_209 = arith.constant 0 : index
    %c0_210 = arith.constant 0 : index
    %249 = vector.load %arg16[%c4_208, %c0_209, %c0_210] : memref<5x1x32xf32, #tpu.memory_space<vmem>>, vector<1x1x32xf32>
    %250 = vector.shape_cast %249 : vector<1x1x32xf32> to vector<1x32xf32>
    %251 = vector.broadcast %250 : vector<1x32xf32> to vector<6x32xf32>
    %252 = arith.addf %248, %251 : vector<6x32xf32>
    %cst_211 = arith.constant dense<0.000000e+00> : vector<32xf32>
    %253 = vector.multi_reduction <add>, %68, %cst_211 [0] : vector<8x32xf32> to vector<32xf32>
    %254 = vector.shape_cast %253 : vector<32xf32> to vector<1x32xf32>
    %255 = vector.broadcast %8 : vector<1x1xf32> to vector<1x32xf32>
    %256 = arith.divf %254, %255 : vector<1x32xf32>
    %cst_212 = arith.constant dense<0.000000e+00> : vector<32xf32>
    %257 = vector.multi_reduction <add>, %122, %cst_212 [0] : vector<4x32xf32> to vector<32xf32>
    %258 = vector.shape_cast %257 : vector<32xf32> to vector<1x32xf32>
    %259 = vector.broadcast %9 : vector<1x1xf32> to vector<1x32xf32>
    %260 = arith.divf %258, %259 : vector<1x32xf32>
    %cst_213 = arith.constant dense<0.000000e+00> : vector<32xf32>
    %261 = vector.multi_reduction <add>, %214, %cst_213 [0] : vector<4x32xf32> to vector<32xf32>
    %262 = vector.shape_cast %261 : vector<32xf32> to vector<1x32xf32>
    %263 = vector.broadcast %8 : vector<1x1xf32> to vector<1x32xf32>
    %264 = arith.divf %262, %263 : vector<1x32xf32>
    %cst_214 = arith.constant dense<0.000000e+00> : vector<32xf32>
    %265 = vector.multi_reduction <add>, %252, %cst_214 [0] : vector<6x32xf32> to vector<32xf32>
    %266 = vector.shape_cast %265 : vector<32xf32> to vector<1x32xf32>
    %267 = vector.broadcast %8 : vector<1x1xf32> to vector<1x32xf32>
    %268 = arith.divf %266, %267 : vector<1x32xf32>
    %c0_215 = arith.constant 0 : index
    %c0_216 = arith.constant 0 : index
    %c0_217 = arith.constant 0 : index
    %269 = vector.load %arg21[%c0_215, %c0_216, %c0_217] : memref<4x32x3xf32, #tpu.memory_space<vmem>>, vector<1x32x3xf32>
    %270 = vector.shape_cast %269 : vector<1x32x3xf32> to vector<32x3xf32>
    %cst_218 = arith.constant dense<0.000000e+00> : vector<1x3xf32>
    %271 = tpu.matmul %256, %270, %cst_218 {dimension_numbers = #tpu.dot_dimension_numbers<[1], [0], [0], [1], [0, 0, 1, 1], [], []>} : vector<1x32xf32>, vector<32x3xf32>, vector<1x3xf32> -> vector<1x3xf32>
    %c1_219 = arith.constant 1 : index
    %c0_220 = arith.constant 0 : index
    %c0_221 = arith.constant 0 : index
    %272 = vector.load %arg21[%c1_219, %c0_220, %c0_221] : memref<4x32x3xf32, #tpu.memory_space<vmem>>, vector<1x32x3xf32>
    %273 = vector.shape_cast %272 : vector<1x32x3xf32> to vector<32x3xf32>
    %cst_222 = arith.constant dense<0.000000e+00> : vector<1x3xf32>
    %274 = tpu.matmul %264, %273, %cst_222 {dimension_numbers = #tpu.dot_dimension_numbers<[1], [0], [0], [1], [0, 0, 1, 1], [], []>} : vector<1x32xf32>, vector<32x3xf32>, vector<1x3xf32> -> vector<1x3xf32>
    %275 = arith.addf %271, %274 : vector<1x3xf32>
    %c2_223 = arith.constant 2 : index
    %c0_224 = arith.constant 0 : index
    %c0_225 = arith.constant 0 : index
    %276 = vector.load %arg21[%c2_223, %c0_224, %c0_225] : memref<4x32x3xf32, #tpu.memory_space<vmem>>, vector<1x32x3xf32>
    %277 = vector.shape_cast %276 : vector<1x32x3xf32> to vector<32x3xf32>
    %cst_226 = arith.constant dense<0.000000e+00> : vector<1x3xf32>
    %278 = tpu.matmul %260, %277, %cst_226 {dimension_numbers = #tpu.dot_dimension_numbers<[1], [0], [0], [1], [0, 0, 1, 1], [], []>} : vector<1x32xf32>, vector<32x3xf32>, vector<1x3xf32> -> vector<1x3xf32>
    %279 = arith.addf %275, %278 : vector<1x3xf32>
    %c3_227 = arith.constant 3 : index
    %c0_228 = arith.constant 0 : index
    %c0_229 = arith.constant 0 : index
    %280 = vector.load %arg21[%c3_227, %c0_228, %c0_229] : memref<4x32x3xf32, #tpu.memory_space<vmem>>, vector<1x32x3xf32>
    %281 = vector.shape_cast %280 : vector<1x32x3xf32> to vector<32x3xf32>
    %cst_230 = arith.constant dense<0.000000e+00> : vector<1x3xf32>
    %282 = tpu.matmul %268, %281, %cst_230 {dimension_numbers = #tpu.dot_dimension_numbers<[1], [0], [0], [1], [0, 0, 1, 1], [], []>} : vector<1x32xf32>, vector<32x3xf32>, vector<1x3xf32> -> vector<1x3xf32>
    %283 = arith.addf %279, %282 : vector<1x3xf32>
    %c0_231 = arith.constant 0 : index
    %c0_232 = arith.constant 0 : index
    %284 = vector.load %arg22[%c0_231, %c0_232] : memref<1x3xf32, #tpu.memory_space<vmem>>, vector<1x3xf32>
    %285 = arith.addf %283, %284 : vector<1x3xf32>
    %c0_233 = arith.constant 0 : index
    %c0_234 = arith.constant 0 : index
    %c0_235 = arith.constant 0 : index
    %286 = vector.load %arg23[%c0_233, %c0_234, %c0_235] : memref<1x1x3xf32, #tpu.memory_space<vmem>>, vector<1x1x3xf32>
    %287 = vector.shape_cast %286 : vector<1x1x3xf32> to vector<1x3xf32>
    %288 = vector.shape_cast %285 : vector<1x3xf32> to vector<1x1x3xf32>
    tpu.vector_store %arg23[%c0_233, %c0_234, %c0_235], %288 {strides = array<i32>} : memref<1x1x3xf32, #tpu.memory_space<vmem>>, vector<1x1x3xf32>,
    return
  }
  func.func @transform_0(%arg0: i32) -> (i32, i32, i32) {
    %c0_i32 = arith.constant 0 : i32
    %c0_i32_0 = arith.constant 0 : i32
    %c0_i32_1 = arith.constant 0 : i32
    return %arg0, %c0_i32, %c0_i32_0 : i32, i32, i32
  }
  func.func @transform_1(%arg0: i32) -> (i32, i32, i32) {
    %c0_i32 = arith.constant 0 : i32
    %c0_i32_0 = arith.constant 0 : i32
    %c0_i32_1 = arith.constant 0 : i32
    return %arg0, %c0_i32, %c0_i32_0 : i32, i32, i32
  }
  func.func @transform_2(%arg0: i32) -> (i32, i32, i32) {
    %c0_i32 = arith.constant 0 : i32
    %c0_i32_0 = arith.constant 0 : i32
    %c0_i32_1 = arith.constant 0 : i32
    return %arg0, %c0_i32, %c0_i32_0 : i32, i32, i32
  }
  func.func @transform_3(%arg0: i32) -> (i32, i32, i32) {
    %c0_i32 = arith.constant 0 : i32
    %c0_i32_0 = arith.constant 0 : i32
    %c0_i32_1 = arith.constant 0 : i32
    return %arg0, %c0_i32, %c0_i32_0 : i32, i32, i32
  }
  func.func @transform_4(%arg0: i32) -> (i32, i32) {
    %c0_i32 = arith.constant 0 : i32
    %c0_i32_0 = arith.constant 0 : i32
    %c0_i32_1 = arith.constant 0 : i32
    return %c0_i32, %c0_i32_0 : i32, i32
  }
  func.func @transform_5(%arg0: i32) -> (i32, i32) {
    %c0_i32 = arith.constant 0 : i32
    %c0_i32_0 = arith.constant 0 : i32
    %c0_i32_1 = arith.constant 0 : i32
    return %c0_i32, %c0_i32_0 : i32, i32
  }
  func.func @transform_6(%arg0: i32) -> (i32, i32) {
    %c0_i32 = arith.constant 0 : i32
    %c0_i32_0 = arith.constant 0 : i32
    %c0_i32_1 = arith.constant 0 : i32
    return %c0_i32, %c0_i32_0 : i32, i32
  }
  func.func @transform_7(%arg0: i32) -> (i32, i32) {
    %c0_i32 = arith.constant 0 : i32
    %c0_i32_0 = arith.constant 0 : i32
    %c0_i32_1 = arith.constant 0 : i32
    return %c0_i32, %c0_i32_0 : i32, i32
  }
  func.func @transform_8(%arg0: i32) -> (i32, i32) {
    %c0_i32 = arith.constant 0 : i32
    %c0_i32_0 = arith.constant 0 : i32
    %c0_i32_1 = arith.constant 0 : i32
    return %c0_i32, %c0_i32_0 : i32, i32
  }
  func.func @transform_9(%arg0: i32) -> (i32, i32, i32) {
    %c0_i32 = arith.constant 0 : i32
    %c0_i32_0 = arith.constant 0 : i32
    %c0_i32_1 = arith.constant 0 : i32
    %c0_i32_2 = arith.constant 0 : i32
    return %c0_i32, %c0_i32_0, %c0_i32_1 : i32, i32, i32
  }
  func.func @transform_10(%arg0: i32) -> (i32, i32, i32) {
    %c0_i32 = arith.constant 0 : i32
    %c0_i32_0 = arith.constant 0 : i32
    %c0_i32_1 = arith.constant 0 : i32
    %c0_i32_2 = arith.constant 0 : i32
    return %c0_i32, %c0_i32_0, %c0_i32_1 : i32, i32, i32
  }
  func.func @transform_11(%arg0: i32) -> (i32, i32, i32) {
    %c0_i32 = arith.constant 0 : i32
    %c0_i32_0 = arith.constant 0 : i32
    %c0_i32_1 = arith.constant 0 : i32
    %c0_i32_2 = arith.constant 0 : i32
    return %c0_i32, %c0_i32_0, %c0_i32_1 : i32, i32, i32
  }
  func.func @transform_12(%arg0: i32) -> (i32, i32, i32) {
    %c0_i32 = arith.constant 0 : i32
    %c0_i32_0 = arith.constant 0 : i32
    %c0_i32_1 = arith.constant 0 : i32
    %c0_i32_2 = arith.constant 0 : i32
    return %c0_i32, %c0_i32_0, %c0_i32_1 : i32, i32, i32
  }
  func.func @transform_13(%arg0: i32) -> (i32, i32, i32) {
    %c0_i32 = arith.constant 0 : i32
    %c0_i32_0 = arith.constant 0 : i32
    %c0_i32_1 = arith.constant 0 : i32
    %c0_i32_2 = arith.constant 0 : i32
    return %c0_i32, %c0_i32_0, %c0_i32_1 : i32, i32, i32
  }
  func.func @transform_14(%arg0: i32) -> (i32, i32, i32) {
    %c0_i32 = arith.constant 0 : i32
    %c0_i32_0 = arith.constant 0 : i32
    %c0_i32_1 = arith.constant 0 : i32
    %c0_i32_2 = arith.constant 0 : i32
    return %c0_i32, %c0_i32_0, %c0_i32_1 : i32, i32, i32
  }
  func.func @transform_15(%arg0: i32) -> (i32, i32, i32) {
    %c0_i32 = arith.constant 0 : i32
    %c0_i32_0 = arith.constant 0 : i32
    %c0_i32_1 = arith.constant 0 : i32
    %c0_i32_2 = arith.constant 0 : i32
    return %c0_i32, %c0_i32_0, %c0_i32_1 : i32, i32, i32
  }
  func.func @transform_16(%arg0: i32) -> (i32, i32, i32) {
    %c0_i32 = arith.constant 0 : i32
    %c0_i32_0 = arith.constant 0 : i32
    %c0_i32_1 = arith.constant 0 : i32
    %c0_i32_2 = arith.constant 0 : i32
    return %c0_i32, %c0_i32_0, %c0_i32_1 : i32, i32, i32
  }
  func.func @transform_17(%arg0: i32) -> (i32, i32, i32) {
    %c0_i32 = arith.constant 0 : i32
    %c0_i32_0 = arith.constant 0 : i32
    %c0_i32_1 = arith.constant 0 : i32
    %c0_i32_2 = arith.constant 0 : i32
    return %c0_i32, %c0_i32_0, %c0_i32_1 : i32, i32, i32
  }
  func.func @transform_18(%arg0: i32) -> (i32, i32, i32) {
    %c0_i32 = arith.constant 0 : i32
    %c0_i32_0 = arith.constant 0 : i32
    %c0_i32_1 = arith.constant 0 : i32
    %c0_i32_2 = arith.constant 0 : i32
    return %c0_i32, %c0_i32_0, %c0_i32_1 : i32, i32, i32
  }
  func.func @transform_19(%arg0: i32) -> (i32, i32, i32) {
    %c0_i32 = arith.constant 0 : i32
    %c0_i32_0 = arith.constant 0 : i32
    %c0_i32_1 = arith.constant 0 : i32
    %c0_i32_2 = arith.constant 0 : i32
    return %c0_i32, %c0_i32_0, %c0_i32_1 : i32, i32, i32
  }
  func.func @transform_20(%arg0: i32) -> (i32, i32, i32) {
    %c0_i32 = arith.constant 0 : i32
    %c0_i32_0 = arith.constant 0 : i32
    %c0_i32_1 = arith.constant 0 : i32
    %c0_i32_2 = arith.constant 0 : i32
    return %c0_i32, %c0_i32_0, %c0_i32_1 : i32, i32, i32
  }
  func.func @transform_21(%arg0: i32) -> (i32, i32) {
    %c0_i32 = arith.constant 0 : i32
    %c0_i32_0 = arith.constant 0 : i32
    %c0_i32_1 = arith.constant 0 : i32
    return %c0_i32, %c0_i32_0 : i32, i32
  }
  func.func @transform_22(%arg0: i32) -> (i32, i32, i32) {
    %c0_i32 = arith.constant 0 : i32
    %c0_i32_0 = arith.constant 0 : i32
    %c0_i32_1 = arith.constant 0 : i32
    return %arg0, %c0_i32, %c0_i32_0 : i32, i32, i32
  }
}

</mosaic_0001>

<llo_original>
// kernel: gkeaen_forward.1
$region0: #{gkeaen_forward.1}
  #allocation0 [shape = 'u32[]', space=smem, size = 0x4, offset = 0x4, fixed_abs, tag = 'smem constant byte address 0x4 - core index']
  #allocation1 [shape = 'u32[72,128]{1,0:T(1,128)}', space=vmem, size = 0x9000, scoped, tag = 'internal scratch']
  %s0 = inlined_call_operand.vmem [shape: f32[2,8,32], index: 0, kind: input, shape index: {}]
  %s1 = inlined_call_operand.vmem [shape: f32[2,4,32], index: 1, kind: input, shape index: {}]
  %s2 = inlined_call_operand.vmem [shape: f32[2,6,32], index: 2, kind: input, shape index: {}]
  %s3 = inlined_call_operand.vmem [shape: f32[2,1,2], index: 3, kind: input, shape index: {}]
  %s4 = inlined_call_operand.vmem [shape: f32[64,32], index: 4, kind: input, shape index: {}]
  %s5 = inlined_call_operand.vmem [shape: f32[64,8], index: 5, kind: input, shape index: {}]
  %s6 = inlined_call_operand.vmem [shape: f32[8,64], index: 6, kind: input, shape index: {}]
  %s7 = inlined_call_operand.vmem [shape: f32[64,8], index: 7, kind: input, shape index: {}]
  %s8 = inlined_call_operand.vmem [shape: f32[8,64], index: 8, kind: input, shape index: {}]
  %s9 = inlined_call_operand.vmem [shape: f32[5,32,32], index: 9, kind: input, shape index: {}]
  %s10 = inlined_call_operand.vmem [shape: f32[5,1,32], index: 10, kind: input, shape index: {}]
  %s11 = inlined_call_operand.vmem [shape: f32[5,32,64], index: 11, kind: input, shape index: {}]
  %s12 = inlined_call_operand.vmem [shape: f32[5,32,64], index: 12, kind: input, shape index: {}]
  %s13 = inlined_call_operand.vmem [shape: f32[5,1,64], index: 13, kind: input, shape index: {}]
  %s14 = inlined_call_operand.vmem [shape: f32[5,32,32], index: 14, kind: input, shape index: {}]
  %s15 = inlined_call_operand.vmem [shape: f32[5,1,32], index: 15, kind: input, shape index: {}]
  %s16 = inlined_call_operand.vmem [shape: f32[3,32,32], index: 16, kind: input, shape index: {}]
  %s17 = inlined_call_operand.vmem [shape: f32[3,1,32], index: 17, kind: input, shape index: {}]
  %s18 = inlined_call_operand.vmem [shape: f32[3,32,32], index: 18, kind: input, shape index: {}]
  %s19 = inlined_call_operand.vmem [shape: f32[3,1,32], index: 19, kind: input, shape index: {}]
  %s20 = inlined_call_operand.vmem [shape: f32[4,32,3], index: 20, kind: input, shape index: {}]
  %s21 = inlined_call_operand.vmem [shape: f32[1,3], index: 21, kind: input, shape index: {}]
  %s22 = inlined_call_operand.hbm [shape: f32[2,1,3], index: 22, kind: output, shape index: {}]
  %s23 = sld [smem:[#allocation0]]
  $region121: #{gkeaen_forward.1} parent=0
    _
  %s25 = ssub.s32 1, %s23
  %s26 = scalar_select 0, %s25, %s23
  $region1: #{gkeaen_forward.1} parent=0
    #allocation2 [shape = 'u8[1024]{0}', space=vmem, size = 0x400, scoped, tag = 'output window, operand 0']
    #allocation3 [shape = 's32[2]{0}', space=sflag, size = 0x8, scoped, tag = 'scoped memory for gkeaen_forward.1']
    %27 = vsyncpa [#allocation3], 0
    %s28 = scalar_lea.sflag [#allocation3], 1
    %29 = vsyncpa %s28, 0
    loop: start=0, step=1, limit=4
    $region2: #{gkeaen_forward.1} parent=1 // loop_pre_header
      _
    $region3: #{gkeaen_forward.1} parent=1 // loop_header
      %s31 = sphi 0, %s35
      %p32 = scmp.ge.s32.totalorder %s31, 4
      %s41 = sphi 0, %s43
      %s44 = sphi 0, %s41
      %s45 = sphi 0, %s44
      %s61 = sphi 0, %s45
      %s67 = sphi 0, %s69
      %s70 = sphi 0, %s67
      %s71 = sphi 0, %s70
      %s87 = sphi 0, %s71
      %s93 = sphi 0, %s95
      %s96 = sphi 0, %s93
      %s97 = sphi 0, %s96
      %s113 = sphi 0, %s97
      %s119 = sphi 0, %s121
      %s122 = sphi 0, %s119
      %s123 = sphi 0, %s122
      %s139 = sphi 0, %s123
      %s143 = sphi 0, %s143
      %s145 = sphi 0, %s143
      %s146 = sphi 0, %s145
      %s160 = sphi 0, %s146
      %s164 = sphi 0, %s164
      %s166 = sphi 0, %s164
      %s167 = sphi 0, %s166
      %s181 = sphi 0, %s167
      %s185 = sphi 0, %s185
      %s187 = sphi 0, %s185
      %s188 = sphi 0, %s187
      %s202 = sphi 0, %s188
      %s206 = sphi 0, %s206
      %s208 = sphi 0, %s206
      %s209 = sphi 0, %s208
      %s223 = sphi 0, %s209
      %s227 = sphi 0, %s227
      %s229 = sphi 0, %s227
      %s230 = sphi 0, %s229
      %s244 = sphi 0, %s230
      %s248 = sphi 0, %s248
      %s250 = sphi 0, %s248
      %s251 = sphi 0, %s250
      %s265 = sphi 0, %s251
      %s269 = sphi 0, %s269
      %s271 = sphi 0, %s269
      %s272 = sphi 0, %s271
      %s286 = sphi 0, %s272
      %s290 = sphi 0, %s290
      %s292 = sphi 0, %s290
      %s293 = sphi 0, %s292
      %s307 = sphi 0, %s293
      %s311 = sphi 0, %s311
      %s313 = sphi 0, %s311
      %s314 = sphi 0, %s313
      %s328 = sphi 0, %s314
      %s332 = sphi 0, %s332
      %s334 = sphi 0, %s332
      %s335 = sphi 0, %s334
      %s349 = sphi 0, %s335
      %s353 = sphi 0, %s353
      %s355 = sphi 0, %s353
      %s356 = sphi 0, %s355
      %s370 = sphi 0, %s356
      %s374 = sphi 0, %s374
      %s376 = sphi 0, %s374
      %s377 = sphi 0, %s376
      %s391 = sphi 0, %s377
      %s395 = sphi 0, %s395
      %s397 = sphi 0, %s395
      %s398 = sphi 0, %s397
      %s412 = sphi 0, %s398
      %s416 = sphi 0, %s416
      %s418 = sphi 0, %s416
      %s419 = sphi 0, %s418
      %s433 = sphi 0, %s419
      %s437 = sphi 0, %s437
      %s439 = sphi 0, %s437
      %s440 = sphi 0, %s439
      %s454 = sphi 0, %s440
      %s458 = sphi 0, %s458
      %s460 = sphi 0, %s458
      %s461 = sphi 0, %s460
      %s475 = sphi 0, %s461
      %s479 = sphi 0, %s479
      %s481 = sphi 0, %s479
      %s482 = sphi 0, %s481
      %s496 = sphi 0, %s482
      %s500 = sphi 0, %s500
      %s502 = sphi 0, %s500
      %s503 = sphi 0, %s502
      %s517 = sphi 0, %s503
      %s523 = sphi 0, %s525
      %s526 = sphi 0, %s523
      %s527 = sphi 0, %s526
      %s543 = sphi 0, %s527
    $region4: #{gkeaen_forward.1} parent=1 // loop_header_branch
      %34 = sbr.rel (%p32) target = $region8
    $region5: #{gkeaen_forward.1} parent=1 // loop_body
      %s36 = ssub.s32 %s31, 1
      %s37 = ssub.s32 %s31, 2
      %s38 = sadd.s32 %s31, 1
      %s39 = ssub.s32 %s31, %s38
      %p40 = scmp.eq.s32.totalorder %s39, 0
      %s42 = sadd.s32 %s41, 1
      %s43 = scalar_select %p40, %s41, %s42
      %p46 = pneg %p40
      %p47 = scmp.eq.s32.totalorder %s31, 1
      %p48 = por %p46, %p47
      %p49 = scmp.ne.s32.totalorder %s41, %s44
      %p50 = scmp.eq.s32.totalorder %s31, 0
      %p51 = por %p49, %p50
      %p52 = scmp.ne.s32.totalorder %s41, %s44
      %p53 = scmp.eq.s32.totalorder %s36, 1
      %p54 = por %p52, %p53
      %p55 = scmp.ne.s32.totalorder %s44, %s45
      %p56 = scmp.eq.s32.totalorder %s36, 0
      %p57 = por %p55, %p56
      %p58 = scmp.ne.s32.totalorder %s44, %s45
      %p59 = scmp.eq.s32.totalorder %s37, 1
      %p60 = por %p58, %p59
      %p62 = scmp.ne.s32.totalorder %s45, %s61
      %p63 = scmp.eq.s32.totalorder %s37, 0
      %p64 = por %p62, %p63
      %s65 = ssub.s32 %s31, %s38
      %p66 = scmp.eq.s32.totalorder %s65, 0
      %s68 = sadd.s32 %s67, 1
      %s69 = scalar_select %p66, %s67, %s68
      %p72 = pneg %p66
      %p73 = scmp.eq.s32.totalorder %s31, 1
      %p74 = por %p72, %p73
      %p75 = scmp.ne.s32.totalorder %s67, %s70
      %p76 = scmp.eq.s32.totalorder %s31, 0
      %p77 = por %p75, %p76
      %p78 = scmp.ne.s32.totalorder %s67, %s70
      %p79 = scmp.eq.s32.totalorder %s36, 1
      %p80 = por %p78, %p79
      %p81 = scmp.ne.s32.totalorder %s70, %s71
      %p82 = scmp.eq.s32.totalorder %s36, 0
      %p83 = por %p81, %p82
      %p84 = scmp.ne.s32.totalorder %s70, %s71
      %p85 = scmp.eq.s32.totalorder %s37, 1
      %p86 = por %p84, %p85
      %p88 = scmp.ne.s32.totalorder %s71, %s87
      %p89 = scmp.eq.s32.totalorder %s37, 0
      %p90 = por %p88, %p89
      %s91 = ssub.s32 %s31, %s38
      %p92 = scmp.eq.s32.totalorder %s91, 0
      %s94 = sadd.s32 %s93, 1
      %s95 = scalar_select %p92, %s93, %s94
      %p98 = pneg %p92
      %p99 = scmp.eq.s32.totalorder %s31, 1
      %p100 = por %p98, %p99
      %p101 = scmp.ne.s32.totalorder %s93, %s96
      %p102 = scmp.eq.s32.totalorder %s31, 0
      %p103 = por %p101, %p102
      %p104 = scmp.ne.s32.totalorder %s93, %s96
      %p105 = scmp.eq.s32.totalorder %s36, 1
      %p106 = por %p104, %p105
      %p107 = scmp.ne.s32.totalorder %s96, %s97
      %p108 = scmp.eq.s32.totalorder %s36, 0
      %p109 = por %p107, %p108
      %p110 = scmp.ne.s32.totalorder %s96, %s97
      %p111 = scmp.eq.s32.totalorder %s37, 1
      %p112 = por %p110, %p111
      %p114 = scmp.ne.s32.totalorder %s97, %s113
      %p115 = scmp.eq.s32.totalorder %s37, 0
      %p116 = por %p114, %p115
      %s117 = ssub.s32 %s31, %s38
      %p118 = scmp.eq.s32.totalorder %s117, 0
      %s120 = sadd.s32 %s119, 1
      %s121 = scalar_select %p118, %s119, %s120
      %p124 = pneg %p118
      %p125 = scmp.eq.s32.totalorder %s31, 1
      %p126 = por %p124, %p125
      %p127 = scmp.ne.s32.totalorder %s119, %s122
      %p128 = scmp.eq.s32.totalorder %s31, 0
      %p129 = por %p127, %p128
      %p130 = scmp.ne.s32.totalorder %s119, %s122
      %p131 = scmp.eq.s32.totalorder %s36, 1
      %p132 = por %p130, %p131
      %p133 = scmp.ne.s32.totalorder %s122, %s123
      %p134 = scmp.eq.s32.totalorder %s36, 0
      %p135 = por %p133, %p134
      %p136 = scmp.ne.s32.totalorder %s122, %s123
      %p137 = scmp.eq.s32.totalorder %s37, 1
      %p138 = por %p136, %p137
      %p140 = scmp.ne.s32.totalorder %s123, %s139
      %p141 = scmp.eq.s32.totalorder %s37, 0
      %p142 = por %p140, %p141
      %s144 = sadd.s32 %s143, 1
      %p147 = scmp.eq.s32.totalorder %s31, 1
      %p148 = scmp.ne.s32.totalorder %s143, %s145
      %p149 = scmp.eq.s32.totalorder %s31, 0
      %p150 = por %p148, %p149
      %p151 = scmp.ne.s32.totalorder %s143, %s145
      %p152 = scmp.eq.s32.totalorder %s36, 1
      %p153 = por %p151, %p152
      %p154 = scmp.ne.s32.totalorder %s145, %s146
      %p155 = scmp.eq.s32.totalorder %s36, 0
      %p156 = por %p154, %p155
      %p157 = scmp.ne.s32.totalorder %s145, %s146
      %p158 = scmp.eq.s32.totalorder %s37, 1
      %p159 = por %p157, %p158
      %p161 = scmp.ne.s32.totalorder %s146, %s160
      %p162 = scmp.eq.s32.totalorder %s37, 0
      %p163 = por %p161, %p162
      %s165 = sadd.s32 %s164, 1
      %p168 = scmp.eq.s32.totalorder %s31, 1
      %p169 = scmp.ne.s32.totalorder %s164, %s166
      %p170 = scmp.eq.s32.totalorder %s31, 0
      %p171 = por %p169, %p170
      %p172 = scmp.ne.s32.totalorder %s164, %s166
      %p173 = scmp.eq.s32.totalorder %s36, 1
      %p174 = por %p172, %p173
      %p175 = scmp.ne.s32.totalorder %s166, %s167
      %p176 = scmp.eq.s32.totalorder %s36, 0
      %p177 = por %p175, %p176
      %p178 = scmp.ne.s32.totalorder %s166, %s167
      %p179 = scmp.eq.s32.totalorder %s37, 1
      %p180 = por %p178, %p179
      %p182 = scmp.ne.s32.totalorder %s167, %s181
      %p183 = scmp.eq.s32.totalorder %s37, 0
      %p184 = por %p182, %p183
      %s186 = sadd.s32 %s185, 1
      %p189 = scmp.eq.s32.totalorder %s31, 1
      %p190 = scmp.ne.s32.totalorder %s185, %s187
      %p191 = scmp.eq.s32.totalorder %s31, 0
      %p192 = por %p190, %p191
      %p193 = scmp.ne.s32.totalorder %s185, %s187
      %p194 = scmp.eq.s32.totalorder %s36, 1
      %p195 = por %p193, %p194
      %p196 = scmp.ne.s32.totalorder %s187, %s188
      %p197 = scmp.eq.s32.totalorder %s36, 0
      %p198 = por %p196, %p197
      %p199 = scmp.ne.s32.totalorder %s187, %s188
      %p200 = scmp.eq.s32.totalorder %s37, 1
      %p201 = por %p199, %p200
      %p203 = scmp.ne.s32.totalorder %s188, %s202
      %p204 = scmp.eq.s32.totalorder %s37, 0
      %p205 = por %p203, %p204
      %s207 = sadd.s32 %s206, 1
      %p210 = scmp.eq.s32.totalorder %s31, 1
      %p211 = scmp.ne.s32.totalorder %s206, %s208
      %p212 = scmp.eq.s32.totalorder %s31, 0
      %p213 = por %p211, %p212
      %p214 = scmp.ne.s32.totalorder %s206, %s208
      %p215 = scmp.eq.s32.totalorder %s36, 1
      %p216 = por %p214, %p215
      %p217 = scmp.ne.s32.totalorder %s208, %s209
      %p218 = scmp.eq.s32.totalorder %s36, 0
      %p219 = por %p217, %p218
      %p220 = scmp.ne.s32.totalorder %s208, %s209
      %p221 = scmp.eq.s32.totalorder %s37, 1
      %p222 = por %p220, %p221
      %p224 = scmp.ne.s32.totalorder %s209, %s223
      %p225 = scmp.eq.s32.totalorder %s37, 0
      %p226 = por %p224, %p225
      %s228 = sadd.s32 %s227, 1
      %p231 = scmp.eq.s32.totalorder %s31, 1
      %p232 = scmp.ne.s32.totalorder %s227, %s229
      %p233 = scmp.eq.s32.totalorder %s31, 0
      %p234 = por %p232, %p233
      %p235 = scmp.ne.s32.totalorder %s227, %s229
      %p236 = scmp.eq.s32.totalorder %s36, 1
      %p237 = por %p235, %p236
      %p238 = scmp.ne.s32.totalorder %s229, %s230
      %p239 = scmp.eq.s32.totalorder %s36, 0
      %p240 = por %p238, %p239
      %p241 = scmp.ne.s32.totalorder %s229, %s230
      %p242 = scmp.eq.s32.totalorder %s37, 1
      %p243 = por %p241, %p242
      %p245 = scmp.ne.s32.totalorder %s230, %s244
      %p246 = scmp.eq.s32.totalorder %s37, 0
      %p247 = por %p245, %p246
      %s249 = sadd.s32 %s248, 1
      %p252 = scmp.eq.s32.totalorder %s31, 1
      %p253 = scmp.ne.s32.totalorder %s248, %s250
      %p254 = scmp.eq.s32.totalorder %s31, 0
      %p255 = por %p253, %p254
      %p256 = scmp.ne.s32.totalorder %s248, %s250
      %p257 = scmp.eq.s32.totalorder %s36, 1
      %p258 = por %p256, %p257
      %p259 = scmp.ne.s32.totalorder %s250, %s251
      %p260 = scmp.eq.s32.totalorder %s36, 0
      %p261 = por %p259, %p260
      %p262 = scmp.ne.s32.totalorder %s250, %s251
      %p263 = scmp.eq.s32.totalorder %s37, 1
      %p264 = por %p262, %p263
      %p266 = scmp.ne.s32.totalorder %s251, %s265
      %p267 = scmp.eq.s32.totalorder %s37, 0
      %p268 = por %p266, %p267
      %s270 = sadd.s32 %s269, 1
      %p273 = scmp.eq.s32.totalorder %s31, 1
      %p274 = scmp.ne.s32.totalorder %s269, %s271
      %p275 = scmp.eq.s32.totalorder %s31, 0
      %p276 = por %p274, %p275
      %p277 = scmp.ne.s32.totalorder %s269, %s271
      %p278 = scmp.eq.s32.totalorder %s36, 1
      %p279 = por %p277, %p278
      %p280 = scmp.ne.s32.totalorder %s271, %s272
      %p281 = scmp.eq.s32.totalorder %s36, 0
      %p282 = por %p280, %p281
      %p283 = scmp.ne.s32.totalorder %s271, %s272
      %p284 = scmp.eq.s32.totalorder %s37, 1
      %p285 = por %p283, %p284
      %p287 = scmp.ne.s32.totalorder %s272, %s286
      %p288 = scmp.eq.s32.totalorder %s37, 0
      %p289 = por %p287, %p288
      %s291 = sadd.s32 %s290, 1
      %p294 = scmp.eq.s32.totalorder %s31, 1
      %p295 = scmp.ne.s32.totalorder %s290, %s292
      %p296 = scmp.eq.s32.totalorder %s31, 0
      %p297 = por %p295, %p296
      %p298 = scmp.ne.s32.totalorder %s290, %s292
      %p299 = scmp.eq.s32.totalorder %s36, 1
      %p300 = por %p298, %p299
      %p301 = scmp.ne.s32.totalorder %s292, %s293
      %p302 = scmp.eq.s32.totalorder %s36, 0
      %p303 = por %p301, %p302
      %p304 = scmp.ne.s32.totalorder %s292, %s293
      %p305 = scmp.eq.s32.totalorder %s37, 1
      %p306 = por %p304, %p305
      %p308 = scmp.ne.s32.totalorder %s293, %s307
      %p309 = scmp.eq.s32.totalorder %s37, 0
      %p310 = por %p308, %p309
      %s312 = sadd.s32 %s311, 1
      %p315 = scmp.eq.s32.totalorder %s31, 1
      %p316 = scmp.ne.s32.totalorder %s311, %s313
      %p317 = scmp.eq.s32.totalorder %s31, 0
      %p318 = por %p316, %p317
      %p319 = scmp.ne.s32.totalorder %s311, %s313
      %p320 = scmp.eq.s32.totalorder %s36, 1
      %p321 = por %p319, %p320
      %p322 = scmp.ne.s32.totalorder %s313, %s314
      %p323 = scmp.eq.s32.totalorder %s36, 0
      %p324 = por %p322, %p323
      %p325 = scmp.ne.s32.totalorder %s313, %s314
      %p326 = scmp.eq.s32.totalorder %s37, 1
      %p327 = por %p325, %p326
      %p329 = scmp.ne.s32.totalorder %s314, %s328
      %p330 = scmp.eq.s32.totalorder %s37, 0
      %p331 = por %p329, %p330
      %s333 = sadd.s32 %s332, 1
      %p336 = scmp.eq.s32.totalorder %s31, 1
      %p337 = scmp.ne.s32.totalorder %s332, %s334
      %p338 = scmp.eq.s32.totalorder %s31, 0
      %p339 = por %p337, %p338
      %p340 = scmp.ne.s32.totalorder %s332, %s334
      %p341 = scmp.eq.s32.totalorder %s36, 1
      %p342 = por %p340, %p341
      %p343 = scmp.ne.s32.totalorder %s334, %s335
      %p344 = scmp.eq.s32.totalorder %s36, 0
      %p345 = por %p343, %p344
      %p346 = scmp.ne.s32.totalorder %s334, %s335
      %p347 = scmp.eq.s32.totalorder %s37, 1
      %p348 = por %p346, %p347
      %p350 = scmp.ne.s32.totalorder %s335, %s349
      %p351 = scmp.eq.s32.totalorder %s37, 0
      %p352 = por %p350, %p351
      %s354 = sadd.s32 %s353, 1
      %p357 = scmp.eq.s32.totalorder %s31, 1
      %p358 = scmp.ne.s32.totalorder %s353, %s355
      %p359 = scmp.eq.s32.totalorder %s31, 0
      %p360 = por %p358, %p359
      %p361 = scmp.ne.s32.totalorder %s353, %s355
      %p362 = scmp.eq.s32.totalorder %s36, 1
      %p363 = por %p361, %p362
      %p364 = scmp.ne.s32.totalorder %s355, %s356
      %p365 = scmp.eq.s32.totalorder %s36, 0
      %p366 = por %p364, %p365
      %p367 = scmp.ne.s32.totalorder %s355, %s356
      %p368 = scmp.eq.s32.totalorder %s37, 1
      %p369 = por %p367, %p368
      %p371 = scmp.ne.s32.totalorder %s356, %s370
      %p372 = scmp.eq.s32.totalorder %s37, 0
      %p373 = por %p371, %p372
      %s375 = sadd.s32 %s374, 1
      %p378 = scmp.eq.s32.totalorder %s31, 1
      %p379 = scmp.ne.s32.totalorder %s374, %s376
      %p380 = scmp.eq.s32.totalorder %s31, 0
      %p381 = por %p379, %p380
      %p382 = scmp.ne.s32.totalorder %s374, %s376
      %p383 = scmp.eq.s32.totalorder %s36, 1
      %p384 = por %p382, %p383
      %p385 = scmp.ne.s32.totalorder %s376, %s377
      %p386 = scmp.eq.s32.totalorder %s36, 0
      %p387 = por %p385, %p386
      %p388 = scmp.ne.s32.totalorder %s376, %s377
      %p389 = scmp.eq.s32.totalorder %s37, 1
      %p390 = por %p388, %p389
      %p392 = scmp.ne.s32.totalorder %s377, %s391
      %p393 = scmp.eq.s32.totalorder %s37, 0
      %p394 = por %p392, %p393
      %s396 = sadd.s32 %s395, 1
      %p399 = scmp.eq.s32.totalorder %s31, 1
      %p400 = scmp.ne.s32.totalorder %s395, %s397
      %p401 = scmp.eq.s32.totalorder %s31, 0
      %p402 = por %p400, %p401
      %p403 = scmp.ne.s32.totalorder %s395, %s397
      %p404 = scmp.eq.s32.totalorder %s36, 1
      %p405 = por %p403, %p404
      %p406 = scmp.ne.s32.totalorder %s397, %s398
      %p407 = scmp.eq.s32.totalorder %s36, 0
      %p408 = por %p406, %p407
      %p409 = scmp.ne.s32.totalorder %s397, %s398
      %p410 = scmp.eq.s32.totalorder %s37, 1
      %p411 = por %p409, %p410
      %p413 = scmp.ne.s32.totalorder %s398, %s412
      %p414 = scmp.eq.s32.totalorder %s37, 0
      %p415 = por %p413, %p414
      %s417 = sadd.s32 %s416, 1
      %p420 = scmp.eq.s32.totalorder %s31, 1
      %p421 = scmp.ne.s32.totalorder %s416, %s418
      %p422 = scmp.eq.s32.totalorder %s31, 0
      %p423 = por %p421, %p422
      %p424 = scmp.ne.s32.totalorder %s416, %s418
      %p425 = scmp.eq.s32.totalorder %s36, 1
      %p426 = por %p424, %p425
      %p427 = scmp.ne.s32.totalorder %s418, %s419
      %p428 = scmp.eq.s32.totalorder %s36, 0
      %p429 = por %p427, %p428
      %p430 = scmp.ne.s32.totalorder %s418, %s419
      %p431 = scmp.eq.s32.totalorder %s37, 1
      %p432 = por %p430, %p431
      %p434 = scmp.ne.s32.totalorder %s419, %s433
      %p435 = scmp.eq.s32.totalorder %s37, 0
      %p436 = por %p434, %p435
      %s438 = sadd.s32 %s437, 1
      %p441 = scmp.eq.s32.totalorder %s31, 1
      %p442 = scmp.ne.s32.totalorder %s437, %s439
      %p443 = scmp.eq.s32.totalorder %s31, 0
      %p444 = por %p442, %p443
      %p445 = scmp.ne.s32.totalorder %s437, %s439
      %p446 = scmp.eq.s32.totalorder %s36, 1
      %p447 = por %p445, %p446
      %p448 = scmp.ne.s32.totalorder %s439, %s440
      %p449 = scmp.eq.s32.totalorder %s36, 0
      %p450 = por %p448, %p449
      %p451 = scmp.ne.s32.totalorder %s439, %s440
      %p452 = scmp.eq.s32.totalorder %s37, 1
      %p453 = por %p451, %p452
      %p455 = scmp.ne.s32.totalorder %s440, %s454
      %p456 = scmp.eq.s32.totalorder %s37, 0
      %p457 = por %p455, %p456
      %s459 = sadd.s32 %s458, 1
      %p462 = scmp.eq.s32.totalorder %s31, 1
      %p463 = scmp.ne.s32.totalorder %s458, %s460
      %p464 = scmp.eq.s32.totalorder %s31, 0
      %p465 = por %p463, %p464
      %p466 = scmp.ne.s32.totalorder %s458, %s460
      %p467 = scmp.eq.s32.totalorder %s36, 1
      %p468 = por %p466, %p467
      %p469 = scmp.ne.s32.totalorder %s460, %s461
      %p470 = scmp.eq.s32.totalorder %s36, 0
      %p471 = por %p469, %p470
      %p472 = scmp.ne.s32.totalorder %s460, %s461
      %p473 = scmp.eq.s32.totalorder %s37, 1
      %p474 = por %p472, %p473
      %p476 = scmp.ne.s32.totalorder %s461, %s475
      %p477 = scmp.eq.s32.totalorder %s37, 0
      %p478 = por %p476, %p477
      %s480 = sadd.s32 %s479, 1
      %p483 = scmp.eq.s32.totalorder %s31, 1
      %p484 = scmp.ne.s32.totalorder %s479, %s481
      %p485 = scmp.eq.s32.totalorder %s31, 0
      %p486 = por %p484, %p485
      %p487 = scmp.ne.s32.totalorder %s479, %s481
      %p488 = scmp.eq.s32.totalorder %s36, 1
      %p489 = por %p487, %p488
      %p490 = scmp.ne.s32.totalorder %s481, %s482
      %p491 = scmp.eq.s32.totalorder %s36, 0
      %p492 = por %p490, %p491
      %p493 = scmp.ne.s32.totalorder %s481, %s482
      %p494 = scmp.eq.s32.totalorder %s37, 1
      %p495 = por %p493, %p494
      %p497 = scmp.ne.s32.totalorder %s482, %s496
      %p498 = scmp.eq.s32.totalorder %s37, 0
      %p499 = por %p497, %p498
      %s501 = sadd.s32 %s500, 1
      %p504 = scmp.eq.s32.totalorder %s31, 1
      %p505 = scmp.ne.s32.totalorder %s500, %s502
      %p506 = scmp.eq.s32.totalorder %s31, 0
      %p507 = por %p505, %p506
      %p508 = scmp.ne.s32.totalorder %s500, %s502
      %p509 = scmp.eq.s32.totalorder %s36, 1
      %p510 = por %p508, %p509
      %p511 = scmp.ne.s32.totalorder %s502, %s503
      %p512 = scmp.eq.s32.totalorder %s36, 0
      %p513 = por %p511, %p512
      %p514 = scmp.ne.s32.totalorder %s502, %s503
      %p515 = scmp.eq.s32.totalorder %s37, 1
      %p516 = por %p514, %p515
      %p518 = scmp.ne.s32.totalorder %s503, %s517
      %p519 = scmp.eq.s32.totalorder %s37, 0
      %p520 = por %p518, %p519
      %s521 = ssub.s32 %s31, %s38
      %p522 = scmp.eq.s32.totalorder %s521, 0
      %s524 = sadd.s32 %s523, 1
      %s525 = scalar_select %p522, %s523, %s524
      %p528 = pneg %p522
      %p529 = scmp.eq.s32.totalorder %s31, 1
      %p530 = por %p528, %p529
      %p531 = scmp.ne.s32.totalorder %s523, %s526
      %p532 = scmp.eq.s32.totalorder %s31, 0
      %p533 = por %p531, %p532
      %p534 = scmp.ne.s32.totalorder %s523, %s526
      %p535 = scmp.eq.s32.totalorder %s36, 1
      %p536 = por %p534, %p535
      %p537 = scmp.ne.s32.totalorder %s526, %s527
      %p538 = scmp.eq.s32.totalorder %s36, 0
      %p539 = por %p537, %p538
      %p540 = scmp.ne.s32.totalorder %s526, %s527
      %p541 = scmp.eq.s32.totalorder %s37, 1
      %p542 = por %p540, %p541
      %p544 = scmp.ne.s32.totalorder %s527, %s543
      %p545 = scmp.eq.s32.totalorder %s37, 0
      %p546 = por %p544, %p545
      %p547 = scmp.le.s32.totalorder 1, %s31
      %p548 = scmp.lt.s32.totalorder %s31, 3
      %p549 = pnand %p547, %p548
      %p550 = pneg %p549
      // Predicated region
      $region9: #{gkeaen_forward.1} parent=5 // pred_check
        _
      $region10: #{gkeaen_forward.1} parent=5 // pred_check_branch
        %552 = sbr.rel (%p549) target = $region12
      $region11: #{gkeaen_forward.1} parent=5 // pred_region
        %s553 = ssub.s32 %s31, 1
        // Predicated region
        $region13: #{gkeaen_forward.1} parent=11 // pred_check
          %p554 = pneg %p156
        $region14: #{gkeaen_forward.1} parent=11 // pred_check_branch
          %556 = sbr.rel (%p554) target = $region16
        $region15: #{gkeaen_forward.1} parent=11 // pred_region
          _
        $region16: #{gkeaen_forward.1} parent=11 // pred_fallthru
          _
        // Predicated region
        $region17: #{gkeaen_forward.1} parent=11 // pred_check
          %p557 = pneg %p177
        $region18: #{gkeaen_forward.1} parent=11 // pred_check_branch
          %559 = sbr.rel (%p557) target = $region20
        $region19: #{gkeaen_forward.1} parent=11 // pred_region
          _
        $region20: #{gkeaen_forward.1} parent=11 // pred_fallthru
          _
        // Predicated region
        $region21: #{gkeaen_forward.1} parent=11 // pred_check
          %p560 = pneg %p198
        $region22: #{gkeaen_forward.1} parent=11 // pred_check_branch
          %562 = sbr.rel (%p560) target = $region24
        $region23: #{gkeaen_forward.1} parent=11 // pred_region
          _
        $region24: #{gkeaen_forward.1} parent=11 // pred_fallthru
          _
        // Predicated region
        $region25: #{gkeaen_forward.1} parent=11 // pred_check
          %p563 = pneg %p219
        $region26: #{gkeaen_forward.1} parent=11 // pred_check_branch
          %565 = sbr.rel (%p563) target = $region28
        $region27: #{gkeaen_forward.1} parent=11 // pred_region
          _
        $region28: #{gkeaen_forward.1} parent=11 // pred_fallthru
          _
        // Predicated region
        $region29: #{gkeaen_forward.1} parent=11 // pred_check
          %p566 = pneg %p240
        $region30: #{gkeaen_forward.1} parent=11 // pred_check_branch
          %568 = sbr.rel (%p566) target = $region32
        $region31: #{gkeaen_forward.1} parent=11 // pred_region
          _
        $region32: #{gkeaen_forward.1} parent=11 // pred_fallthru
          _
        // Predicated region
        $region33: #{gkeaen_forward.1} parent=11 // pred_check
          %p569 = pneg %p261
        $region34: #{gkeaen_forward.1} parent=11 // pred_check_branch
          %571 = sbr.rel (%p569) target = $region36
        $region35: #{gkeaen_forward.1} parent=11 // pred_region
          _
        $region36: #{gkeaen_forward.1} parent=11 // pred_fallthru
          _
        // Predicated region
        $region37: #{gkeaen_forward.1} parent=11 // pred_check
          %p572 = pneg %p282
        $region38: #{gkeaen_forward.1} parent=11 // pred_check_branch
          %574 = sbr.rel (%p572) target = $region40
        $region39: #{gkeaen_forward.1} parent=11 // pred_region
          _
        $region40: #{gkeaen_forward.1} parent=11 // pred_fallthru
          _
        // Predicated region
        $region41: #{gkeaen_forward.1} parent=11 // pred_check
          %p575 = pneg %p303
        $region42: #{gkeaen_forward.1} parent=11 // pred_check_branch
          %577 = sbr.rel (%p575) target = $region44
        $region43: #{gkeaen_forward.1} parent=11 // pred_region
          _
        $region44: #{gkeaen_forward.1} parent=11 // pred_fallthru
          _
        // Predicated region
        $region45: #{gkeaen_forward.1} parent=11 // pred_check
          %p578 = pneg %p324
        $region46: #{gkeaen_forward.1} parent=11 // pred_check_branch
          %580 = sbr.rel (%p578) target = $region48
        $region47: #{gkeaen_forward.1} parent=11 // pred_region
          _
        $region48: #{gkeaen_forward.1} parent=11 // pred_fallthru
          _
        // Predicated region
        $region49: #{gkeaen_forward.1} parent=11 // pred_check
          %p581 = pneg %p345
        $region50: #{gkeaen_forward.1} parent=11 // pred_check_branch
          %583 = sbr.rel (%p581) target = $region52
        $region51: #{gkeaen_forward.1} parent=11 // pred_region
          _
        $region52: #{gkeaen_forward.1} parent=11 // pred_fallthru
          _
        // Predicated region
        $region53: #{gkeaen_forward.1} parent=11 // pred_check
          %p584 = pneg %p366
        $region54: #{gkeaen_forward.1} parent=11 // pred_check_branch
          %586 = sbr.rel (%p584) target = $region56
        $region55: #{gkeaen_forward.1} parent=11 // pred_region
          _
        $region56: #{gkeaen_forward.1} parent=11 // pred_fallthru
          _
        // Predicated region
        $region57: #{gkeaen_forward.1} parent=11 // pred_check
          %p587 = pneg %p387
        $region58: #{gkeaen_forward.1} parent=11 // pred_check_branch
          %589 = sbr.rel (%p587) target = $region60
        $region59: #{gkeaen_forward.1} parent=11 // pred_region
          _
        $region60: #{gkeaen_forward.1} parent=11 // pred_fallthru
          _
        // Predicated region
        $region61: #{gkeaen_forward.1} parent=11 // pred_check
          %p590 = pneg %p408
        $region62: #{gkeaen_forward.1} parent=11 // pred_check_branch
          %592 = sbr.rel (%p590) target = $region64
        $region63: #{gkeaen_forward.1} parent=11 // pred_region
          _
        $region64: #{gkeaen_forward.1} parent=11 // pred_fallthru
          _
        // Predicated region
        $region65: #{gkeaen_forward.1} parent=11 // pred_check
          %p593 = pneg %p429
        $region66: #{gkeaen_forward.1} parent=11 // pred_check_branch
          %595 = sbr.rel (%p593) target = $region68
        $region67: #{gkeaen_forward.1} parent=11 // pred_region
          _
        $region68: #{gkeaen_forward.1} parent=11 // pred_fallthru
          _
        // Predicated region
        $region69: #{gkeaen_forward.1} parent=11 // pred_check
          %p596 = pneg %p450
        $region70: #{gkeaen_forward.1} parent=11 // pred_check_branch
          %598 = sbr.rel (%p596) target = $region72
        $region71: #{gkeaen_forward.1} parent=11 // pred_region
          _
        $region72: #{gkeaen_forward.1} parent=11 // pred_fallthru
          _
        // Predicated region
        $region73: #{gkeaen_forward.1} parent=11 // pred_check
          %p599 = pneg %p471
        $region74: #{gkeaen_forward.1} parent=11 // pred_check_branch
          %601 = sbr.rel (%p599) target = $region76
        $region75: #{gkeaen_forward.1} parent=11 // pred_region
          _
        $region76: #{gkeaen_forward.1} parent=11 // pred_fallthru
          _
        // Predicated region
        $region77: #{gkeaen_forward.1} parent=11 // pred_check
          %p602 = pneg %p492
        $region78: #{gkeaen_forward.1} parent=11 // pred_check_branch
          %604 = sbr.rel (%p602) target = $region80
        $region79: #{gkeaen_forward.1} parent=11 // pred_region
          _
        $region80: #{gkeaen_forward.1} parent=11 // pred_fallthru
          _
        // Predicated region
        $region81: #{gkeaen_forward.1} parent=11 // pred_check
          %p605 = pneg %p513
        $region82: #{gkeaen_forward.1} parent=11 // pred_check_branch
          %607 = sbr.rel (%p605) target = $region84
        $region83: #{gkeaen_forward.1} parent=11 // pred_region
          _
        $region84: #{gkeaen_forward.1} parent=11 // pred_fallthru
          _
      $region12: #{gkeaen_forward.1} parent=5 // pred_fallthru
        _
      %p608 = scmp.lt.s32.totalorder %s31, 2
      // Predicated region
      $region85: #{gkeaen_forward.1} parent=5 // pred_check
        %p609 = pneg %p608
      $region86: #{gkeaen_forward.1} parent=5 // pred_check_branch
        %611 = sbr.rel (%p609) target = $region88
      $region87: #{gkeaen_forward.1} parent=5 // pred_region
        // Predicated region
        $region89: #{gkeaen_forward.1} parent=87 // pred_check
          %p612 = pneg %p51
        $region90: #{gkeaen_forward.1} parent=87 // pred_check_branch
          %614 = sbr.rel (%p612) target = $region92
        $region91: #{gkeaen_forward.1} parent=87 // pred_region
          %p615 = scmp.lt.s32.totalorder %s31, 1
          %s616 = scalar_select %p615, %s31, 1
          %s617 = smul.addr %s616, 8
          %s618 = scalar_lea.vmem %s0, %s617
        $region92: #{gkeaen_forward.1} parent=87 // pred_fallthru
          _
        // Predicated region
        $region93: #{gkeaen_forward.1} parent=87 // pred_check
          %p619 = pneg %p77
        $region94: #{gkeaen_forward.1} parent=87 // pred_check_branch
          %621 = sbr.rel (%p619) target = $region96
        $region95: #{gkeaen_forward.1} parent=87 // pred_region
          %p622 = scmp.lt.s32.totalorder %s31, 1
          %s623 = scalar_select %p622, %s31, 1
          %s624 = smul.addr %s623, 4
          %s625 = scalar_lea.vmem %s1, %s624
        $region96: #{gkeaen_forward.1} parent=87 // pred_fallthru
          _
        // Predicated region
        $region97: #{gkeaen_forward.1} parent=87 // pred_check
          %p626 = pneg %p103
        $region98: #{gkeaen_forward.1} parent=87 // pred_check_branch
          %628 = sbr.rel (%p626) target = $region100
        $region99: #{gkeaen_forward.1} parent=87 // pred_region
          %p629 = scmp.lt.s32.totalorder %s31, 1
          %s630 = scalar_select %p629, %s31, 1
          %s631 = smul.addr %s630, 8
          %s632 = scalar_lea.vmem %s2, %s631
        $region100: #{gkeaen_forward.1} parent=87 // pred_fallthru
          _
        // Predicated region
        $region101: #{gkeaen_forward.1} parent=87 // pred_check
          %p633 = pneg %p129
        $region102: #{gkeaen_forward.1} parent=87 // pred_check_branch
          %635 = sbr.rel (%p633) target = $region104
        $region103: #{gkeaen_forward.1} parent=87 // pred_region
          %p636 = scmp.lt.s32.totalorder %s31, 1
          %s637 = scalar_select %p636, %s31, 1
          %s638 = scalar_lea.vmem %s3, %s637
        $region104: #{gkeaen_forward.1} parent=87 // pred_fallthru
          _
      $region88: #{gkeaen_forward.1} parent=5 // pred_fallthru
        _
      %p639 = scmp.le.s32.totalorder 1, %s31
      %p640 = scmp.lt.s32.totalorder %s31, 3
      %p641 = pnand %p639, %p640
      %p642 = pneg %p641
      // Predicated region
      $region105: #{gkeaen_forward.1} parent=5 // pred_check
        _
      $region106: #{gkeaen_forward.1} parent=5 // pred_check_branch
        %644 = sbr.rel (%p641) target = $region108
      $region107: #{gkeaen_forward.1} parent=5 // pred_region
        %s645 = ssub.s32 %s31, 1
        %p646 = scmp.lt.s32.totalorder %s36, 1
        %s647 = scalar_select %p646, %s36, 1
        %s648 = smul.addr %s647, 8
        %s649 = scalar_lea.vmem %s0, %s648
        %p650 = pneg %p57
        %p651 = pneg %p54
        %p652 = scmp.lt.s32.totalorder %s36, 1
        %s653 = scalar_select %p652, %s36, 1
        %s654 = smul.addr %s653, 4
        %s655 = scalar_lea.vmem %s1, %s654
        %p656 = pneg %p83
        %p657 = pneg %p80
        %p658 = scmp.lt.s32.totalorder %s36, 1
        %s659 = scalar_select %p658, %s36, 1
        %s660 = smul.addr %s659, 8
        %s661 = scalar_lea.vmem %s2, %s660
        %p662 = pneg %p109
        %p663 = pneg %p106
        %p664 = scmp.lt.s32.totalorder %s36, 1
        %s665 = scalar_select %p664, %s36, 1
        %s666 = scalar_lea.vmem %s3, %s665
        %p667 = pneg %p135
        %p668 = pneg %p132
        %p669 = pneg %p156
        %p670 = pneg %p153
        %p671 = pneg %p177
        %p672 = pneg %p174
        %p673 = pneg %p198
        %p674 = pneg %p195
        %p675 = pneg %p219
        %p676 = pneg %p216
        %p677 = pneg %p240
        %p678 = pneg %p237
        %p679 = pneg %p261
        %p680 = pneg %p258
        %p681 = pneg %p282
        %p682 = pneg %p279
        %p683 = pneg %p303
        %p684 = pneg %p300
        %p685 = pneg %p324
        %p686 = pneg %p321
        %p687 = pneg %p345
        %p688 = pneg %p342
        %p689 = pneg %p366
        %p690 = pneg %p363
        %p691 = pneg %p387
        %p692 = pneg %p384
        %p693 = pneg %p408
        %p694 = pneg %p405
        %p695 = pneg %p429
        %p696 = pneg %p426
        %p697 = pneg %p450
        %p698 = pneg %p447
        %p699 = pneg %p471
        %p700 = pneg %p468
        %p701 = pneg %p492
        %p702 = pneg %p489
        %p703 = pneg %p513
        %p704 = pneg %p510
        %p705 = pneg %p539
        %p706 = pneg %p536
        %s707 = sand.u32 %s526, 1
        %s708 = scalar_lea.sflag [#allocation3], %s707
        %s709 = sand.u32 %s526, 1
        %s710 = scalar_lea.vmem [#allocation2], %s709
        %p711 = scmp.lt.s32.totalorder %s36, 1
        %s712 = scalar_select %p711, %s36, 1
        %s713 = smul.addr %s712, 8
        %s714 = scalar_lea.vmem %s0, %s713
        %p715 = scmp.lt.s32.totalorder %s36, 1
        %s716 = scalar_select %p715, %s36, 1
        %s717 = smul.addr %s716, 4
        %s718 = scalar_lea.vmem %s1, %s717
        %p719 = scmp.lt.s32.totalorder %s36, 1
        %s720 = scalar_select %p719, %s36, 1
        %s721 = smul.addr %s720, 8
        %s722 = scalar_lea.vmem %s2, %s721
        %p723 = scmp.lt.s32.totalorder %s36, 1
        %s724 = scalar_select %p723, %s36, 1
        %s725 = scalar_lea.vmem %s3, %s724
        %v726 = vld [vmem:[%s714] sm:$0xff]
        %v727 = vld [vmem:[%s718] sm:$0xf]
        %v728 = vld [vmem:[%s722] sm:$0x3f]
        %v729 = vld [vmem:[%s725] sm:$0x1]
        %v730 = vld [vmem:[%s4] sm:$0xff]
        %v731 = vld [vmem:[%s4 + $0x8] sm:$0xff]
        %v732 = vld [vmem:[%s4 + $0x10] sm:$0xff]
        %v733 = vld [vmem:[%s4 + $0x18] sm:$0xff]
        %v734 = vld [vmem:[%s4 + $0x20] sm:$0xff]
        %v735 = vld [vmem:[%s4 + $0x28] sm:$0xff]
        %v736 = vld [vmem:[%s4 + $0x30] sm:$0xff]
        %v737 = vld [vmem:[%s4 + $0x38] sm:$0xff]
        %v738 = vld [vmem:[%s5] sm:$0xff]
        %v739 = vld [vmem:[%s5 + $0x8] sm:$0xff]
        %v740 = vld [vmem:[%s5 + $0x10] sm:$0xff]
        %v741 = vld [vmem:[%s5 + $0x18] sm:$0xff]
        %v742 = vld [vmem:[%s5 + $0x20] sm:$0xff]
        %v743 = vld [vmem:[%s5 + $0x28] sm:$0xff]
        %v744 = vld [vmem:[%s5 + $0x30] sm:$0xff]
        %v745 = vld [vmem:[%s5 + $0x38] sm:$0xff]
        %v746 = vld [vmem:[%s6] sm:$0xff]
        %v747 = vld [vmem:[%s7] sm:$0xff]
        %v748 = vld [vmem:[%s7 + $0x8] sm:$0xff]
        %v749 = vld [vmem:[%s7 + $0x10] sm:$0xff]
        %v750 = vld [vmem:[%s7 + $0x18] sm:$0xff]
        %v751 = vld [vmem:[%s7 + $0x20] sm:$0xff]
        %v752 = vld [vmem:[%s7 + $0x28] sm:$0xff]
        %v753 = vld [vmem:[%s7 + $0x30] sm:$0xff]
        %v754 = vld [vmem:[%s7 + $0x38] sm:$0xff]
        %v755 = vld [vmem:[%s8] sm:$0xff]
        %v756 = vld [vmem:[%s9] sm:$0xff]
        %v757 = vld [vmem:[%s9 + $0x8] sm:$0xff]
        %v758 = vld [vmem:[%s9 + $0x10] sm:$0xff]
        %v759 = vld [vmem:[%s9 + $0x18] sm:$0xff]
        %v760 = vld [vmem:[%s10] sm:$0x1]
        %v762 = vperm.slane %v760, 0
        %vm764 = vcmask 261120
        %v766 = vsel %vm764, %v726, 0
        %768 = vmatpush.msra.mxu0 0.0
        %769 = vmatpush.msra.mxu0 0.0
        %770 = vmatpush.msra.mxu0 0.0
        %771 = vmatpush.msra.mxu0 0.0
        %772 = vmatpush.msra.mxu0 0.0
        %773 = vmatpush.msra.mxu0 0.0
        %774 = vmatpush.msra.mxu0 0.0
        %775 = vmatpush.msra.mxu0 0.0
        %776 = vmatpush.msra.mxu0 0.0
        %777 = vmatpush.msra.mxu0 0.0
        %778 = vmatpush.msra.mxu0 0.0
        %779 = vmatpush.msra.mxu0 0.0
        %780 = vmatpush.msra.mxu0 %v759
        %781 = vmatpush.msra.mxu0 %v758
        %782 = vmatpush.msra.mxu0 %v757
        %783 = vmatpush.msra.mxu0 %v756
        %784 = vmatmul.f32.gmra.mxu0 %v766
        %v785 = vpop.f32.mrf.mxu0
        %v786 = vadd.f32 %v762, %v785
        %787 = vdwg.mxu0
        %v788 = vld [vmem:[%s11] sm:$0xff]
        %v789 = vld [vmem:[%s11 + $0x8] sm:$0xff]
        %v790 = vld [vmem:[%s11 + $0x10] sm:$0xff]
        %v791 = vld [vmem:[%s11 + $0x18] sm:$0xff]
        %v793 = vsel %vm764, %v786, 0
        %795 = vmatpush.msra.mxu0 0.0
        %796 = vmatpush.msra.mxu0 0.0
        %797 = vmatpush.msra.mxu0 0.0
        %798 = vmatpush.msra.mxu0 0.0
        %799 = vmatpush.msra.mxu0 0.0
        %800 = vmatpush.msra.mxu0 0.0
        %801 = vmatpush.msra.mxu0 0.0
        %802 = vmatpush.msra.mxu0 0.0
        %803 = vmatpush.msra.mxu0 0.0
        %804 = vmatpush.msra.mxu0 0.0
        %805 = vmatpush.msra.mxu0 0.0
        %806 = vmatpush.msra.mxu0 0.0
        %807 = vmatpush.msra.mxu0 %v791
        %808 = vmatpush.msra.mxu0 %v790
        %809 = vmatpush.msra.mxu0 %v789
        %810 = vmatpush.msra.mxu0 %v788
        %811 = vmatmul.f32.gmra.mxu0 %v793
        %v812 = vpop.f32.mrf.mxu0
        %v813 = vadd.f32 0.0, %v812
        %814 = vdwg.mxu0
        %v815 = vmul.f32 %v813, %v746
        %vm816 = vcmask 523264
        %v817 = vsel %vm816, %v815, 0.0
        %v818 = vrot.slane %v817, 4
        %v819 = vadd.f32 %v817, %v818
        %v820 = vrot.slane %v819, 2
        %v821 = vadd.f32 %v819, %v820
        %v822 = vrot.slane %v821, 1
        %v823 = vadd.f32 %v821, %v822
        %v824 = vld [vmem:[%s12] sm:$0xff]
        %v825 = vld [vmem:[%s12 + $0x8] sm:$0xff]
        %v826 = vld [vmem:[%s12 + $0x10] sm:$0xff]
        %v827 = vld [vmem:[%s12 + $0x18] sm:$0xff]
        %v828 = vld [vmem:[%s13] sm:$0x1]
        %v830 = vperm.slane %v828, 0
        %832 = vmatpush.msra.mxu0 0.0
        %833 = vmatpush.msra.mxu0 0.0
        %834 = vmatpush.msra.mxu0 0.0
        %835 = vmatpush.msra.mxu0 0.0
        %836 = vmatpush.msra.mxu0 0.0
        %837 = vmatpush.msra.mxu0 0.0
        %838 = vmatpush.msra.mxu0 0.0
        %839 = vmatpush.msra.mxu0 0.0
        %840 = vmatpush.msra.mxu0 0.0
        %841 = vmatpush.msra.mxu0 0.0
        %842 = vmatpush.msra.mxu0 0.0
        %843 = vmatpush.msra.mxu0 0.0
        %844 = vmatpush.msra.mxu0 %v827
        %845 = vmatpush.msra.mxu0 %v826
        %846 = vmatpush.msra.mxu0 %v825
        %847 = vmatpush.msra.mxu0 %v824
        %848 = vmatmul.f32.gmra.mxu0 %v766
        %v849 = vpop.f32.mrf.mxu0
        %v850 = vadd.f32 %v830, %v849
        %851 = vdwg.mxu0
        %v852 = vadd.f32 %v850, %v823
        %v853 = vtanh.pop %v852
        %v854 = vmul.f32 %v853, 1.442695
        %v855 = vpow.pop %v854
        %v857 = vsel %vm816, %v855, 0
        %859 = vmatpush.msra.mxu0 0.0
        %860 = vmatpush.msra.mxu0 0.0
        %861 = vmatpush.msra.mxu0 0.0
        %862 = vmatpush.msra.mxu0 0.0
        %863 = vmatpush.msra.mxu0 0.0
        %864 = vmatpush.msra.mxu0 0.0
        %865 = vmatpush.msra.mxu0 0.0
        %866 = vmatpush.msra.mxu0 0.0
        %867 = vmatpush.msra.mxu0 %v754
        %868 = vmatpush.msra.mxu0 %v753
        %869 = vmatpush.msra.mxu0 %v752
        %870 = vmatpush.msra.mxu0 %v751
        %871 = vmatpush.msra.mxu0 %v750
        %872 = vmatpush.msra.mxu0 %v749
        %873 = vmatpush.msra.mxu0 %v748
        %874 = vmatpush.msra.mxu0 %v747
        %875 = vmatmul.f32.gmra.mxu0 %v857
        %v876 = vpop.f32.mrf.mxu0
        %v877 = vadd.f32 0.0, %v876
        %878 = vdwg.mxu0
        %v879 = vrcp.pop %v877
        %vm880 = vcmask 64512
        %v882 = vsel %vm880, %v879, 0
        %884 = vmatpush.msra.mxu0 0.0
        %885 = vmatpush.msra.mxu0 0.0
        %886 = vmatpush.msra.mxu0 0.0
        %887 = vmatpush.msra.mxu0 0.0
        %888 = vmatpush.msra.mxu0 0.0
        %889 = vmatpush.msra.mxu0 0.0
        %890 = vmatpush.msra.mxu0 0.0
        %891 = vmatpush.msra.mxu0 0.0
        %892 = vmatpush.msra.mxu0 0.0
        %893 = vmatpush.msra.mxu0 0.0
        %894 = vmatpush.msra.mxu0 0.0
        %895 = vmatpush.msra.mxu0 0.0
        %896 = vmatpush.msra.mxu0 0.0
        %897 = vmatpush.msra.mxu0 0.0
        %898 = vmatpush.msra.mxu0 0.0
        %899 = vmatpush.msra.mxu0 %v755
        %900 = vmatmul.f32.gmra.mxu0 %v882
        %v901 = vpop.f32.mrf.mxu0
        %v902 = vadd.f32 0.0, %v901
        %903 = vdwg.mxu0
        %v904 = vmul.f32 %v855, %v902
        %v906 = vsel %vm880, %v738, 0
        %v909 = vsel %vm880, %v739, 0
        %v912 = vsel %vm880, %v740, 0
        %v915 = vsel %vm880, %v741, 0
        %v918 = vsel %vm880, %v742, 0
        %v921 = vsel %vm880, %v743, 0
        %v924 = vsel %vm880, %v744, 0
        %v927 = vsel %vm880, %v745, 0
        %929 = vmatpush.msra.mxu0 0.0
        %930 = vmatpush.msra.mxu0 0.0
        %931 = vmatpush.msra.mxu0 0.0
        %932 = vmatpush.msra.mxu0 0.0
        %933 = vmatpush.msra.mxu0 0.0
        %934 = vmatpush.msra.mxu0 0.0
        %935 = vmatpush.msra.mxu0 0.0
        %936 = vmatpush.msra.mxu0 0.0
        %937 = vmatpush.msra.mxu0 0.0
        %938 = vmatpush.msra.mxu0 0.0
        %939 = vmatpush.msra.mxu0 0.0
        %940 = vmatpush.msra.mxu0 0.0
        %941 = vmatpush.msra.mxu0 0.0
        %942 = vmatpush.msra.mxu0 0.0
        %943 = vmatpush.msra.mxu0 0.0
        %944 = vmatpush.msra.mxu0 %v786
        %945 = vmatmul.f32.gmra.mxu0 %v906
        %v946 = vpop.f32.mrf.mxu0
        %v947 = vadd.f32 0.0, %v946
        %948 = vmatmul.f32.gmra.mxu0 %v909
        %v949 = vpop.f32.mrf.mxu0
        %v950 = vadd.f32 0.0, %v949
        %951 = vmatmul.f32.gmra.mxu0 %v912
        %v952 = vpop.f32.mrf.mxu0
        %v953 = vadd.f32 0.0, %v952
        %954 = vmatmul.f32.gmra.mxu0 %v915
        %v955 = vpop.f32.mrf.mxu0
        %v956 = vadd.f32 0.0, %v955
        %957 = vmatmul.f32.gmra.mxu0 %v918
        %v958 = vpop.f32.mrf.mxu0
        %v959 = vadd.f32 0.0, %v958
        %960 = vmatmul.f32.gmra.mxu0 %v921
        %v961 = vpop.f32.mrf.mxu0
        %v962 = vadd.f32 0.0, %v961
        %963 = vmatmul.f32.gmra.mxu0 %v924
        %v964 = vpop.f32.mrf.mxu0
        %v965 = vadd.f32 0.0, %v964
        %966 = vmatmul.f32.gmra.mxu0 %v927
        %v967 = vpop.f32.mrf.mxu0
        %v968 = vadd.f32 0.0, %v967
        %969 = vdwg.mxu0
        %v970 = vmul.f32 %v947, %v730
        %v971 = vmul.f32 %v950, %v731
        %v972 = vmul.f32 %v953, %v732
        %v973 = vmul.f32 %v956, %v733
        %v974 = vmul.f32 %v959, %v734
        %v975 = vmul.f32 %v962, %v735
        %v976 = vmul.f32 %v965, %v736
        %v977 = vmul.f32 %v968, %v737
        %v979 = vsel %vm816, %v904, 0
        %981 = vmatpush.msra.mxu0 0.0
        %982 = vmatpush.msra.mxu0 0.0
        %983 = vmatpush.msra.mxu0 0.0
        %984 = vmatpush.msra.mxu0 0.0
        %985 = vmatpush.msra.mxu0 0.0
        %986 = vmatpush.msra.mxu0 0.0
        %987 = vmatpush.msra.mxu0 0.0
        %988 = vmatpush.msra.mxu0 0.0
        %989 = vmatpush.msra.mxu0 %v977
        %990 = vmatpush.msra.mxu0 %v976
        %991 = vmatpush.msra.mxu0 %v975
        %992 = vmatpush.msra.mxu0 %v974
        %993 = vmatpush.msra.mxu0 %v973
        %994 = vmatpush.msra.mxu0 %v972
        %995 = vmatpush.msra.mxu0 %v971
        %996 = vmatpush.msra.mxu0 %v970
        %997 = vmatmul.f32.gmra.mxu0 %v979
        %v998 = vpop.f32.mrf.mxu0
        %v999 = vadd.f32 0.0, %v998
        %1000 = vdwg.mxu0
        %v1001 = vld [vmem:[%s14] sm:$0xff]
        %v1002 = vld [vmem:[%s14 + $0x8] sm:$0xff]
        %v1003 = vld [vmem:[%s14 + $0x10] sm:$0xff]
        %v1004 = vld [vmem:[%s14 + $0x18] sm:$0xff]
        %v1005 = vld [vmem:[%s15] sm:$0x1]
        %v1007 = vperm.slane %v1005, 0
        %v1010 = vsel %vm764, %v999, 0
        %1012 = vmatpush.msra.mxu0 0.0
        %1013 = vmatpush.msra.mxu0 0.0
        %1014 = vmatpush.msra.mxu0 0.0
        %1015 = vmatpush.msra.mxu0 0.0
        %1016 = vmatpush.msra.mxu0 0.0
        %1017 = vmatpush.msra.mxu0 0.0
        %1018 = vmatpush.msra.mxu0 0.0
        %1019 = vmatpush.msra.mxu0 0.0
        %1020 = vmatpush.msra.mxu0 0.0
        %1021 = vmatpush.msra.mxu0 0.0
        %1022 = vmatpush.msra.mxu0 0.0
        %1023 = vmatpush.msra.mxu0 0.0
        %1024 = vmatpush.msra.mxu0 %v1004
        %1025 = vmatpush.msra.mxu0 %v1003
        %1026 = vmatpush.msra.mxu0 %v1002
        %1027 = vmatpush.msra.mxu0 %v1001
        %1028 = vmatmul.f32.gmra.mxu0 %v1010
        %v1029 = vpop.f32.mrf.mxu0
        %v1030 = vadd.f32 %v1007, %v1029
        %1031 = vdwg.mxu0
        %v1032 = vld [vmem:[%s16] sm:$0xff]
        %v1033 = vld [vmem:[%s16 + $0x8] sm:$0xff]
        %v1034 = vld [vmem:[%s16 + $0x10] sm:$0xff]
        %v1035 = vld [vmem:[%s16 + $0x18] sm:$0xff]
        %v1036 = vld [vmem:[%s17] sm:$0x1]
        %v1038 = vperm.slane %v1036, 0
        %v1041 = vsel %vm764, %v1030, 0
        %1043 = vmatpush.msra.mxu0 0.0
        %1044 = vmatpush.msra.mxu0 0.0
        %1045 = vmatpush.msra.mxu0 0.0
        %1046 = vmatpush.msra.mxu0 0.0
        %1047 = vmatpush.msra.mxu0 0.0
        %1048 = vmatpush.msra.mxu0 0.0
        %1049 = vmatpush.msra.mxu0 0.0
        %1050 = vmatpush.msra.mxu0 0.0
        %1051 = vmatpush.msra.mxu0 0.0
        %1052 = vmatpush.msra.mxu0 0.0
        %1053 = vmatpush.msra.mxu0 0.0
        %1054 = vmatpush.msra.mxu0 0.0
        %1055 = vmatpush.msra.mxu0 %v1035
        %1056 = vmatpush.msra.mxu0 %v1034
        %1057 = vmatpush.msra.mxu0 %v1033
        %1058 = vmatpush.msra.mxu0 %v1032
        %1059 = vmatmul.f32.gmra.mxu0 %v1041
        %v1060 = vpop.f32.mrf.mxu0
        %v1061 = vadd.f32 %v1038, %v1060
        %1062 = vdwg.mxu0
        %v1063 = vmax.f32 %v1061, 0.0
        %v1064 = vld [vmem:[%s18] sm:$0xff]
        %v1065 = vld [vmem:[%s18 + $0x8] sm:$0xff]
        %v1066 = vld [vmem:[%s18 + $0x10] sm:$0xff]
        %v1067 = vld [vmem:[%s18 + $0x18] sm:$0xff]
        %v1068 = vld [vmem:[%s19] sm:$0x1]
        %v1070 = vperm.slane %v1068, 0
        %v1073 = vsel %vm764, %v1063, 0
        %1075 = vmatpush.msra.mxu0 0.0
        %1076 = vmatpush.msra.mxu0 0.0
        %1077 = vmatpush.msra.mxu0 0.0
        %1078 = vmatpush.msra.mxu0 0.0
        %1079 = vmatpush.msra.mxu0 0.0
        %1080 = vmatpush.msra.mxu0 0.0
        %1081 = vmatpush.msra.mxu0 0.0
        %1082 = vmatpush.msra.mxu0 0.0
        %1083 = vmatpush.msra.mxu0 0.0
        %1084 = vmatpush.msra.mxu0 0.0
        %1085 = vmatpush.msra.mxu0 0.0
        %1086 = vmatpush.msra.mxu0 0.0
        %1087 = vmatpush.msra.mxu0 %v1067
        %1088 = vmatpush.msra.mxu0 %v1066
        %1089 = vmatpush.msra.mxu0 %v1065
        %1090 = vmatpush.msra.mxu0 %v1064
        %1091 = vmatmul.f32.gmra.mxu0 %v1073
        %v1092 = vpop.f32.mrf.mxu0
        %v1093 = vadd.f32 %v1070, %v1092
        %1094 = vdwg.mxu0
        %s1095 = scalar_lea.vmem %s9, 32
        %v1096 = vld [vmem:[%s1095] sm:$0xff]
        %v1097 = vld [vmem:[%s1095 + $0x8] sm:$0xff]
        %v1098 = vld [vmem:[%s1095 + $0x10] sm:$0xff]
        %v1099 = vld [vmem:[%s1095 + $0x18] sm:$0xff]
        %s1100 = scalar_lea.vmem %s10, 1
        %v1101 = vld [vmem:[%s1100] sm:$0x1]
        %v1103 = vperm.slane %v1101, 0
        %1105 = vmatpush.msra.mxu0 0.0
        %1106 = vmatpush.msra.mxu0 0.0
        %1107 = vmatpush.msra.mxu0 0.0
        %1108 = vmatpush.msra.mxu0 0.0
        %1109 = vmatpush.msra.mxu0 0.0
        %1110 = vmatpush.msra.mxu0 0.0
        %1111 = vmatpush.msra.mxu0 0.0
        %1112 = vmatpush.msra.mxu0 0.0
        %1113 = vmatpush.msra.mxu0 0.0
        %1114 = vmatpush.msra.mxu0 0.0
        %1115 = vmatpush.msra.mxu0 0.0
        %1116 = vmatpush.msra.mxu0 0.0
        %1117 = vmatpush.msra.mxu0 %v1099
        %1118 = vmatpush.msra.mxu0 %v1098
        %1119 = vmatpush.msra.mxu0 %v1097
        %1120 = vmatpush.msra.mxu0 %v1096
        %1121 = vmatmul.f32.gmra.mxu0 %v766
        %v1122 = vpop.f32.mrf.mxu0
        %v1123 = vadd.f32 %v1103, %v1122
        %1124 = vdwg.mxu0
        %s1125 = scalar_lea.vmem %s11, 32
        %v1126 = vld [vmem:[%s1125] sm:$0xff]
        %v1127 = vld [vmem:[%s1125 + $0x8] sm:$0xff]
        %v1128 = vld [vmem:[%s1125 + $0x10] sm:$0xff]
        %v1129 = vld [vmem:[%s1125 + $0x18] sm:$0xff]
        %v1131 = vsel %vm764, %v1123, 0
        %1133 = vmatpush.msra.mxu0 0.0
        %1134 = vmatpush.msra.mxu0 0.0
        %1135 = vmatpush.msra.mxu0 0.0
        %1136 = vmatpush.msra.mxu0 0.0
        %1137 = vmatpush.msra.mxu0 0.0
        %1138 = vmatpush.msra.mxu0 0.0
        %1139 = vmatpush.msra.mxu0 0.0
        %1140 = vmatpush.msra.mxu0 0.0
        %1141 = vmatpush.msra.mxu0 0.0
        %1142 = vmatpush.msra.mxu0 0.0
        %1143 = vmatpush.msra.mxu0 0.0
        %1144 = vmatpush.msra.mxu0 0.0
        %1145 = vmatpush.msra.mxu0 %v1129
        %1146 = vmatpush.msra.mxu0 %v1128
        %1147 = vmatpush.msra.mxu0 %v1127
        %1148 = vmatpush.msra.mxu0 %v1126
        %1149 = vmatmul.f32.gmra.mxu0 %v1131
        %v1150 = vpop.f32.mrf.mxu0
        %v1151 = vadd.f32 0.0, %v1150
        %1152 = vdwg.mxu0
        %v1153 = vmul.f32 %v1151, %v746
        %v1154 = vsel %vm816, %v1153, 0.0
        %v1155 = vrot.slane %v1154, 4
        %v1156 = vadd.f32 %v1154, %v1155
        %v1157 = vrot.slane %v1156, 2
        %v1158 = vadd.f32 %v1156, %v1157
        %v1159 = vrot.slane %v1158, 1
        %v1160 = vadd.f32 %v1158, %v1159
        %s1161 = scalar_lea.vmem %s12, 32
        %v1162 = vld [vmem:[%s1161] sm:$0xff]
        %v1163 = vld [vmem:[%s1161 + $0x8] sm:$0xff]
        %v1164 = vld [vmem:[%s1161 + $0x10] sm:$0xff]
        %v1165 = vld [vmem:[%s1161 + $0x18] sm:$0xff]
        %s1166 = scalar_lea.vmem %s13, 1
        %v1167 = vld [vmem:[%s1166] sm:$0x1]
        %v1169 = vperm.slane %v1167, 0
        %v1172 = vsel %vm764, %v727, 0
        %1174 = vmatpush.msra.mxu0 0.0
        %1175 = vmatpush.msra.mxu0 0.0
        %1176 = vmatpush.msra.mxu0 0.0
        %1177 = vmatpush.msra.mxu0 0.0
        %1178 = vmatpush.msra.mxu0 0.0
        %1179 = vmatpush.msra.mxu0 0.0
        %1180 = vmatpush.msra.mxu0 0.0
        %1181 = vmatpush.msra.mxu0 0.0
        %1182 = vmatpush.msra.mxu0 0.0
        %1183 = vmatpush.msra.mxu0 0.0
        %1184 = vmatpush.msra.mxu0 0.0
        %1185 = vmatpush.msra.mxu0 0.0
        %1186 = vmatpush.msra.mxu0 %v1165
        %1187 = vmatpush.msra.mxu0 %v1164
        %1188 = vmatpush.msra.mxu0 %v1163
        %1189 = vmatpush.msra.mxu0 %v1162
        %1190 = vmatmul.f32.gmra.mxu0 %v1172
        %v1191 = vpop.f32.mrf.mxu0
        %v1192 = vadd.f32 %v1169, %v1191
        %1193 = vdwg.mxu0
        %v1194 = vadd.f32 %v1192, %v1160
        %v1195 = vtanh.pop %v1194
        %v1196 = vmul.f32 %v1195, 1.442695
        %v1197 = vpow.pop %v1196
        %v1199 = vsel %vm816, %v1197, 0
        %1201 = vmatpush.msra.mxu0 0.0
        %1202 = vmatpush.msra.mxu0 0.0
        %1203 = vmatpush.msra.mxu0 0.0
        %1204 = vmatpush.msra.mxu0 0.0
        %1205 = vmatpush.msra.mxu0 0.0
        %1206 = vmatpush.msra.mxu0 0.0
        %1207 = vmatpush.msra.mxu0 0.0
        %1208 = vmatpush.msra.mxu0 0.0
        %1209 = vmatpush.msra.mxu0 %v754
        %1210 = vmatpush.msra.mxu0 %v753
        %1211 = vmatpush.msra.mxu0 %v752
        %1212 = vmatpush.msra.mxu0 %v751
        %1213 = vmatpush.msra.mxu0 %v750
        %1214 = vmatpush.msra.mxu0 %v749
        %1215 = vmatpush.msra.mxu0 %v748
        %1216 = vmatpush.msra.mxu0 %v747
        %1217 = vmatmul.f32.gmra.mxu0 %v1199
        %v1218 = vpop.f32.mrf.mxu0
        %v1219 = vadd.f32 0.0, %v1218
        %1220 = vdwg.mxu0
        %v1221 = vrcp.pop %v1219
        %v1223 = vsel %vm880, %v1221, 0
        %1225 = vmatpush.msra.mxu0 0.0
        %1226 = vmatpush.msra.mxu0 0.0
        %1227 = vmatpush.msra.mxu0 0.0
        %1228 = vmatpush.msra.mxu0 0.0
        %1229 = vmatpush.msra.mxu0 0.0
        %1230 = vmatpush.msra.mxu0 0.0
        %1231 = vmatpush.msra.mxu0 0.0
        %1232 = vmatpush.msra.mxu0 0.0
        %1233 = vmatpush.msra.mxu0 0.0
        %1234 = vmatpush.msra.mxu0 0.0
        %1235 = vmatpush.msra.mxu0 0.0
        %1236 = vmatpush.msra.mxu0 0.0
        %1237 = vmatpush.msra.mxu0 0.0
        %1238 = vmatpush.msra.mxu0 0.0
        %1239 = vmatpush.msra.mxu0 0.0
        %1240 = vmatpush.msra.mxu0 %v755
        %1241 = vmatmul.f32.gmra.mxu0 %v1223
        %v1242 = vpop.f32.mrf.mxu0
        %v1243 = vadd.f32 0.0, %v1242
        %1244 = vdwg.mxu0
        %v1245 = vmul.f32 %v1197, %v1243
        %1246 = vmatpush.msra.mxu0 0.0
        %1247 = vmatpush.msra.mxu0 0.0
        %1248 = vmatpush.msra.mxu0 0.0
        %1249 = vmatpush.msra.mxu0 0.0
        %1250 = vmatpush.msra.mxu0 0.0
        %1251 = vmatpush.msra.mxu0 0.0
        %1252 = vmatpush.msra.mxu0 0.0
        %1253 = vmatpush.msra.mxu0 0.0
        %1254 = vmatpush.msra.mxu0 0.0
        %1255 = vmatpush.msra.mxu0 0.0
        %1256 = vmatpush.msra.mxu0 0.0
        %1257 = vmatpush.msra.mxu0 0.0
        %1258 = vmatpush.msra.mxu0 0.0
        %1259 = vmatpush.msra.mxu0 0.0
        %1260 = vmatpush.msra.mxu0 0.0
        %1261 = vmatpush.msra.mxu0 %v1123
        %1262 = vmatmul.f32.gmra.mxu0 %v906
        %v1263 = vpop.f32.mrf.mxu0
        %v1264 = vadd.f32 0.0, %v1263
        %1265 = vmatmul.f32.gmra.mxu0 %v909
        %v1266 = vpop.f32.mrf.mxu0
        %v1267 = vadd.f32 0.0, %v1266
        %1268 = vmatmul.f32.gmra.mxu0 %v912
        %v1269 = vpop.f32.mrf.mxu0
        %v1270 = vadd.f32 0.0, %v1269
        %1271 = vmatmul.f32.gmra.mxu0 %v915
        %v1272 = vpop.f32.mrf.mxu0
        %v1273 = vadd.f32 0.0, %v1272
        %1274 = vmatmul.f32.gmra.mxu0 %v918
        %v1275 = vpop.f32.mrf.mxu0
        %v1276 = vadd.f32 0.0, %v1275
        %1277 = vmatmul.f32.gmra.mxu0 %v921
        %v1278 = vpop.f32.mrf.mxu0
        %v1279 = vadd.f32 0.0, %v1278
        %1280 = vmatmul.f32.gmra.mxu0 %v924
        %v1281 = vpop.f32.mrf.mxu0
        %v1282 = vadd.f32 0.0, %v1281
        %1283 = vmatmul.f32.gmra.mxu0 %v927
        %v1284 = vpop.f32.mrf.mxu0
        %v1285 = vadd.f32 0.0, %v1284
        %1286 = vdwg.mxu0
        %v1287 = vmul.f32 %v1264, %v730
        %v1288 = vmul.f32 %v1267, %v731
        %v1289 = vmul.f32 %v1270, %v732
        %v1290 = vmul.f32 %v1273, %v733
        %v1291 = vmul.f32 %v1276, %v734
        %v1292 = vmul.f32 %v1279, %v735
        %v1293 = vmul.f32 %v1282, %v736
        %v1294 = vmul.f32 %v1285, %v737
        %v1296 = vsel %vm816, %v1245, 0
        %1298 = vmatpush.msra.mxu0 0.0
        %1299 = vmatpush.msra.mxu0 0.0
        %1300 = vmatpush.msra.mxu0 0.0
        %1301 = vmatpush.msra.mxu0 0.0
        %1302 = vmatpush.msra.mxu0 0.0
        %1303 = vmatpush.msra.mxu0 0.0
        %1304 = vmatpush.msra.mxu0 0.0
        %1305 = vmatpush.msra.mxu0 0.0
        %1306 = vmatpush.msra.mxu0 %v1294
        %1307 = vmatpush.msra.mxu0 %v1293
        %1308 = vmatpush.msra.mxu0 %v1292
        %1309 = vmatpush.msra.mxu0 %v1291
        %1310 = vmatpush.msra.mxu0 %v1290
        %1311 = vmatpush.msra.mxu0 %v1289
        %1312 = vmatpush.msra.mxu0 %v1288
        %1313 = vmatpush.msra.mxu0 %v1287
        %1314 = vmatmul.f32.gmra.mxu0 %v1296
        %v1315 = vpop.f32.mrf.mxu0
        %v1316 = vadd.f32 0.0, %v1315
        %1317 = vdwg.mxu0
        %s1318 = scalar_lea.vmem %s14, 32
        %v1319 = vld [vmem:[%s1318] sm:$0xff]
        %v1320 = vld [vmem:[%s1318 + $0x8] sm:$0xff]
        %v1321 = vld [vmem:[%s1318 + $0x10] sm:$0xff]
        %v1322 = vld [vmem:[%s1318 + $0x18] sm:$0xff]
        %s1323 = scalar_lea.vmem %s15, 1
        %v1324 = vld [vmem:[%s1323] sm:$0x1]
        %v1326 = vperm.slane %v1324, 0
        %v1329 = vsel %vm764, %v1316, 0
        %1331 = vmatpush.msra.mxu0 0.0
        %1332 = vmatpush.msra.mxu0 0.0
        %1333 = vmatpush.msra.mxu0 0.0
        %1334 = vmatpush.msra.mxu0 0.0
        %1335 = vmatpush.msra.mxu0 0.0
        %1336 = vmatpush.msra.mxu0 0.0
        %1337 = vmatpush.msra.mxu0 0.0
        %1338 = vmatpush.msra.mxu0 0.0
        %1339 = vmatpush.msra.mxu0 0.0
        %1340 = vmatpush.msra.mxu0 0.0
        %1341 = vmatpush.msra.mxu0 0.0
        %1342 = vmatpush.msra.mxu0 0.0
        %1343 = vmatpush.msra.mxu0 %v1322
        %1344 = vmatpush.msra.mxu0 %v1321
        %1345 = vmatpush.msra.mxu0 %v1320
        %1346 = vmatpush.msra.mxu0 %v1319
        %1347 = vmatmul.f32.gmra.mxu0 %v1329
        %v1348 = vpop.f32.mrf.mxu0
        %v1349 = vadd.f32 %v1326, %v1348
        %1350 = vdwg.mxu0
        %s1351 = scalar_lea.vmem %s16, 32
        %v1352 = vld [vmem:[%s1351] sm:$0xff]
        %v1353 = vld [vmem:[%s1351 + $0x8] sm:$0xff]
        %v1354 = vld [vmem:[%s1351 + $0x10] sm:$0xff]
        %v1355 = vld [vmem:[%s1351 + $0x18] sm:$0xff]
        %s1356 = scalar_lea.vmem %s17, 1
        %v1357 = vld [vmem:[%s1356] sm:$0x1]
        %v1359 = vperm.slane %v1357, 0
        %v1362 = vsel %vm764, %v1349, 0
        %1364 = vmatpush.msra.mxu0 0.0
        %1365 = vmatpush.msra.mxu0 0.0
        %1366 = vmatpush.msra.mxu0 0.0
        %1367 = vmatpush.msra.mxu0 0.0
        %1368 = vmatpush.msra.mxu0 0.0
        %1369 = vmatpush.msra.mxu0 0.0
        %1370 = vmatpush.msra.mxu0 0.0
        %1371 = vmatpush.msra.mxu0 0.0
        %1372 = vmatpush.msra.mxu0 0.0
        %1373 = vmatpush.msra.mxu0 0.0
        %1374 = vmatpush.msra.mxu0 0.0
        %1375 = vmatpush.msra.mxu0 0.0
        %1376 = vmatpush.msra.mxu0 %v1355
        %1377 = vmatpush.msra.mxu0 %v1354
        %1378 = vmatpush.msra.mxu0 %v1353
        %1379 = vmatpush.msra.mxu0 %v1352
        %1380 = vmatmul.f32.gmra.mxu0 %v1362
        %v1381 = vpop.f32.mrf.mxu0
        %v1382 = vadd.f32 %v1359, %v1381
        %1383 = vdwg.mxu0
        %v1384 = vmax.f32 %v1382, 0.0
        %s1385 = scalar_lea.vmem %s18, 32
        %v1386 = vld [vmem:[%s1385] sm:$0xff]
        %v1387 = vld [vmem:[%s1385 + $0x8] sm:$0xff]
        %v1388 = vld [vmem:[%s1385 + $0x10] sm:$0xff]
        %v1389 = vld [vmem:[%s1385 + $0x18] sm:$0xff]
        %s1390 = scalar_lea.vmem %s19, 1
        %v1391 = vld [vmem:[%s1390] sm:$0x1]
        %v1393 = vperm.slane %v1391, 0
        %v1396 = vsel %vm764, %v1384, 0
        %1398 = vmatpush.msra.mxu0 0.0
        %1399 = vmatpush.msra.mxu0 0.0
        %1400 = vmatpush.msra.mxu0 0.0
        %1401 = vmatpush.msra.mxu0 0.0
        %1402 = vmatpush.msra.mxu0 0.0
        %1403 = vmatpush.msra.mxu0 0.0
        %1404 = vmatpush.msra.mxu0 0.0
        %1405 = vmatpush.msra.mxu0 0.0
        %1406 = vmatpush.msra.mxu0 0.0
        %1407 = vmatpush.msra.mxu0 0.0
        %1408 = vmatpush.msra.mxu0 0.0
        %1409 = vmatpush.msra.mxu0 0.0
        %1410 = vmatpush.msra.mxu0 %v1389
        %1411 = vmatpush.msra.mxu0 %v1388
        %1412 = vmatpush.msra.mxu0 %v1387
        %1413 = vmatpush.msra.mxu0 %v1386
        %1414 = vmatmul.f32.gmra.mxu0 %v1396
        %v1415 = vpop.f32.mrf.mxu0
        %v1416 = vadd.f32 %v1393, %v1415
        %1417 = vdwg.mxu0
        %s1418 = scalar_lea.vmem %s9, 64
        %v1419 = vld [vmem:[%s1418] sm:$0xff]
        %v1420 = vld [vmem:[%s1418 + $0x8] sm:$0xff]
        %v1421 = vld [vmem:[%s1418 + $0x10] sm:$0xff]
        %v1422 = vld [vmem:[%s1418 + $0x18] sm:$0xff]
        %s1423 = scalar_lea.vmem %s10, 2
        %v1424 = vld [vmem:[%s1423] sm:$0x1]
        %v1426 = vperm.slane %v1424, 0
        %1428 = vmatpush.msra.mxu0 0.0
        %1429 = vmatpush.msra.mxu0 0.0
        %1430 = vmatpush.msra.mxu0 0.0
        %1431 = vmatpush.msra.mxu0 0.0
        %1432 = vmatpush.msra.mxu0 0.0
        %1433 = vmatpush.msra.mxu0 0.0
        %1434 = vmatpush.msra.mxu0 0.0
        %1435 = vmatpush.msra.mxu0 0.0
        %1436 = vmatpush.msra.mxu0 0.0
        %1437 = vmatpush.msra.mxu0 0.0
        %1438 = vmatpush.msra.mxu0 0.0
        %1439 = vmatpush.msra.mxu0 0.0
        %1440 = vmatpush.msra.mxu0 %v1422
        %1441 = vmatpush.msra.mxu0 %v1421
        %1442 = vmatpush.msra.mxu0 %v1420
        %1443 = vmatpush.msra.mxu0 %v1419
        %1444 = vmatmul.f32.gmra.mxu0 %v766
        %v1445 = vpop.f32.mrf.mxu0
        %v1446 = vadd.f32 %v1426, %v1445
        %1447 = vdwg.mxu0
        %s1448 = scalar_lea.vmem %s11, 64
        %v1449 = vld [vmem:[%s1448] sm:$0xff]
        %v1450 = vld [vmem:[%s1448 + $0x8] sm:$0xff]
        %v1451 = vld [vmem:[%s1448 + $0x10] sm:$0xff]
        %v1452 = vld [vmem:[%s1448 + $0x18] sm:$0xff]
        %v1454 = vsel %vm764, %v1446, 0
        %1456 = vmatpush.msra.mxu0 0.0
        %1457 = vmatpush.msra.mxu0 0.0
        %1458 = vmatpush.msra.mxu0 0.0
        %1459 = vmatpush.msra.mxu0 0.0
        %1460 = vmatpush.msra.mxu0 0.0
        %1461 = vmatpush.msra.mxu0 0.0
        %1462 = vmatpush.msra.mxu0 0.0
        %1463 = vmatpush.msra.mxu0 0.0
        %1464 = vmatpush.msra.mxu0 0.0
        %1465 = vmatpush.msra.mxu0 0.0
        %1466 = vmatpush.msra.mxu0 0.0
        %1467 = vmatpush.msra.mxu0 0.0
        %1468 = vmatpush.msra.mxu0 %v1452
        %1469 = vmatpush.msra.mxu0 %v1451
        %1470 = vmatpush.msra.mxu0 %v1450
        %1471 = vmatpush.msra.mxu0 %v1449
        %1472 = vmatmul.f32.gmra.mxu0 %v1454
        %v1473 = vpop.f32.mrf.mxu0
        %v1474 = vadd.f32 0.0, %v1473
        %1475 = vdwg.mxu0
        %v1476 = vmul.f32 %v1474, %v746
        %v1477 = vsel %vm816, %v1476, 0.0
        %v1478 = vrot.slane %v1477, 4
        %v1479 = vadd.f32 %v1477, %v1478
        %v1480 = vrot.slane %v1479, 2
        %v1481 = vadd.f32 %v1479, %v1480
        %v1482 = vrot.slane %v1481, 1
        %v1483 = vadd.f32 %v1481, %v1482
        %s1484 = scalar_lea.vmem %s12, 64
        %v1485 = vld [vmem:[%s1484] sm:$0xff]
        %v1486 = vld [vmem:[%s1484 + $0x8] sm:$0xff]
        %v1487 = vld [vmem:[%s1484 + $0x10] sm:$0xff]
        %v1488 = vld [vmem:[%s1484 + $0x18] sm:$0xff]
        %s1489 = scalar_lea.vmem %s13, 2
        %v1490 = vld [vmem:[%s1489] sm:$0x1]
        %v1492 = vperm.slane %v1490, 0
        %v1495 = vsel %vm764, %v728, 0
        %1497 = vmatpush.msra.mxu0 0.0
        %1498 = vmatpush.msra.mxu0 0.0
        %1499 = vmatpush.msra.mxu0 0.0
        %1500 = vmatpush.msra.mxu0 0.0
        %1501 = vmatpush.msra.mxu0 0.0
        %1502 = vmatpush.msra.mxu0 0.0
        %1503 = vmatpush.msra.mxu0 0.0
        %1504 = vmatpush.msra.mxu0 0.0
        %1505 = vmatpush.msra.mxu0 0.0
        %1506 = vmatpush.msra.mxu0 0.0
        %1507 = vmatpush.msra.mxu0 0.0
        %1508 = vmatpush.msra.mxu0 0.0
        %1509 = vmatpush.msra.mxu0 %v1488
        %1510 = vmatpush.msra.mxu0 %v1487
        %1511 = vmatpush.msra.mxu0 %v1486
        %1512 = vmatpush.msra.mxu0 %v1485
        %1513 = vmatmul.f32.gmra.mxu0 %v1495
        %v1514 = vpop.f32.mrf.mxu0
        %v1515 = vadd.f32 %v1492, %v1514
        %1516 = vdwg.mxu0
        %v1517 = vadd.f32 %v1515, %v1483
        %v1518 = vtanh.pop %v1517
        %v1519 = vmul.f32 %v1518, 1.442695
        %v1520 = vpow.pop %v1519
        %v1522 = vsel %vm816, %v1520, 0
        %1524 = vmatpush.msra.mxu0 0.0
        %1525 = vmatpush.msra.mxu0 0.0
        %1526 = vmatpush.msra.mxu0 0.0
        %1527 = vmatpush.msra.mxu0 0.0
        %1528 = vmatpush.msra.mxu0 0.0
        %1529 = vmatpush.msra.mxu0 0.0
        %1530 = vmatpush.msra.mxu0 0.0
        %1531 = vmatpush.msra.mxu0 0.0
        %1532 = vmatpush.msra.mxu0 %v754
        %1533 = vmatpush.msra.mxu0 %v753
        %1534 = vmatpush.msra.mxu0 %v752
        %1535 = vmatpush.msra.mxu0 %v751
        %1536 = vmatpush.msra.mxu0 %v750
        %1537 = vmatpush.msra.mxu0 %v749
        %1538 = vmatpush.msra.mxu0 %v748
        %1539 = vmatpush.msra.mxu0 %v747
        %1540 = vmatmul.f32.gmra.mxu0 %v1522
        %v1541 = vpop.f32.mrf.mxu0
        %v1542 = vadd.f32 0.0, %v1541
        %1543 = vdwg.mxu0
        %v1544 = vrcp.pop %v1542
        %v1546 = vsel %vm880, %v1544, 0
        %1548 = vmatpush.msra.mxu0 0.0
        %1549 = vmatpush.msra.mxu0 0.0
        %1550 = vmatpush.msra.mxu0 0.0
        %1551 = vmatpush.msra.mxu0 0.0
        %1552 = vmatpush.msra.mxu0 0.0
        %1553 = vmatpush.msra.mxu0 0.0
        %1554 = vmatpush.msra.mxu0 0.0
        %1555 = vmatpush.msra.mxu0 0.0
        %1556 = vmatpush.msra.mxu0 0.0
        %1557 = vmatpush.msra.mxu0 0.0
        %1558 = vmatpush.msra.mxu0 0.0
        %1559 = vmatpush.msra.mxu0 0.0
        %1560 = vmatpush.msra.mxu0 0.0
        %1561 = vmatpush.msra.mxu0 0.0
        %1562 = vmatpush.msra.mxu0 0.0
        %1563 = vmatpush.msra.mxu0 %v755
        %1564 = vmatmul.f32.gmra.mxu0 %v1546
        %v1565 = vpop.f32.mrf.mxu0
        %v1566 = vadd.f32 0.0, %v1565
        %1567 = vdwg.mxu0
        %v1568 = vmul.f32 %v1520, %v1566
        %1569 = vmatpush.msra.mxu0 0.0
        %1570 = vmatpush.msra.mxu0 0.0
        %1571 = vmatpush.msra.mxu0 0.0
        %1572 = vmatpush.msra.mxu0 0.0
        %1573 = vmatpush.msra.mxu0 0.0
        %1574 = vmatpush.msra.mxu0 0.0
        %1575 = vmatpush.msra.mxu0 0.0
        %1576 = vmatpush.msra.mxu0 0.0
        %1577 = vmatpush.msra.mxu0 0.0
        %1578 = vmatpush.msra.mxu0 0.0
        %1579 = vmatpush.msra.mxu0 0.0
        %1580 = vmatpush.msra.mxu0 0.0
        %1581 = vmatpush.msra.mxu0 0.0
        %1582 = vmatpush.msra.mxu0 0.0
        %1583 = vmatpush.msra.mxu0 0.0
        %1584 = vmatpush.msra.mxu0 %v1446
        %1585 = vmatmul.f32.gmra.mxu0 %v906
        %v1586 = vpop.f32.mrf.mxu0
        %v1587 = vadd.f32 0.0, %v1586
        %1588 = vmatmul.f32.gmra.mxu0 %v909
        %v1589 = vpop.f32.mrf.mxu0
        %v1590 = vadd.f32 0.0, %v1589
        %1591 = vmatmul.f32.gmra.mxu0 %v912
        %v1592 = vpop.f32.mrf.mxu0
        %v1593 = vadd.f32 0.0, %v1592
        %1594 = vmatmul.f32.gmra.mxu0 %v915
        %v1595 = vpop.f32.mrf.mxu0
        %v1596 = vadd.f32 0.0, %v1595
        %1597 = vmatmul.f32.gmra.mxu0 %v918
        %v1598 = vpop.f32.mrf.mxu0
        %v1599 = vadd.f32 0.0, %v1598
        %1600 = vmatmul.f32.gmra.mxu0 %v921
        %v1601 = vpop.f32.mrf.mxu0
        %v1602 = vadd.f32 0.0, %v1601
        %1603 = vmatmul.f32.gmra.mxu0 %v924
        %v1604 = vpop.f32.mrf.mxu0
        %v1605 = vadd.f32 0.0, %v1604
        %1606 = vmatmul.f32.gmra.mxu0 %v927
        %v1607 = vpop.f32.mrf.mxu0
        %v1608 = vadd.f32 0.0, %v1607
        %1609 = vdwg.mxu0
        %v1610 = vmul.f32 %v1587, %v730
        %v1611 = vmul.f32 %v1590, %v731
        %v1612 = vmul.f32 %v1593, %v732
        %v1613 = vmul.f32 %v1596, %v733
        %v1614 = vmul.f32 %v1599, %v734
        %v1615 = vmul.f32 %v1602, %v735
        %v1616 = vmul.f32 %v1605, %v736
        %v1617 = vmul.f32 %v1608, %v737
        %v1619 = vsel %vm816, %v1568, 0
        %1621 = vmatpush.msra.mxu0 0.0
        %1622 = vmatpush.msra.mxu0 0.0
        %1623 = vmatpush.msra.mxu0 0.0
        %1624 = vmatpush.msra.mxu0 0.0
        %1625 = vmatpush.msra.mxu0 0.0
        %1626 = vmatpush.msra.mxu0 0.0
        %1627 = vmatpush.msra.mxu0 0.0
        %1628 = vmatpush.msra.mxu0 0.0
        %1629 = vmatpush.msra.mxu0 %v1617
        %1630 = vmatpush.msra.mxu0 %v1616
        %1631 = vmatpush.msra.mxu0 %v1615
        %1632 = vmatpush.msra.mxu0 %v1614
        %1633 = vmatpush.msra.mxu0 %v1613
        %1634 = vmatpush.msra.mxu0 %v1612
        %1635 = vmatpush.msra.mxu0 %v1611
        %1636 = vmatpush.msra.mxu0 %v1610
        %1637 = vmatmul.f32.gmra.mxu0 %v1619
        %v1638 = vpop.f32.mrf.mxu0
        %v1639 = vadd.f32 0.0, %v1638
        %1640 = vdwg.mxu0
        %s1641 = scalar_lea.vmem %s14, 64
        %v1642 = vld [vmem:[%s1641] sm:$0xff]
        %v1643 = vld [vmem:[%s1641 + $0x8] sm:$0xff]
        %v1644 = vld [vmem:[%s1641 + $0x10] sm:$0xff]
        %v1645 = vld [vmem:[%s1641 + $0x18] sm:$0xff]
        %s1646 = scalar_lea.vmem %s15, 2
        %v1647 = vld [vmem:[%s1646] sm:$0x1]
        %v1649 = vperm.slane %v1647, 0
        %v1652 = vsel %vm764, %v1639, 0
        %1654 = vmatpush.msra.mxu0 0.0
        %1655 = vmatpush.msra.mxu0 0.0
        %1656 = vmatpush.msra.mxu0 0.0
        %1657 = vmatpush.msra.mxu0 0.0
        %1658 = vmatpush.msra.mxu0 0.0
        %1659 = vmatpush.msra.mxu0 0.0
        %1660 = vmatpush.msra.mxu0 0.0
        %1661 = vmatpush.msra.mxu0 0.0
        %1662 = vmatpush.msra.mxu0 0.0
        %1663 = vmatpush.msra.mxu0 0.0
        %1664 = vmatpush.msra.mxu0 0.0
        %1665 = vmatpush.msra.mxu0 0.0
        %1666 = vmatpush.msra.mxu0 %v1645
        %1667 = vmatpush.msra.mxu0 %v1644
        %1668 = vmatpush.msra.mxu0 %v1643
        %1669 = vmatpush.msra.mxu0 %v1642
        %1670 = vmatmul.f32.gmra.mxu0 %v1652
        %v1671 = vpop.f32.mrf.mxu0
        %v1672 = vadd.f32 %v1649, %v1671
        %1673 = vdwg.mxu0
        %s1674 = scalar_lea.vmem %s16, 64
        %v1675 = vld [vmem:[%s1674] sm:$0xff]
        %v1676 = vld [vmem:[%s1674 + $0x8] sm:$0xff]
        %v1677 = vld [vmem:[%s1674 + $0x10] sm:$0xff]
        %v1678 = vld [vmem:[%s1674 + $0x18] sm:$0xff]
        %s1679 = scalar_lea.vmem %s17, 2
        %v1680 = vld [vmem:[%s1679] sm:$0x1]
        %v1682 = vperm.slane %v1680, 0
        %v1685 = vsel %vm764, %v1672, 0
        %1687 = vmatpush.msra.mxu0 0.0
        %1688 = vmatpush.msra.mxu0 0.0
        %1689 = vmatpush.msra.mxu0 0.0
        %1690 = vmatpush.msra.mxu0 0.0
        %1691 = vmatpush.msra.mxu0 0.0
        %1692 = vmatpush.msra.mxu0 0.0
        %1693 = vmatpush.msra.mxu0 0.0
        %1694 = vmatpush.msra.mxu0 0.0
        %1695 = vmatpush.msra.mxu0 0.0
        %1696 = vmatpush.msra.mxu0 0.0
        %1697 = vmatpush.msra.mxu0 0.0
        %1698 = vmatpush.msra.mxu0 0.0
        %1699 = vmatpush.msra.mxu0 %v1678
        %1700 = vmatpush.msra.mxu0 %v1677
        %1701 = vmatpush.msra.mxu0 %v1676
        %1702 = vmatpush.msra.mxu0 %v1675
        %1703 = vmatmul.f32.gmra.mxu0 %v1685
        %v1704 = vpop.f32.mrf.mxu0
        %v1705 = vadd.f32 %v1682, %v1704
        %1706 = vdwg.mxu0
        %v1707 = vmax.f32 %v1705, 0.0
        %s1708 = scalar_lea.vmem %s18, 64
        %v1709 = vld [vmem:[%s1708] sm:$0xff]
        %v1710 = vld [vmem:[%s1708 + $0x8] sm:$0xff]
        %v1711 = vld [vmem:[%s1708 + $0x10] sm:$0xff]
        %v1712 = vld [vmem:[%s1708 + $0x18] sm:$0xff]
        %s1713 = scalar_lea.vmem %s19, 2
        %v1714 = vld [vmem:[%s1713] sm:$0x1]
        %v1716 = vperm.slane %v1714, 0
        %v1719 = vsel %vm764, %v1707, 0
        %1721 = vmatpush.msra.mxu0 0.0
        %1722 = vmatpush.msra.mxu0 0.0
        %1723 = vmatpush.msra.mxu0 0.0
        %1724 = vmatpush.msra.mxu0 0.0
        %1725 = vmatpush.msra.mxu0 0.0
        %1726 = vmatpush.msra.mxu0 0.0
        %1727 = vmatpush.msra.mxu0 0.0
        %1728 = vmatpush.msra.mxu0 0.0
        %1729 = vmatpush.msra.mxu0 0.0
        %1730 = vmatpush.msra.mxu0 0.0
        %1731 = vmatpush.msra.mxu0 0.0
        %1732 = vmatpush.msra.mxu0 0.0
        %1733 = vmatpush.msra.mxu0 %v1712
        %1734 = vmatpush.msra.mxu0 %v1711
        %1735 = vmatpush.msra.mxu0 %v1710
        %1736 = vmatpush.msra.mxu0 %v1709
        %1737 = vmatmul.f32.gmra.mxu0 %v1719
        %v1738 = vpop.f32.mrf.mxu0
        %v1739 = vadd.f32 %v1716, %v1738
        %1740 = vdwg.mxu0
        %s1741 = scalar_lea.vmem %s9, 96
        %v1742 = vld [vmem:[%s1741] sm:$0xff]
        %v1743 = vld [vmem:[%s1741 + $0x8] sm:$0xff]
        %v1744 = vld [vmem:[%s1741 + $0x10] sm:$0xff]
        %v1745 = vld [vmem:[%s1741 + $0x18] sm:$0xff]
        %s1746 = scalar_lea.vmem %s10, 3
        %v1747 = vld [vmem:[%s1746] sm:$0x1]
        %v1749 = vperm.slane %v1747, 0
        %v1752 = vsel %vm764, %v1093, 0
        %1754 = vmatpush.msra.mxu0 0.0
        %1755 = vmatpush.msra.mxu0 0.0
        %1756 = vmatpush.msra.mxu0 0.0
        %1757 = vmatpush.msra.mxu0 0.0
        %1758 = vmatpush.msra.mxu0 0.0
        %1759 = vmatpush.msra.mxu0 0.0
        %1760 = vmatpush.msra.mxu0 0.0
        %1761 = vmatpush.msra.mxu0 0.0
        %1762 = vmatpush.msra.mxu0 0.0
        %1763 = vmatpush.msra.mxu0 0.0
        %1764 = vmatpush.msra.mxu0 0.0
        %1765 = vmatpush.msra.mxu0 0.0
        %1766 = vmatpush.msra.mxu0 %v1745
        %1767 = vmatpush.msra.mxu0 %v1744
        %1768 = vmatpush.msra.mxu0 %v1743
        %1769 = vmatpush.msra.mxu0 %v1742
        %1770 = vmatmul.f32.gmra.mxu0 %v1752
        %v1771 = vpop.f32.mrf.mxu0
        %v1772 = vadd.f32 %v1749, %v1771
        %1773 = vdwg.mxu0
        %s1774 = scalar_lea.vmem %s11, 96
        %v1775 = vld [vmem:[%s1774] sm:$0xff]
        %v1776 = vld [vmem:[%s1774 + $0x8] sm:$0xff]
        %v1777 = vld [vmem:[%s1774 + $0x10] sm:$0xff]
        %v1778 = vld [vmem:[%s1774 + $0x18] sm:$0xff]
        %v1780 = vsel %vm764, %v1772, 0
        %1782 = vmatpush.msra.mxu0 0.0
        %1783 = vmatpush.msra.mxu0 0.0
        %1784 = vmatpush.msra.mxu0 0.0
        %1785 = vmatpush.msra.mxu0 0.0
        %1786 = vmatpush.msra.mxu0 0.0
        %1787 = vmatpush.msra.mxu0 0.0
        %1788 = vmatpush.msra.mxu0 0.0
        %1789 = vmatpush.msra.mxu0 0.0
        %1790 = vmatpush.msra.mxu0 0.0
        %1791 = vmatpush.msra.mxu0 0.0
        %1792 = vmatpush.msra.mxu0 0.0
        %1793 = vmatpush.msra.mxu0 0.0
        %1794 = vmatpush.msra.mxu0 %v1778
        %1795 = vmatpush.msra.mxu0 %v1777
        %1796 = vmatpush.msra.mxu0 %v1776
        %1797 = vmatpush.msra.mxu0 %v1775
        %1798 = vmatmul.f32.gmra.mxu0 %v1780
        %v1799 = vpop.f32.mrf.mxu0
        %v1800 = vadd.f32 0.0, %v1799
        %1801 = vdwg.mxu0
        %v1802 = vmul.f32 %v1800, %v746
        %v1803 = vsel %vm816, %v1802, 0.0
        %v1804 = vrot.slane %v1803, 4
        %v1805 = vadd.f32 %v1803, %v1804
        %v1806 = vrot.slane %v1805, 2
        %v1807 = vadd.f32 %v1805, %v1806
        %v1808 = vrot.slane %v1807, 1
        %v1809 = vadd.f32 %v1807, %v1808
        %s1810 = scalar_lea.vmem %s12, 96
        %v1811 = vld [vmem:[%s1810] sm:$0xff]
        %v1812 = vld [vmem:[%s1810 + $0x8] sm:$0xff]
        %v1813 = vld [vmem:[%s1810 + $0x10] sm:$0xff]
        %v1814 = vld [vmem:[%s1810 + $0x18] sm:$0xff]
        %s1815 = scalar_lea.vmem %s13, 3
        %v1816 = vld [vmem:[%s1815] sm:$0x1]
        %v1818 = vperm.slane %v1816, 0
        %v1821 = vsel %vm764, %v1416, 0
        %1823 = vmatpush.msra.mxu0 0.0
        %1824 = vmatpush.msra.mxu0 0.0
        %1825 = vmatpush.msra.mxu0 0.0
        %1826 = vmatpush.msra.mxu0 0.0
        %1827 = vmatpush.msra.mxu0 0.0
        %1828 = vmatpush.msra.mxu0 0.0
        %1829 = vmatpush.msra.mxu0 0.0
        %1830 = vmatpush.msra.mxu0 0.0
        %1831 = vmatpush.msra.mxu0 0.0
        %1832 = vmatpush.msra.mxu0 0.0
        %1833 = vmatpush.msra.mxu0 0.0
        %1834 = vmatpush.msra.mxu0 0.0
        %1835 = vmatpush.msra.mxu0 %v1814
        %1836 = vmatpush.msra.mxu0 %v1813
        %1837 = vmatpush.msra.mxu0 %v1812
        %1838 = vmatpush.msra.mxu0 %v1811
        %1839 = vmatmul.f32.gmra.mxu0 %v1821
        %v1840 = vpop.f32.mrf.mxu0
        %v1841 = vadd.f32 %v1818, %v1840
        %1842 = vdwg.mxu0
        %v1843 = vadd.f32 %v1841, %v1809
        %v1844 = vtanh.pop %v1843
        %v1845 = vmul.f32 %v1844, 1.442695
        %v1846 = vpow.pop %v1845
        %v1848 = vsel %vm816, %v1846, 0
        %1850 = vmatpush.msra.mxu0 0.0
        %1851 = vmatpush.msra.mxu0 0.0
        %1852 = vmatpush.msra.mxu0 0.0
        %1853 = vmatpush.msra.mxu0 0.0
        %1854 = vmatpush.msra.mxu0 0.0
        %1855 = vmatpush.msra.mxu0 0.0
        %1856 = vmatpush.msra.mxu0 0.0
        %1857 = vmatpush.msra.mxu0 0.0
        %1858 = vmatpush.msra.mxu0 %v754
        %1859 = vmatpush.msra.mxu0 %v753
        %1860 = vmatpush.msra.mxu0 %v752
        %1861 = vmatpush.msra.mxu0 %v751
        %1862 = vmatpush.msra.mxu0 %v750
        %1863 = vmatpush.msra.mxu0 %v749
        %1864 = vmatpush.msra.mxu0 %v748
        %1865 = vmatpush.msra.mxu0 %v747
        %1866 = vmatmul.f32.gmra.mxu0 %v1848
        %v1867 = vpop.f32.mrf.mxu0
        %v1868 = vadd.f32 0.0, %v1867
        %1869 = vdwg.mxu0
        %v1870 = vrcp.pop %v1868
        %v1872 = vsel %vm880, %v1870, 0
        %1874 = vmatpush.msra.mxu0 0.0
        %1875 = vmatpush.msra.mxu0 0.0
        %1876 = vmatpush.msra.mxu0 0.0
        %1877 = vmatpush.msra.mxu0 0.0
        %1878 = vmatpush.msra.mxu0 0.0
        %1879 = vmatpush.msra.mxu0 0.0
        %1880 = vmatpush.msra.mxu0 0.0
        %1881 = vmatpush.msra.mxu0 0.0
        %1882 = vmatpush.msra.mxu0 0.0
        %1883 = vmatpush.msra.mxu0 0.0
        %1884 = vmatpush.msra.mxu0 0.0
        %1885 = vmatpush.msra.mxu0 0.0
        %1886 = vmatpush.msra.mxu0 0.0
        %1887 = vmatpush.msra.mxu0 0.0
        %1888 = vmatpush.msra.mxu0 0.0
        %1889 = vmatpush.msra.mxu0 %v755
        %1890 = vmatmul.f32.gmra.mxu0 %v1872
        %v1891 = vpop.f32.mrf.mxu0
        %v1892 = vadd.f32 0.0, %v1891
        %1893 = vdwg.mxu0
        %v1894 = vmul.f32 %v1846, %v1892
        %1895 = vmatpush.msra.mxu0 0.0
        %1896 = vmatpush.msra.mxu0 0.0
        %1897 = vmatpush.msra.mxu0 0.0
        %1898 = vmatpush.msra.mxu0 0.0
        %1899 = vmatpush.msra.mxu0 0.0
        %1900 = vmatpush.msra.mxu0 0.0
        %1901 = vmatpush.msra.mxu0 0.0
        %1902 = vmatpush.msra.mxu0 0.0
        %1903 = vmatpush.msra.mxu0 0.0
        %1904 = vmatpush.msra.mxu0 0.0
        %1905 = vmatpush.msra.mxu0 0.0
        %1906 = vmatpush.msra.mxu0 0.0
        %1907 = vmatpush.msra.mxu0 0.0
        %1908 = vmatpush.msra.mxu0 0.0
        %1909 = vmatpush.msra.mxu0 0.0
        %1910 = vmatpush.msra.mxu0 %v1772
        %1911 = vmatmul.f32.gmra.mxu0 %v906
        %v1912 = vpop.f32.mrf.mxu0
        %v1913 = vadd.f32 0.0, %v1912
        %1914 = vmatmul.f32.gmra.mxu0 %v909
        %v1915 = vpop.f32.mrf.mxu0
        %v1916 = vadd.f32 0.0, %v1915
        %1917 = vmatmul.f32.gmra.mxu0 %v912
        %v1918 = vpop.f32.mrf.mxu0
        %v1919 = vadd.f32 0.0, %v1918
        %1920 = vmatmul.f32.gmra.mxu0 %v915
        %v1921 = vpop.f32.mrf.mxu0
        %v1922 = vadd.f32 0.0, %v1921
        %1923 = vmatmul.f32.gmra.mxu0 %v918
        %v1924 = vpop.f32.mrf.mxu0
        %v1925 = vadd.f32 0.0, %v1924
        %1926 = vmatmul.f32.gmra.mxu0 %v921
        %v1927 = vpop.f32.mrf.mxu0
        %v1928 = vadd.f32 0.0, %v1927
        %1929 = vmatmul.f32.gmra.mxu0 %v924
        %v1930 = vpop.f32.mrf.mxu0
        %v1931 = vadd.f32 0.0, %v1930
        %1932 = vmatmul.f32.gmra.mxu0 %v927
        %v1933 = vpop.f32.mrf.mxu0
        %v1934 = vadd.f32 0.0, %v1933
        %1935 = vdwg.mxu0
        %v1936 = vmul.f32 %v1913, %v730
        %v1937 = vmul.f32 %v1916, %v731
        %v1938 = vmul.f32 %v1919, %v732
        %v1939 = vmul.f32 %v1922, %v733
        %v1940 = vmul.f32 %v1925, %v734
        %v1941 = vmul.f32 %v1928, %v735
        %v1942 = vmul.f32 %v1931, %v736
        %v1943 = vmul.f32 %v1934, %v737
        %v1945 = vsel %vm816, %v1894, 0
        %1947 = vmatpush.msra.mxu0 0.0
        %1948 = vmatpush.msra.mxu0 0.0
        %1949 = vmatpush.msra.mxu0 0.0
        %1950 = vmatpush.msra.mxu0 0.0
        %1951 = vmatpush.msra.mxu0 0.0
        %1952 = vmatpush.msra.mxu0 0.0
        %1953 = vmatpush.msra.mxu0 0.0
        %1954 = vmatpush.msra.mxu0 0.0
        %1955 = vmatpush.msra.mxu0 %v1943
        %1956 = vmatpush.msra.mxu0 %v1942
        %1957 = vmatpush.msra.mxu0 %v1941
        %1958 = vmatpush.msra.mxu0 %v1940
        %1959 = vmatpush.msra.mxu0 %v1939
        %1960 = vmatpush.msra.mxu0 %v1938
        %1961 = vmatpush.msra.mxu0 %v1937
        %1962 = vmatpush.msra.mxu0 %v1936
        %1963 = vmatmul.f32.gmra.mxu0 %v1945
        %v1964 = vpop.f32.mrf.mxu0
        %v1965 = vadd.f32 0.0, %v1964
        %1966 = vdwg.mxu0
        %s1967 = scalar_lea.vmem %s14, 96
        %v1968 = vld [vmem:[%s1967] sm:$0xff]
        %v1969 = vld [vmem:[%s1967 + $0x8] sm:$0xff]
        %v1970 = vld [vmem:[%s1967 + $0x10] sm:$0xff]
        %v1971 = vld [vmem:[%s1967 + $0x18] sm:$0xff]
        %s1972 = scalar_lea.vmem %s15, 3
        %v1973 = vld [vmem:[%s1972] sm:$0x1]
        %v1975 = vperm.slane %v1973, 0
        %v1978 = vsel %vm764, %v1965, 0
        %1980 = vmatpush.msra.mxu0 0.0
        %1981 = vmatpush.msra.mxu0 0.0
        %1982 = vmatpush.msra.mxu0 0.0
        %1983 = vmatpush.msra.mxu0 0.0
        %1984 = vmatpush.msra.mxu0 0.0
        %1985 = vmatpush.msra.mxu0 0.0
        %1986 = vmatpush.msra.mxu0 0.0
        %1987 = vmatpush.msra.mxu0 0.0
        %1988 = vmatpush.msra.mxu0 0.0
        %1989 = vmatpush.msra.mxu0 0.0
        %1990 = vmatpush.msra.mxu0 0.0
        %1991 = vmatpush.msra.mxu0 0.0
        %1992 = vmatpush.msra.mxu0 %v1971
        %1993 = vmatpush.msra.mxu0 %v1970
        %1994 = vmatpush.msra.mxu0 %v1969
        %1995 = vmatpush.msra.mxu0 %v1968
        %1996 = vmatmul.f32.gmra.mxu0 %v1978
        %v1997 = vpop.f32.mrf.mxu0
        %v1998 = vadd.f32 %v1975, %v1997
        %1999 = vdwg.mxu0
        %s2000 = scalar_lea.vmem %s9, 128
        %v2001 = vld [vmem:[%s2000] sm:$0xff]
        %v2002 = vld [vmem:[%s2000 + $0x8] sm:$0xff]
        %v2003 = vld [vmem:[%s2000 + $0x10] sm:$0xff]
        %v2004 = vld [vmem:[%s2000 + $0x18] sm:$0xff]
        %s2005 = scalar_lea.vmem %s10, 4
        %v2006 = vld [vmem:[%s2005] sm:$0x1]
        %v2008 = vperm.slane %v2006, 0
        %2010 = vmatpush.msra.mxu0 0.0
        %2011 = vmatpush.msra.mxu0 0.0
        %2012 = vmatpush.msra.mxu0 0.0
        %2013 = vmatpush.msra.mxu0 0.0
        %2014 = vmatpush.msra.mxu0 0.0
        %2015 = vmatpush.msra.mxu0 0.0
        %2016 = vmatpush.msra.mxu0 0.0
        %2017 = vmatpush.msra.mxu0 0.0
        %2018 = vmatpush.msra.mxu0 0.0
        %2019 = vmatpush.msra.mxu0 0.0
        %2020 = vmatpush.msra.mxu0 0.0
        %2021 = vmatpush.msra.mxu0 0.0
        %2022 = vmatpush.msra.mxu0 %v2004
        %2023 = vmatpush.msra.mxu0 %v2003
        %2024 = vmatpush.msra.mxu0 %v2002
        %2025 = vmatpush.msra.mxu0 %v2001
        %2026 = vmatmul.f32.gmra.mxu0 %v1752
        %v2027 = vpop.f32.mrf.mxu0
        %v2028 = vadd.f32 %v2008, %v2027
        %2029 = vdwg.mxu0
        %s2030 = scalar_lea.vmem %s11, 128
        %v2031 = vld [vmem:[%s2030] sm:$0xff]
        %v2032 = vld [vmem:[%s2030 + $0x8] sm:$0xff]
        %v2033 = vld [vmem:[%s2030 + $0x10] sm:$0xff]
        %v2034 = vld [vmem:[%s2030 + $0x18] sm:$0xff]
        %v2036 = vsel %vm764, %v2028, 0
        %2038 = vmatpush.msra.mxu0 0.0
        %2039 = vmatpush.msra.mxu0 0.0
        %2040 = vmatpush.msra.mxu0 0.0
        %2041 = vmatpush.msra.mxu0 0.0
        %2042 = vmatpush.msra.mxu0 0.0
        %2043 = vmatpush.msra.mxu0 0.0
        %2044 = vmatpush.msra.mxu0 0.0
        %2045 = vmatpush.msra.mxu0 0.0
        %2046 = vmatpush.msra.mxu0 0.0
        %2047 = vmatpush.msra.mxu0 0.0
        %2048 = vmatpush.msra.mxu0 0.0
        %2049 = vmatpush.msra.mxu0 0.0
        %2050 = vmatpush.msra.mxu0 %v2034
        %2051 = vmatpush.msra.mxu0 %v2033
        %2052 = vmatpush.msra.mxu0 %v2032
        %2053 = vmatpush.msra.mxu0 %v2031
        %2054 = vmatmul.f32.gmra.mxu0 %v2036
        %v2055 = vpop.f32.mrf.mxu0
        %v2056 = vadd.f32 0.0, %v2055
        %2057 = vdwg.mxu0
        %v2058 = vmul.f32 %v2056, %v746
        %v2059 = vsel %vm816, %v2058, 0.0
        %v2060 = vrot.slane %v2059, 4
        %v2061 = vadd.f32 %v2059, %v2060
        %v2062 = vrot.slane %v2061, 2
        %v2063 = vadd.f32 %v2061, %v2062
        %v2064 = vrot.slane %v2063, 1
        %v2065 = vadd.f32 %v2063, %v2064
        %s2066 = scalar_lea.vmem %s12, 128
        %v2067 = vld [vmem:[%s2066] sm:$0xff]
        %v2068 = vld [vmem:[%s2066 + $0x8] sm:$0xff]
        %v2069 = vld [vmem:[%s2066 + $0x10] sm:$0xff]
        %v2070 = vld [vmem:[%s2066 + $0x18] sm:$0xff]
        %s2071 = scalar_lea.vmem %s13, 4
        %v2072 = vld [vmem:[%s2071] sm:$0x1]
        %v2074 = vperm.slane %v2072, 0
        %v2077 = vsel %vm764, %v1739, 0
        %2079 = vmatpush.msra.mxu0 0.0
        %2080 = vmatpush.msra.mxu0 0.0
        %2081 = vmatpush.msra.mxu0 0.0
        %2082 = vmatpush.msra.mxu0 0.0
        %2083 = vmatpush.msra.mxu0 0.0
        %2084 = vmatpush.msra.mxu0 0.0
        %2085 = vmatpush.msra.mxu0 0.0
        %2086 = vmatpush.msra.mxu0 0.0
        %2087 = vmatpush.msra.mxu0 0.0
        %2088 = vmatpush.msra.mxu0 0.0
        %2089 = vmatpush.msra.mxu0 0.0
        %2090 = vmatpush.msra.mxu0 0.0
        %2091 = vmatpush.msra.mxu0 %v2070
        %2092 = vmatpush.msra.mxu0 %v2069
        %2093 = vmatpush.msra.mxu0 %v2068
        %2094 = vmatpush.msra.mxu0 %v2067
        %2095 = vmatmul.f32.gmra.mxu0 %v2077
        %v2096 = vpop.f32.mrf.mxu0
        %v2097 = vadd.f32 %v2074, %v2096
        %2098 = vdwg.mxu0
        %v2099 = vadd.f32 %v2097, %v2065
        %v2100 = vtanh.pop %v2099
        %v2101 = vmul.f32 %v2100, 1.442695
        %v2102 = vpow.pop %v2101
        %v2104 = vsel %vm816, %v2102, 0
        %2106 = vmatpush.msra.mxu0 0.0
        %2107 = vmatpush.msra.mxu0 0.0
        %2108 = vmatpush.msra.mxu0 0.0
        %2109 = vmatpush.msra.mxu0 0.0
        %2110 = vmatpush.msra.mxu0 0.0
        %2111 = vmatpush.msra.mxu0 0.0
        %2112 = vmatpush.msra.mxu0 0.0
        %2113 = vmatpush.msra.mxu0 0.0
        %2114 = vmatpush.msra.mxu0 %v754
        %2115 = vmatpush.msra.mxu0 %v753
        %2116 = vmatpush.msra.mxu0 %v752
        %2117 = vmatpush.msra.mxu0 %v751
        %2118 = vmatpush.msra.mxu0 %v750
        %2119 = vmatpush.msra.mxu0 %v749
        %2120 = vmatpush.msra.mxu0 %v748
        %2121 = vmatpush.msra.mxu0 %v747
        %2122 = vmatmul.f32.gmra.mxu0 %v2104
        %v2123 = vpop.f32.mrf.mxu0
        %v2124 = vadd.f32 0.0, %v2123
        %2125 = vdwg.mxu0
        %v2126 = vrcp.pop %v2124
        %v2128 = vsel %vm880, %v2126, 0
        %2130 = vmatpush.msra.mxu0 0.0
        %2131 = vmatpush.msra.mxu0 0.0
        %2132 = vmatpush.msra.mxu0 0.0
        %2133 = vmatpush.msra.mxu0 0.0
        %2134 = vmatpush.msra.mxu0 0.0
        %2135 = vmatpush.msra.mxu0 0.0
        %2136 = vmatpush.msra.mxu0 0.0
        %2137 = vmatpush.msra.mxu0 0.0
        %2138 = vmatpush.msra.mxu0 0.0
        %2139 = vmatpush.msra.mxu0 0.0
        %2140 = vmatpush.msra.mxu0 0.0
        %2141 = vmatpush.msra.mxu0 0.0
        %2142 = vmatpush.msra.mxu0 0.0
        %2143 = vmatpush.msra.mxu0 0.0
        %2144 = vmatpush.msra.mxu0 0.0
        %2145 = vmatpush.msra.mxu0 %v755
        %2146 = vmatmul.f32.gmra.mxu0 %v2128
        %v2147 = vpop.f32.mrf.mxu0
        %v2148 = vadd.f32 0.0, %v2147
        %2149 = vdwg.mxu0
        %v2150 = vmul.f32 %v2102, %v2148
        %2151 = vmatpush.msra.mxu0 0.0
        %2152 = vmatpush.msra.mxu0 0.0
        %2153 = vmatpush.msra.mxu0 0.0
        %2154 = vmatpush.msra.mxu0 0.0
        %2155 = vmatpush.msra.mxu0 0.0
        %2156 = vmatpush.msra.mxu0 0.0
        %2157 = vmatpush.msra.mxu0 0.0
        %2158 = vmatpush.msra.mxu0 0.0
        %2159 = vmatpush.msra.mxu0 0.0
        %2160 = vmatpush.msra.mxu0 0.0
        %2161 = vmatpush.msra.mxu0 0.0
        %2162 = vmatpush.msra.mxu0 0.0
        %2163 = vmatpush.msra.mxu0 0.0
        %2164 = vmatpush.msra.mxu0 0.0
        %2165 = vmatpush.msra.mxu0 0.0
        %2166 = vmatpush.msra.mxu0 %v2028
        %2167 = vmatmul.f32.gmra.mxu0 %v906
        %v2168 = vpop.f32.mrf.mxu0
        %v2169 = vadd.f32 0.0, %v2168
        %2170 = vmatmul.f32.gmra.mxu0 %v909
        %v2171 = vpop.f32.mrf.mxu0
        %v2172 = vadd.f32 0.0, %v2171
        %2173 = vmatmul.f32.gmra.mxu0 %v912
        %v2174 = vpop.f32.mrf.mxu0
        %v2175 = vadd.f32 0.0, %v2174
        %2176 = vmatmul.f32.gmra.mxu0 %v915
        %v2177 = vpop.f32.mrf.mxu0
        %v2178 = vadd.f32 0.0, %v2177
        %2179 = vmatmul.f32.gmra.mxu0 %v918
        %v2180 = vpop.f32.mrf.mxu0
        %v2181 = vadd.f32 0.0, %v2180
        %2182 = vmatmul.f32.gmra.mxu0 %v921
        %v2183 = vpop.f32.mrf.mxu0
        %v2184 = vadd.f32 0.0, %v2183
        %2185 = vmatmul.f32.gmra.mxu0 %v924
        %v2186 = vpop.f32.mrf.mxu0
        %v2187 = vadd.f32 0.0, %v2186
        %2188 = vmatmul.f32.gmra.mxu0 %v927
        %v2189 = vpop.f32.mrf.mxu0
        %v2190 = vadd.f32 0.0, %v2189
        %2191 = vdwg.mxu0
        %v2192 = vmul.f32 %v2169, %v730
        %v2193 = vmul.f32 %v2172, %v731
        %v2194 = vmul.f32 %v2175, %v732
        %v2195 = vmul.f32 %v2178, %v733
        %v2196 = vmul.f32 %v2181, %v734
        %v2197 = vmul.f32 %v2184, %v735
        %v2198 = vmul.f32 %v2187, %v736
        %v2199 = vmul.f32 %v2190, %v737
        %v2201 = vsel %vm816, %v2150, 0
        %2203 = vmatpush.msra.mxu0 0.0
        %2204 = vmatpush.msra.mxu0 0.0
        %2205 = vmatpush.msra.mxu0 0.0
        %2206 = vmatpush.msra.mxu0 0.0
        %2207 = vmatpush.msra.mxu0 0.0
        %2208 = vmatpush.msra.mxu0 0.0
        %2209 = vmatpush.msra.mxu0 0.0
        %2210 = vmatpush.msra.mxu0 0.0
        %2211 = vmatpush.msra.mxu0 %v2199
        %2212 = vmatpush.msra.mxu0 %v2198
        %2213 = vmatpush.msra.mxu0 %v2197
        %2214 = vmatpush.msra.mxu0 %v2196
        %2215 = vmatpush.msra.mxu0 %v2195
        %2216 = vmatpush.msra.mxu0 %v2194
        %2217 = vmatpush.msra.mxu0 %v2193
        %2218 = vmatpush.msra.mxu0 %v2192
        %2219 = vmatmul.f32.gmra.mxu0 %v2201
        %v2220 = vpop.f32.mrf.mxu0
        %v2221 = vadd.f32 0.0, %v2220
        %2222 = vdwg.mxu0
        %s2223 = scalar_lea.vmem %s14, 128
        %v2224 = vld [vmem:[%s2223] sm:$0xff]
        %v2225 = vld [vmem:[%s2223 + $0x8] sm:$0xff]
        %v2226 = vld [vmem:[%s2223 + $0x10] sm:$0xff]
        %v2227 = vld [vmem:[%s2223 + $0x18] sm:$0xff]
        %s2228 = scalar_lea.vmem %s15, 4
        %v2229 = vld [vmem:[%s2228] sm:$0x1]
        %v2231 = vperm.slane %v2229, 0
        %v2234 = vsel %vm764, %v2221, 0
        %2236 = vmatpush.msra.mxu0 0.0
        %2237 = vmatpush.msra.mxu0 0.0
        %2238 = vmatpush.msra.mxu0 0.0
        %2239 = vmatpush.msra.mxu0 0.0
        %2240 = vmatpush.msra.mxu0 0.0
        %2241 = vmatpush.msra.mxu0 0.0
        %2242 = vmatpush.msra.mxu0 0.0
        %2243 = vmatpush.msra.mxu0 0.0
        %2244 = vmatpush.msra.mxu0 0.0
        %2245 = vmatpush.msra.mxu0 0.0
        %2246 = vmatpush.msra.mxu0 0.0
        %2247 = vmatpush.msra.mxu0 0.0
        %2248 = vmatpush.msra.mxu0 %v2227
        %2249 = vmatpush.msra.mxu0 %v2226
        %2250 = vmatpush.msra.mxu0 %v2225
        %2251 = vmatpush.msra.mxu0 %v2224
        %2252 = vmatmul.f32.gmra.mxu0 %v2234
        %v2253 = vpop.f32.mrf.mxu0
        %v2254 = vadd.f32 %v2231, %v2253
        %2255 = vdwg.mxu0
        %v2256 = vsel %vm764, %v1093, 0.0
        %v2257 = vrot.slane %v2256, 4
        %v2258 = vadd.f32 %v2256, %v2257
        %v2259 = vrot.slane %v2258, 2
        %v2260 = vadd.f32 %v2258, %v2259
        %v2261 = vrot.slane %v2260, 1
        %v2262 = vadd.f32 %v2260, %v2261
        %2264 = vset.pattern.permute.xlu0 0
        %2265 = vperm.xlu0 %2264, %v729
        %v2266 = vpop.permute.xlu0 %2265
        %v2268 = vperm.slane %v2266, 0
        %v2269 = vrcp.pop %v2268
        %v2270 = vmul.f32 %v2268, %v2269
        %v2271 = vsub.f32 1.0, %v2270
        %v2272 = vmul.f32 %v2269, %v2271
        %v2273 = vadd.f32 %v2269, %v2272
        %vm2274 = vweird.f32 %v2268
        %vm2275 = vweird.f32 %v2269
        %vm2276 = vmor %vm2274, %vm2275
        %v2277 = vsel %vm2276, %v2269, %v2273
        %v2278 = vand.u32 2147483647, %v2268
        %vm2279 = vcmp.eq.f32.partialorder %v2278, 8.507059e+37
        %v2280 = vand.u32 %v2268, 2147483648
        %v2281 = vor.u32 1.1754944e-38, %v2280
        %v2282 = vsel %vm2279, %v2281, %v2277
        %v2283 = vmul.f32 %v2262, %v2282
        %vm2284 = vcmask 257024
        %v2285 = vsel %vm2284, %v1416, 0.0
        %v2286 = vrot.slane %v2285, 4
        %v2287 = vadd.f32 %v2285, %v2286
        %v2288 = vrot.slane %v2287, 2
        %v2289 = vadd.f32 %v2287, %v2288
        %v2290 = vrot.slane %v2289, 1
        %v2291 = vadd.f32 %v2289, %v2290
        %2292 = vset.pattern.permute.xlu0 1
        %2293 = vperm.xlu0 %2292, %v729
        %v2294 = vpop.permute.xlu0 %2293
        %v2296 = vperm.slane %v2294, 0
        %v2297 = vrcp.pop %v2296
        %v2298 = vmul.f32 %v2296, %v2297
        %v2299 = vsub.f32 1.0, %v2298
        %v2300 = vmul.f32 %v2297, %v2299
        %v2301 = vadd.f32 %v2297, %v2300
        %vm2302 = vweird.f32 %v2296
        %vm2303 = vweird.f32 %v2297
        %vm2304 = vmor %vm2302, %vm2303
        %v2305 = vsel %vm2304, %v2297, %v2301
        %v2306 = vand.u32 2147483647, %v2296
        %vm2307 = vcmp.eq.f32.partialorder %v2306, 8.507059e+37
        %v2308 = vand.u32 %v2296, 2147483648
        %v2309 = vor.u32 1.1754944e-38, %v2308
        %v2310 = vsel %vm2307, %v2309, %v2305
        %v2311 = vmul.f32 %v2291, %v2310
        %v2312 = vsel %vm2284, %v1998, 0.0
        %v2313 = vrot.slane %v2312, 4
        %v2314 = vadd.f32 %v2312, %v2313
        %v2315 = vrot.slane %v2314, 2
        %v2316 = vadd.f32 %v2314, %v2315
        %v2317 = vrot.slane %v2316, 1
        %v2318 = vadd.f32 %v2316, %v2317
        %v2319 = vmul.f32 %v2318, %v2282
        %vm2320 = vcmask 259072
        %v2321 = vsel %vm2320, %v2254, 0.0
        %v2322 = vrot.slane %v2321, 4
        %v2323 = vadd.f32 %v2321, %v2322
        %v2324 = vrot.slane %v2323, 2
        %v2325 = vadd.f32 %v2323, %v2324
        %v2326 = vrot.slane %v2325, 1
        %v2327 = vadd.f32 %v2325, %v2326
        %v2328 = vmul.f32 %v2327, %v2282
        %v2329 = vld [vmem:[%s20] sm:$0xff]
        %v2330 = vld [vmem:[%s20 + $0x8] sm:$0xff]
        %v2331 = vld [vmem:[%s20 + $0x10] sm:$0xff]
        %v2332 = vld [vmem:[%s20 + $0x18] sm:$0xff]
        %s2333 = scalar_lea.vmem %s20, 32
        %v2334 = vld [vmem:[%s2333] sm:$0xff]
        %v2335 = vld [vmem:[%s2333 + $0x8] sm:$0xff]
        %v2336 = vld [vmem:[%s2333 + $0x10] sm:$0xff]
        %v2337 = vld [vmem:[%s2333 + $0x18] sm:$0xff]
        %v2339 = vsel %vm764, %v2319, 0
        %2341 = vmatpush.msra.mxu0 0.0
        %2342 = vmatpush.msra.mxu0 0.0
        %2343 = vmatpush.msra.mxu0 0.0
        %2344 = vmatpush.msra.mxu0 0.0
        %2345 = vmatpush.msra.mxu0 0.0
        %2346 = vmatpush.msra.mxu0 0.0
        %2347 = vmatpush.msra.mxu0 0.0
        %2348 = vmatpush.msra.mxu0 0.0
        %2349 = vmatpush.msra.mxu0 0.0
        %2350 = vmatpush.msra.mxu0 0.0
        %2351 = vmatpush.msra.mxu0 0.0
        %2352 = vmatpush.msra.mxu0 0.0
        %2353 = vmatpush.msra.mxu0 %v2337
        %2354 = vmatpush.msra.mxu0 %v2336
        %2355 = vmatpush.msra.mxu0 %v2335
        %2356 = vmatpush.msra.mxu0 %v2334
        %2357 = vmatmul.f32.gmra.mxu0 %v2339
        %v2358 = vpop.f32.mrf.mxu0
        %v2359 = vadd.f32 0.0, %v2358
        %2360 = vdwg.mxu0
        %v2362 = vsel %vm764, %v2283, 0
        %2364 = vmatpush.msra.mxu0 0.0
        %2365 = vmatpush.msra.mxu0 0.0
        %2366 = vmatpush.msra.mxu0 0.0
        %2367 = vmatpush.msra.mxu0 0.0
        %2368 = vmatpush.msra.mxu0 0.0
        %2369 = vmatpush.msra.mxu0 0.0
        %2370 = vmatpush.msra.mxu0 0.0
        %2371 = vmatpush.msra.mxu0 0.0
        %2372 = vmatpush.msra.mxu0 0.0
        %2373 = vmatpush.msra.mxu0 0.0
        %2374 = vmatpush.msra.mxu0 0.0
        %2375 = vmatpush.msra.mxu0 0.0
        %2376 = vmatpush.msra.mxu0 %v2332
        %2377 = vmatpush.msra.mxu0 %v2331
        %2378 = vmatpush.msra.mxu0 %v2330
        %2379 = vmatpush.msra.mxu0 %v2329
        %2380 = vmatmul.f32.gmra.mxu0 %v2362
        %v2381 = vpop.f32.mrf.mxu0
        %v2382 = vadd.f32 %v2359, %v2381
        %2383 = vdwg.mxu0
        %s2384 = scalar_lea.vmem %s20, 64
        %v2385 = vld [vmem:[%s2384] sm:$0xff]
        %v2386 = vld [vmem:[%s2384 + $0x8] sm:$0xff]
        %v2387 = vld [vmem:[%s2384 + $0x10] sm:$0xff]
        %v2388 = vld [vmem:[%s2384 + $0x18] sm:$0xff]
        %v2390 = vsel %vm764, %v2311, 0
        %2392 = vmatpush.msra.mxu0 0.0
        %2393 = vmatpush.msra.mxu0 0.0
        %2394 = vmatpush.msra.mxu0 0.0
        %2395 = vmatpush.msra.mxu0 0.0
        %2396 = vmatpush.msra.mxu0 0.0
        %2397 = vmatpush.msra.mxu0 0.0
        %2398 = vmatpush.msra.mxu0 0.0
        %2399 = vmatpush.msra.mxu0 0.0
        %2400 = vmatpush.msra.mxu0 0.0
        %2401 = vmatpush.msra.mxu0 0.0
        %2402 = vmatpush.msra.mxu0 0.0
        %2403 = vmatpush.msra.mxu0 0.0
        %2404 = vmatpush.msra.mxu0 %v2388
        %2405 = vmatpush.msra.mxu0 %v2387
        %2406 = vmatpush.msra.mxu0 %v2386
        %2407 = vmatpush.msra.mxu0 %v2385
        %2408 = vmatmul.f32.gmra.mxu0 %v2390
        %v2409 = vpop.f32.mrf.mxu0
        %v2410 = vadd.f32 0.0, %v2409
        %2411 = vdwg.mxu0
        %v2412 = vadd.f32 %v2382, %v2410
        %s2413 = scalar_lea.vmem %s20, 96
        %v2414 = vld [vmem:[%s2413] sm:$0xff]
        %v2415 = vld [vmem:[%s2413 + $0x8] sm:$0xff]
        %v2416 = vld [vmem:[%s2413 + $0x10] sm:$0xff]
        %v2417 = vld [vmem:[%s2413 + $0x18] sm:$0xff]
        %v2419 = vsel %vm764, %v2328, 0
        %2421 = vmatpush.msra.mxu0 0.0
        %2422 = vmatpush.msra.mxu0 0.0
        %2423 = vmatpush.msra.mxu0 0.0
        %2424 = vmatpush.msra.mxu0 0.0
        %2425 = vmatpush.msra.mxu0 0.0
        %2426 = vmatpush.msra.mxu0 0.0
        %2427 = vmatpush.msra.mxu0 0.0
        %2428 = vmatpush.msra.mxu0 0.0
        %2429 = vmatpush.msra.mxu0 0.0
        %2430 = vmatpush.msra.mxu0 0.0
        %2431 = vmatpush.msra.mxu0 0.0
        %2432 = vmatpush.msra.mxu0 0.0
        %2433 = vmatpush.msra.mxu0 %v2417
        %2434 = vmatpush.msra.mxu0 %v2416
        %2435 = vmatpush.msra.mxu0 %v2415
        %2436 = vmatpush.msra.mxu0 %v2414
        %2437 = vmatmul.f32.gmra.mxu0 %v2419
        %v2438 = vpop.f32.mrf.mxu0
        %v2439 = vadd.f32 0.0, %v2438
        %2440 = vdwg.mxu0
        %v2441 = vadd.f32 %v2412, %v2439
        %v2442 = vld [vmem:[%s21] sm:$0x1]
        %v2443 = vadd.f32 %v2441, %v2442
        %vm2444 = vcmask 16384
        %2445 = vst.msk [vmem:[%s710] sm:$0x1] %vm2444, %v2443
        %s2446 = sand.u32 %s526, 1
        %s2447 = scalar_lea.sflag [#allocation3], %s2446
        %s2448 = sand.u32 %s526, 1
        %s2449 = scalar_lea.vmem [#allocation2], %s2448
        // Predicated region
        $region109: #{gkeaen_forward.1} parent=107 // pred_check
          %p2450 = pneg %p536
        $region110: #{gkeaen_forward.1} parent=107 // pred_check_branch
          %2452 = sbr.rel (%p2450) target = $region112
        $region111: #{gkeaen_forward.1} parent=107 // pred_region
          %2454 = vsyncadd %s2447, 0
          %s2455 = scalar_lea.hbm %s22, %s36
          %s2457 = sshll.u32 %s2449, 4
          %s2458 = int_to_ptr.vmem [resolvable:$true] %s2457
          %s2459 = sshll.u32 %s2455, 4
          %s2460 = int_to_ptr.hbm [resolvable:$true] %s2459
          %2462 = dma.vmem_to_hbm [thread:$0]  %s2458, 16, %s2460, %s2447
        $region112: #{gkeaen_forward.1} parent=107 // pred_fallthru
          _
      $region108: #{gkeaen_forward.1} parent=5 // pred_fallthru
        _
      %p2463 = scmp.le.s32.totalorder 2, %s31
      // Predicated region
      $region113: #{gkeaen_forward.1} parent=5 // pred_check
        %p2464 = pneg %p2463
      $region114: #{gkeaen_forward.1} parent=5 // pred_check_branch
        %2466 = sbr.rel (%p2464) target = $region116
      $region115: #{gkeaen_forward.1} parent=5 // pred_region
        %s2467 = ssub.s32 %s31, 2
        // Predicated region
        $region117: #{gkeaen_forward.1} parent=115 // pred_check
          %p2468 = pneg %p542
        $region118: #{gkeaen_forward.1} parent=115 // pred_check_branch
          %2470 = sbr.rel (%p2468) target = $region120
        $region119: #{gkeaen_forward.1} parent=115 // pred_region
          %s2471 = sand.u32 %s527, 1
          %s2472 = scalar_lea.sflag [#allocation3], %s2471
          %s2473 = sand.u32 %s527, 1
          %s2474 = scalar_lea.vmem [#allocation2], %s2473
          %2476 = dma.done %s2472, 16
        $region120: #{gkeaen_forward.1} parent=115 // pred_fallthru
          _
      $region116: #{gkeaen_forward.1} parent=5 // pred_fallthru
        _
    $region6: #{gkeaen_forward.1} parent=1 // loop_footer
      %s35 = sadd.s32 1, %s31
    $region7: #{gkeaen_forward.1} parent=1 // loop_footer_branch
      %30 = sbr.rel target = $region3
    $region8: #{gkeaen_forward.1} parent=1 // loop_exit
      _
    %2477 = vsyncpa [#allocation3], 1
    %s2478 = scalar_lea.sflag [#allocation3], 1
    %2479 = vsyncpa %s2478, 1

</llo_original>
